<compile_context>
chip_gen: v7x
topology: tpu7x:2x2x1
jax: 0.10.0
libtpu: 0.0.40
codegen_flags: <defaults>
</compile_context>

<pallas_src>
import math

import jax
import jax.numpy as jnp
from jax import lax
from jax.experimental import pallas as pl
from jax.experimental.pallas import tpu as pltpu

# ---- problem sizes (config: n_embd=32, n_head=4, block_size=8, bias=True) ----
B, T, C, NH = 2, 8, 32, 4
HD = C // NH          # 8
R = B * T             # 16 folded token rows
G = B * NH            # 8  (batch, head) blocks
F = G * T             # 64 flattened attention rows
EPS = 1e-5

QKV_W = 3 * C         # 96
AP_W = 7 * NH         # 28
LAP_W = NH            # 4   -> fused token-projection width = 128 lanes exactly
FUSED_W = QKV_W + AP_W + LAP_W            # 128
SH_W = 7 * T                              # 56
WBANK_W = FUSED_W + 4 * C + C             # 288 = [128 | 128 | 32]


def _ln(v, w, b):
    mu = jnp.mean(v, axis=-1, keepdims=True)
    var = jnp.mean((v - mu) ** 2, axis=-1, keepdims=True)
    return (v - mu) * lax.rsqrt(var + EPS) * w + b


def _gelu(u):
    # TODO(synk): PyTorch nn.GELU() default is the exact erf-GELU; the tanh
    # approximation is used for guaranteed Mosaic lowering (reference matches).
    c = math.sqrt(2.0 / math.pi)
    return 0.5 * u * (1.0 + jnp.tanh(c * (u + 0.044715 * u * u * u)))


# --------------------------- Pallas kernel ----------------------------------
def block_kernel(has_prev_ref,                       # scalar prefetch (SMEM)
                 x_ref, prev_ref, const_ref, wbank_ref, wmp_ref,
                 y_ref, att_ref):                    # outputs
    # ---- unpack the packed constant / weight banks (single VMEM tiles) ------
    consts = const_ref[...]                          # (16, 128)
    b_fused = consts[0:1, :]                         # (1, 128)
    b_fc = consts[1:2, :]                            # (1, 128)
    ln1w, ln1b = consts[2:3, :C], consts[3:4, :C]
    ln2w, ln2b = consts[4:5, :C], consts[5:6, :C]
    b_cp, b_mp = consts[6:7, :C], consts[7:8, :C]
    shifts = consts[8:16, :SH_W]                     # (T, 7T)

    wb = wbank_ref[...]                              # (C, 288)
    w_fused = wb[:, :FUSED_W]                        # (C, 128)
    w_fcT = wb[:, FUSED_W:FUSED_W + 4 * C]           # (C, 4C)
    w_cpT = wb[:, FUSED_W + 4 * C:]                  # (C, C)

    x = x_ref[...]                                   # (R, C)
    ln1 = _ln(x, ln1w, ln1b)

    # ---- single fused token projection: (R, C) @ (C, 128) -------------------
    z = jnp.dot(ln1, w_fused, preferred_element_type=jnp.float32) + b_fused
    qkv = z[:, :QKV_W]                               # (R, 3C)
    ap = z[:, QKV_W:QKV_W + AP_W]                    # (R, 7*NH), col = h*7 + i
    gam = jax.nn.sigmoid(z[:, QKV_W + AP_W:FUSED_W])  # (R, NH)

    # ---- gather per-(batch, head) blocks (static slices, unrolled) ----------
    def blk(arr, b, h, w):
        return arr[b * T:(b + 1) * T, h * w:(h + 1) * w]

    bh = [(b, h) for b in range(B) for h in range(NH)]                # g = b*NH + h
    q_blk = jnp.stack([blk(qkv[:, 0 * C:1 * C], b, h, HD) for b, h in bh])   # (G, T, HD)
    k_blk = jnp.stack([blk(qkv[:, 1 * C:2 * C], b, h, HD) for b, h in bh])   # (G, T, HD)
    v_blk = jnp.stack([blk(qkv[:, 2 * C:3 * C], b, h, HD) for b, h in bh])   # (G, T, HD)
    beta_logit = jnp.stack([blk(ap, b, h, 7) for b, h in bh])                # (G, T, 7)
    gamma_blk = jnp.stack([gam[b * T:(b + 1) * T, h:h + 1] for b, h in bh])  # (G, T, 1)

    # ---- batched scores + causal softmax (all heads / batches at once) ------
    scale = 1.0 / math.sqrt(HD)
    s = jnp.einsum('gtd,gsd->gts', q_blk, k_blk,
                   preferred_element_type=jnp.float32) * scale        # (G, T, T)
    s = s.reshape(F, T)                                               # rows = (b,h,t)
    row = lax.broadcasted_iota(jnp.int32, (F, T), 0) % T
    col = lax.broadcasted_iota(jnp.int32, (F, T), 1)
    causal = col <= row
    s = jnp.where(causal, s, -1e30)
    s = s - jnp.max(s, axis=-1, keepdims=True)
    p = jnp.exp(s)
    att = p / jnp.sum(p, axis=-1, keepdims=True)                      # (F, T)

    # ---- all 7 shifted attentions for every (b,h) in ONE matmul -------------
    shifted = jnp.dot(att, shifts, preferred_element_type=jnp.float32)  # (F, 7T)

    # ---- beta softmax over the 7 shift logits (single tile) -----------------
    bl = beta_logit.reshape(F, 7)
    bl = bl - jnp.max(bl, axis=-1, keepdims=True)
    be = jnp.exp(bl)
    beta = be / jnp.sum(be, axis=-1, keepdims=True)                   # (F, 7)

    interp = beta[:, 0:1] * shifted[:, 0:T]
    for i in range(1, 7):
        interp = interp + beta[:, i:i + 1] * shifted[:, i * T:(i + 1) * T]
    interp = jnp.where(causal, interp, 0.0)

    # ---- layer-attention gate (hoisted single select) ------------------------
    g = jnp.where(has_prev_ref[0] > 0, gamma_blk.reshape(F, 1), 1.0)
    final = g * interp + (1.0 - g) * prev_ref[...]                    # (F, T)
    att_ref[...] = final                                              # one store

    # ---- attention output: batched att @ v, no VMEM scratch ------------------
    y_blk = jnp.einsum('gts,gsd->gtd', final.reshape(G, T, T), v_blk,
                       preferred_element_type=jnp.float32)            # (G, T, HD)
    y_att = jnp.concatenate(
        [jnp.concatenate([y_blk[b * NH + h] for h in range(NH)], axis=-1)
         for b in range(B)], axis=0)                                  # (R, C)

    y_att = jnp.dot(y_att, w_cpT, preferred_element_type=jnp.float32) + b_cp
    x1 = x + y_att                                                    # first residual
    ln2 = _ln(x1, ln2w, ln2b)
    h_fc = _gelu(jnp.dot(ln2, w_fcT, preferred_element_type=jnp.float32) + b_fc)
    mlp = jnp.dot(h_fc, wmp_ref[...], preferred_element_type=jnp.float32) + b_mp
    y_ref[...] = x1 + mlp                                             # second residual


# ------------------------------ wrapper --------------------------------------
def make_shift_matrix():
    # order matches the PyTorch loop: [identity, left1, right1, left2, right2, left3, right3]
    mats = [jnp.eye(T, dtype=jnp.float32)]
    for i in range(1, 4):
        mats.append(jnp.eye(T, k=-i, dtype=jnp.float32))   # pad-right (att[..., i:])
        mats.append(jnp.eye(T, k=i, dtype=jnp.float32))    # pad-left  (att[..., :-i])
    return jnp.concatenate(mats, axis=1)                   # (T, 7T)


def _pack_params(P):
    # fused (C, 128) projection: [qkv | attn_proj (head-grouped, col = h*7+i) | layer_attn_proj]
    w_ap_t = P['W_ap'].T.reshape(C, 7, NH).transpose(0, 2, 1).reshape(C, AP_W)
    b_ap_r = P['b_ap'].reshape(7, NH).T.reshape(AP_W)
    w_fused = jnp.concatenate([P['W_attn'].T, w_ap_t, P['W_lap'].T], axis=1)   # (C, 128)
    b_fused = jnp.concatenate([P['b_attn'], b_ap_r, P['b_lap']])               # (128,)

    # weight bank: [fused | W_fc^T | W_cproj^T], column blocks 128-aligned
    wbank = jnp.concatenate([w_fused, P['W_fc'].T, P['W_cproj'].T], axis=1)    # (C, 288)

    def row(v):
        return jnp.pad(v, (0, 128 - v.shape[0]))[None, :]

    vec_rows = jnp.concatenate([
        row(b_fused), row(P['b_fc']),
        row(P['ln1_w']), row(P['ln1_b']),
        row(P['ln2_w']), row(P['ln2_b']),
        row(P['b_cproj']), row(P['b_mproj']),
    ], axis=0)                                                                 # (8, 128)
    shift_rows = jnp.pad(make_shift_matrix(), ((0, 0), (0, 128 - SH_W)))        # (8, 128)
    const_bank = jnp.concatenate([vec_rows, shift_rows], axis=0)               # (16, 128)

    wmpT = P['W_mproj'].T                                                      # (4C, C)
    return const_bank, wbank, wmpT


def shifted_block(x, prev_attn, P):
    has_prev = jnp.array([0 if prev_attn is None else 1], jnp.int32)
    if prev_attn is None:
        prev_attn = jnp.zeros((B, NH, T, T), jnp.float32)

    const_bank, wbank, wmpT = _pack_params(P)
    x_rows = x.reshape(R, C)
    prev_flat = prev_attn.reshape(F, T)

    def fs(shape):
        nd = len(shape)
        return pl.BlockSpec(shape, lambda i, hp, _nd=nd: (0,) * _nd)

    grid_spec = pltpu.PrefetchScalarGridSpec(
        num_scalar_prefetch=1,
        grid=(1,),                        # whole (folded) batch in one step
        in_specs=[fs((R, C)), fs((F, T)), fs((16, 128)),
                  fs((C, WBANK_W)), fs((4 * C, C))],
        out_specs=[fs((R, C)), fs((F, T))],
    )

    y, att = pl.pallas_call(
        block_kernel,
        out_shape=(jax.ShapeDtypeStruct((R, C), jnp.float32),
                   jax.ShapeDtypeStruct((F, T), jnp.float32)),
        grid_spec=grid_spec,
        compiler_params=pltpu.CompilerParams(dimension_semantics=("arbitrary",)),
    )(has_prev, x_rows, prev_flat, const_bank, wbank, wmpT)
    return y.reshape(B, T, C), att.reshape(B, NH, T, T)


# --------------------------- pure-JAX reference -------------------------------
def reference(x, prev_attn, P):
    h1 = _ln(x, P['ln1_w'], P['ln1_b'])
    qkv = h1 @ P['W_attn'].T + P['b_attn']
    q, k, v = jnp.split(qkv, 3, axis=2)

    def heads(t):
        return t.reshape(B, T, NH, HD).transpose(0, 2, 1, 3)

    q, k, v = heads(q), heads(k), heads(v)
    att = jnp.einsum('bhqd,bhkd->bhqk', q, k) * (1.0 / math.sqrt(HD))
    tril = jnp.tril(jnp.ones((T, T), bool))
    att = jnp.where(tril, att, -jnp.inf)
    att = jax.nn.softmax(att, axis=-1)

    shifted = [att]
    for i in range(1, 4):
        shifted.append(jnp.pad(att[:, :, :, i:], ((0, 0), (0, 0), (0, 0), (0, i))))
        shifted.append(jnp.pad(att[:, :, :, :T - i], ((0, 0), (0, 0), (0, 0), (i, 0))))

    ap = (h1 @ P['W_ap'].T + P['b_ap']).reshape(B, T, 7, NH).transpose(0, 2, 3, 1)
    beta = jax.nn.softmax(ap, axis=1)[..., None]
    interp = sum(beta[:, i] * shifted[i] for i in range(7))
    strict = jnp.triu(jnp.ones((T, T), bool), k=1)
    interp = jnp.where(strict[None, None], 0.0, interp)

    if prev_attn is not None:
        gamma = jax.nn.sigmoid(h1 @ P['W_lap'].T + P['b_lap']).transpose(0, 2, 1)[..., None]
        final = gamma * interp + (1.0 - gamma) * prev_attn
    else:
        final = interp

    y = jnp.einsum('bhqk,bhkd->bhqd', final, v).transpose(0, 2, 1, 3).reshape(B, T, C)
    y = y @ P['W_cproj'].T + P['b_cproj']
    x1 = x + y
    h2 = _ln(x1, P['ln2_w'], P['ln2_b'])
    m = _gelu(h2 @ P['W_fc'].T + P['b_fc']) @ P['W_mproj'].T + P['b_mproj']
    return x1 + m, final


# ------------------------------- main -----------------------------------------
if __name__ == "__main__":
    key = jax.random.PRNGKey(0)
    ks = jax.random.split(key, 16)

    def w(k, shape, scale=0.05):
        return scale * jax.random.normal(k, shape, jnp.float32)

    P = {
        'ln1_w': jnp.ones((C,), jnp.float32), 'ln1_b': jnp.zeros((C,), jnp.float32),
        'ln2_w': jnp.ones((C,), jnp.float32), 'ln2_b': jnp.zeros((C,), jnp.float32),
        'W_attn': w(ks[0], (3 * C, C)), 'b_attn': w(ks[1], (3 * C,), 0.02),
        'W_cproj': w(ks[2], (C, C)),    'b_cproj': w(ks[3], (C,), 0.02),
        'W_ap': w(ks[4], (7 * NH, C)),  'b_ap': w(ks[5], (7 * NH,), 0.02),
        'W_lap': w(ks[6], (NH, C)),     'b_lap': w(ks[7], (NH,), 0.02),
        'W_fc': w(ks[8], (4 * C, C)),   'b_fc': w(ks[9], (4 * C,), 0.02),
        'W_mproj': w(ks[10], (C, 4 * C)), 'b_mproj': w(ks[11], (C,), 0.02),
    }

    x = jax.random.normal(ks[12], (B, T, C), jnp.float32)
    # a valid "previous attention" (row-stochastic, causal)
    prev_logits = jax.random.normal(ks[13], (B, NH, T, T), jnp.float32)
    tril = jnp.tril(jnp.ones((T, T), bool))
    prev_attn = jax.nn.softmax(jnp.where(tril, prev_logits, -jnp.inf), axis=-1)

    # with a previous attention map
    y, att = shifted_block(x, prev_attn, P)
    jax.block_until_ready((y, att))
    y_ref, att_ref = reference(x, prev_attn, P)
    assert jnp.allclose(y, y_ref, atol=1e-3, rtol=1e-3), float(jnp.max(jnp.abs(y - y_ref)))
    assert jnp.allclose(att, att_ref, atol=1e-3, rtol=1e-3), float(jnp.max(jnp.abs(att - att_ref)))

    # first-layer path (no previous attention)
    y0, att0 = shifted_block(x, None, P)
    jax.block_until_ready((y0, att0))
    y0_ref, att0_ref = reference(x, None, P)
    assert jnp.allclose(y0, y0_ref, atol=1e-3, rtol=1e-3), float(jnp.max(jnp.abs(y0 - y0_ref)))
    assert jnp.allclose(att0, att0_ref, atol=1e-3, rtol=1e-3), float(jnp.max(jnp.abs(att0 - att0_ref)))

    print("KERNEL_OK")
</pallas_src>

<mosaic_0001>
module attributes {stable_mosaic.version = 11 : i64} {
  func.func @block_kernel(%arg0: i32, %arg1: memref<1xi32, #tpu.memory_space<smem>>, %arg2: memref<16x32xf32, #tpu.memory_space<vmem>>, %arg3: memref<64x8xf32, #tpu.memory_space<vmem>>, %arg4: memref<16x128xf32, #tpu.memory_space<vmem>>, %arg5: memref<32x288xf32, #tpu.memory_space<vmem>>, %arg6: memref<128x32xf32, #tpu.memory_space<vmem>>, %arg7: memref<16x32xf32, #tpu.memory_space<vmem>>, %arg8: memref<64x8xf32, #tpu.memory_space<vmem>>) attributes {dimension_semantics = [#tpu.dimension_semantics<arbitrary>], iteration_bounds = array<i64: 1>, scalar_prefetch = 1 : i64, scratch_operands = 0 : i64, tpu.core_type = #tpu.core_type<tc>, window_params = [{pipeline_mode = #tpu.pipeline_mode<synchronous>, transform_indices = @transform_0, window_bounds = array<i64: 16, 32>}, {pipeline_mode = #tpu.pipeline_mode<synchronous>, transform_indices = @transform_1, window_bounds = array<i64: 64, 8>}, {pipeline_mode = #tpu.pipeline_mode<synchronous>, transform_indices = @transform_2, window_bounds = array<i64: 16, 128>}, {pipeline_mode = #tpu.pipeline_mode<synchronous>, transform_indices = @transform_3, window_bounds = array<i64: 32, 288>}, {pipeline_mode = #tpu.pipeline_mode<synchronous>, transform_indices = @transform_4, window_bounds = array<i64: 128, 32>}, {pipeline_mode = #tpu.pipeline_mode<synchronous>, transform_indices = @transform_5, window_bounds = array<i64: 16, 32>}, {pipeline_mode = #tpu.pipeline_mode<synchronous>, transform_indices = @transform_6, window_bounds = array<i64: 64, 8>}]} {
    %c0 = arith.constant 0 : index
    %c0_0 = arith.constant 0 : index
    %0 = vector.load %arg4[%c0, %c0_0] : memref<16x128xf32, #tpu.memory_space<vmem>>, vector<16x128xf32>
    %1 = vector.extract_strided_slice %0 {offsets = [0, 0], sizes = [1, 128], strides = [1, 1]} : vector<16x128xf32> to vector<1x128xf32>
    %2 = vector.extract_strided_slice %0 {offsets = [1, 0], sizes = [1, 128], strides = [1, 1]} : vector<16x128xf32> to vector<1x128xf32>
    %3 = vector.extract_strided_slice %0 {offsets = [2, 0], sizes = [1, 32], strides = [1, 1]} : vector<16x128xf32> to vector<1x32xf32>
    %4 = vector.extract_strided_slice %0 {offsets = [3, 0], sizes = [1, 32], strides = [1, 1]} : vector<16x128xf32> to vector<1x32xf32>
    %5 = vector.extract_strided_slice %0 {offsets = [4, 0], sizes = [1, 32], strides = [1, 1]} : vector<16x128xf32> to vector<1x32xf32>
    %6 = vector.extract_strided_slice %0 {offsets = [5, 0], sizes = [1, 32], strides = [1, 1]} : vector<16x128xf32> to vector<1x32xf32>
    %7 = vector.extract_strided_slice %0 {offsets = [6, 0], sizes = [1, 32], strides = [1, 1]} : vector<16x128xf32> to vector<1x32xf32>
    %8 = vector.extract_strided_slice %0 {offsets = [7, 0], sizes = [1, 32], strides = [1, 1]} : vector<16x128xf32> to vector<1x32xf32>
    %9 = vector.extract_strided_slice %0 {offsets = [8, 0], sizes = [8, 56], strides = [1, 1]} : vector<16x128xf32> to vector<8x56xf32>
    %c0_1 = arith.constant 0 : index
    %c0_2 = arith.constant 0 : index
    %10 = vector.load %arg5[%c0_1, %c0_2] : memref<32x288xf32, #tpu.memory_space<vmem>>, vector<32x288xf32>
    %11 = vector.extract_strided_slice %10 {offsets = [0, 0], sizes = [32, 128], strides = [1, 1]} : vector<32x288xf32> to vector<32x128xf32>
    %12 = vector.extract_strided_slice %10 {offsets = [0, 128], sizes = [32, 128], strides = [1, 1]} : vector<32x288xf32> to vector<32x128xf32>
    %13 = vector.extract_strided_slice %10 {offsets = [0, 256], sizes = [32, 32], strides = [1, 1]} : vector<32x288xf32> to vector<32x32xf32>
    %c0_3 = arith.constant 0 : index
    %c0_4 = arith.constant 0 : index
    %14 = vector.load %arg2[%c0_3, %c0_4] : memref<16x32xf32, #tpu.memory_space<vmem>>, vector<16x32xf32>
    %cst = arith.constant dense<0.000000e+00> : vector<16xf32>
    %15 = vector.multi_reduction <add>, %14, %cst [1] : vector<16x32xf32> to vector<16xf32>
    %16 = vector.shape_cast %15 : vector<16xf32> to vector<16x1xf32>
    %cst_5 = arith.constant 3.200000e+01 : f32
    %17 = vector.broadcast %cst_5 : f32 to vector<16x1xf32>
    %18 = arith.divf %16, %17 : vector<16x1xf32>
    %19 = vector.broadcast %18 : vector<16x1xf32> to vector<16x32xf32>
    %20 = arith.subf %14, %19 : vector<16x32xf32>
    %21 = arith.mulf %20, %20 : vector<16x32xf32>
    %cst_6 = arith.constant dense<0.000000e+00> : vector<16xf32>
    %22 = vector.multi_reduction <add>, %21, %cst_6 [1] : vector<16x32xf32> to vector<16xf32>
    %23 = vector.shape_cast %22 : vector<16xf32> to vector<16x1xf32>
    %cst_7 = arith.constant 3.200000e+01 : f32
    %24 = vector.broadcast %cst_7 : f32 to vector<16x1xf32>
    %25 = arith.divf %23, %24 : vector<16x1xf32>
    %26 = vector.broadcast %18 : vector<16x1xf32> to vector<16x32xf32>
    %27 = arith.subf %14, %26 : vector<16x32xf32>
    %cst_8 = arith.constant 9.99999974E-6 : f32
    %28 = vector.broadcast %cst_8 : f32 to vector<16x1xf32>
    %29 = arith.addf %25, %28 : vector<16x1xf32>
    %30 = math.rsqrt %29 : vector<16x1xf32>
    %31 = vector.broadcast %30 : vector<16x1xf32> to vector<16x32xf32>
    %32 = arith.mulf %27, %31 : vector<16x32xf32>
    %33 = vector.broadcast %3 : vector<1x32xf32> to vector<16x32xf32>
    %34 = arith.mulf %32, %33 : vector<16x32xf32>
    %35 = vector.broadcast %4 : vector<1x32xf32> to vector<16x32xf32>
    %36 = arith.addf %34, %35 : vector<16x32xf32>
    %cst_9 = arith.constant dense<0.000000e+00> : vector<16x128xf32>
    %37 = tpu.matmul %36, %11, %cst_9 {dimension_numbers = #tpu.dot_dimension_numbers<[1], [0], [0], [1], [0, 0, 1, 1], [], []>} : vector<16x32xf32>, vector<32x128xf32>, vector<16x128xf32> -> vector<16x128xf32>
    %38 = vector.broadcast %1 : vector<1x128xf32> to vector<16x128xf32>
    %39 = arith.addf %37, %38 : vector<16x128xf32>
    %40 = vector.extract_strided_slice %39 {offsets = [0, 0], sizes = [16, 96], strides = [1, 1]} : vector<16x128xf32> to vector<16x96xf32>
    %41 = vector.extract_strided_slice %39 {offsets = [0, 96], sizes = [16, 28], strides = [1, 1]} : vector<16x128xf32> to vector<16x28xf32>
    %42 = vector.extract_strided_slice %39 {offsets = [0, 124], sizes = [16, 4], strides = [1, 1]} : vector<16x128xf32> to vector<16x4xf32>
    %43 = arith.negf %42 : vector<16x4xf32>
    %44 = math.exp %43 : vector<16x4xf32>
    %cst_10 = arith.constant 1.000000e+00 : f32
    %45 = vector.broadcast %cst_10 : f32 to vector<16x4xf32>
    %46 = arith.addf %45, %44 : vector<16x4xf32>
    %47 = arith.divf %45, %46 : vector<16x4xf32>
    %48 = vector.extract_strided_slice %40 {offsets = [0, 0], sizes = [16, 32], strides = [1, 1]} : vector<16x96xf32> to vector<16x32xf32>
    %49 = vector.extract_strided_slice %48 {offsets = [0, 0], sizes = [8, 8], strides = [1, 1]} : vector<16x32xf32> to vector<8x8xf32>
    %50 = vector.extract_strided_slice %40 {offsets = [0, 0], sizes = [16, 32], strides = [1, 1]} : vector<16x96xf32> to vector<16x32xf32>
    %51 = vector.extract_strided_slice %50 {offsets = [0, 8], sizes = [8, 8], strides = [1, 1]} : vector<16x32xf32> to vector<8x8xf32>
    %52 = vector.extract_strided_slice %40 {offsets = [0, 0], sizes = [16, 32], strides = [1, 1]} : vector<16x96xf32> to vector<16x32xf32>
    %53 = vector.extract_strided_slice %52 {offsets = [0, 16], sizes = [8, 8], strides = [1, 1]} : vector<16x32xf32> to vector<8x8xf32>
    %54 = vector.extract_strided_slice %40 {offsets = [0, 0], sizes = [16, 32], strides = [1, 1]} : vector<16x96xf32> to vector<16x32xf32>
    %55 = vector.extract_strided_slice %54 {offsets = [0, 24], sizes = [8, 8], strides = [1, 1]} : vector<16x32xf32> to vector<8x8xf32>
    %56 = vector.extract_strided_slice %40 {offsets = [0, 0], sizes = [16, 32], strides = [1, 1]} : vector<16x96xf32> to vector<16x32xf32>
    %57 = vector.extract_strided_slice %56 {offsets = [8, 0], sizes = [8, 8], strides = [1, 1]} : vector<16x32xf32> to vector<8x8xf32>
    %58 = vector.extract_strided_slice %40 {offsets = [0, 0], sizes = [16, 32], strides = [1, 1]} : vector<16x96xf32> to vector<16x32xf32>
    %59 = vector.extract_strided_slice %58 {offsets = [8, 8], sizes = [8, 8], strides = [1, 1]} : vector<16x32xf32> to vector<8x8xf32>
    %60 = vector.extract_strided_slice %40 {offsets = [0, 0], sizes = [16, 32], strides = [1, 1]} : vector<16x96xf32> to vector<16x32xf32>
    %61 = vector.extract_strided_slice %60 {offsets = [8, 16], sizes = [8, 8], strides = [1, 1]} : vector<16x32xf32> to vector<8x8xf32>
    %62 = vector.extract_strided_slice %40 {offsets = [0, 0], sizes = [16, 32], strides = [1, 1]} : vector<16x96xf32> to vector<16x32xf32>
    %63 = vector.extract_strided_slice %62 {offsets = [8, 24], sizes = [8, 8], strides = [1, 1]} : vector<16x32xf32> to vector<8x8xf32>
    %64 = vector.shape_cast %49 : vector<8x8xf32> to vector<1x8x8xf32>
    %65 = vector.shape_cast %51 : vector<8x8xf32> to vector<1x8x8xf32>
    %66 = vector.shape_cast %53 : vector<8x8xf32> to vector<1x8x8xf32>
    %67 = vector.shape_cast %55 : vector<8x8xf32> to vector<1x8x8xf32>
    %68 = vector.shape_cast %57 : vector<8x8xf32> to vector<1x8x8xf32>
    %69 = vector.shape_cast %59 : vector<8x8xf32> to vector<1x8x8xf32>
    %70 = vector.shape_cast %61 : vector<8x8xf32> to vector<1x8x8xf32>
    %71 = vector.shape_cast %63 : vector<8x8xf32> to vector<1x8x8xf32>
    %72 = tpu.concatenate %64, %65, %66, %67, %68, %69, %70, %71 in 0 : vector<1x8x8xf32>, vector<1x8x8xf32>, vector<1x8x8xf32>, vector<1x8x8xf32>, vector<1x8x8xf32>, vector<1x8x8xf32>, vector<1x8x8xf32>, vector<1x8x8xf32> -> vector<8x8x8xf32>
    %73 = vector.extract_strided_slice %40 {offsets = [0, 32], sizes = [16, 32], strides = [1, 1]} : vector<16x96xf32> to vector<16x32xf32>
    %74 = vector.extract_strided_slice %73 {offsets = [0, 0], sizes = [8, 8], strides = [1, 1]} : vector<16x32xf32> to vector<8x8xf32>
    %75 = vector.extract_strided_slice %40 {offsets = [0, 32], sizes = [16, 32], strides = [1, 1]} : vector<16x96xf32> to vector<16x32xf32>
    %76 = vector.extract_strided_slice %75 {offsets = [0, 8], sizes = [8, 8], strides = [1, 1]} : vector<16x32xf32> to vector<8x8xf32>
    %77 = vector.extract_strided_slice %40 {offsets = [0, 32], sizes = [16, 32], strides = [1, 1]} : vector<16x96xf32> to vector<16x32xf32>
    %78 = vector.extract_strided_slice %77 {offsets = [0, 16], sizes = [8, 8], strides = [1, 1]} : vector<16x32xf32> to vector<8x8xf32>
    %79 = vector.extract_strided_slice %40 {offsets = [0, 32], sizes = [16, 32], strides = [1, 1]} : vector<16x96xf32> to vector<16x32xf32>
    %80 = vector.extract_strided_slice %79 {offsets = [0, 24], sizes = [8, 8], strides = [1, 1]} : vector<16x32xf32> to vector<8x8xf32>
    %81 = vector.extract_strided_slice %40 {offsets = [0, 32], sizes = [16, 32], strides = [1, 1]} : vector<16x96xf32> to vector<16x32xf32>
    %82 = vector.extract_strided_slice %81 {offsets = [8, 0], sizes = [8, 8], strides = [1, 1]} : vector<16x32xf32> to vector<8x8xf32>
    %83 = vector.extract_strided_slice %40 {offsets = [0, 32], sizes = [16, 32], strides = [1, 1]} : vector<16x96xf32> to vector<16x32xf32>
    %84 = vector.extract_strided_slice %83 {offsets = [8, 8], sizes = [8, 8], strides = [1, 1]} : vector<16x32xf32> to vector<8x8xf32>
    %85 = vector.extract_strided_slice %40 {offsets = [0, 32], sizes = [16, 32], strides = [1, 1]} : vector<16x96xf32> to vector<16x32xf32>
    %86 = vector.extract_strided_slice %85 {offsets = [8, 16], sizes = [8, 8], strides = [1, 1]} : vector<16x32xf32> to vector<8x8xf32>
    %87 = vector.extract_strided_slice %40 {offsets = [0, 32], sizes = [16, 32], strides = [1, 1]} : vector<16x96xf32> to vector<16x32xf32>
    %88 = vector.extract_strided_slice %87 {offsets = [8, 24], sizes = [8, 8], strides = [1, 1]} : vector<16x32xf32> to vector<8x8xf32>
    %89 = vector.shape_cast %74 : vector<8x8xf32> to vector<1x8x8xf32>
    %90 = vector.shape_cast %76 : vector<8x8xf32> to vector<1x8x8xf32>
    %91 = vector.shape_cast %78 : vector<8x8xf32> to vector<1x8x8xf32>
    %92 = vector.shape_cast %80 : vector<8x8xf32> to vector<1x8x8xf32>
    %93 = vector.shape_cast %82 : vector<8x8xf32> to vector<1x8x8xf32>
    %94 = vector.shape_cast %84 : vector<8x8xf32> to vector<1x8x8xf32>
    %95 = vector.shape_cast %86 : vector<8x8xf32> to vector<1x8x8xf32>
    %96 = vector.shape_cast %88 : vector<8x8xf32> to vector<1x8x8xf32>
    %97 = tpu.concatenate %89, %90, %91, %92, %93, %94, %95, %96 in 0 : vector<1x8x8xf32>, vector<1x8x8xf32>, vector<1x8x8xf32>, vector<1x8x8xf32>, vector<1x8x8xf32>, vector<1x8x8xf32>, vector<1x8x8xf32>, vector<1x8x8xf32> -> vector<8x8x8xf32>
    %98 = vector.extract_strided_slice %40 {offsets = [0, 64], sizes = [16, 32], strides = [1, 1]} : vector<16x96xf32> to vector<16x32xf32>
    %99 = vector.extract_strided_slice %98 {offsets = [0, 0], sizes = [8, 8], strides = [1, 1]} : vector<16x32xf32> to vector<8x8xf32>
    %100 = vector.extract_strided_slice %40 {offsets = [0, 64], sizes = [16, 32], strides = [1, 1]} : vector<16x96xf32> to vector<16x32xf32>
    %101 = vector.extract_strided_slice %100 {offsets = [0, 8], sizes = [8, 8], strides = [1, 1]} : vector<16x32xf32> to vector<8x8xf32>
    %102 = vector.extract_strided_slice %40 {offsets = [0, 64], sizes = [16, 32], strides = [1, 1]} : vector<16x96xf32> to vector<16x32xf32>
    %103 = vector.extract_strided_slice %102 {offsets = [0, 16], sizes = [8, 8], strides = [1, 1]} : vector<16x32xf32> to vector<8x8xf32>
    %104 = vector.extract_strided_slice %40 {offsets = [0, 64], sizes = [16, 32], strides = [1, 1]} : vector<16x96xf32> to vector<16x32xf32>
    %105 = vector.extract_strided_slice %104 {offsets = [0, 24], sizes = [8, 8], strides = [1, 1]} : vector<16x32xf32> to vector<8x8xf32>
    %106 = vector.extract_strided_slice %40 {offsets = [0, 64], sizes = [16, 32], strides = [1, 1]} : vector<16x96xf32> to vector<16x32xf32>
    %107 = vector.extract_strided_slice %106 {offsets = [8, 0], sizes = [8, 8], strides = [1, 1]} : vector<16x32xf32> to vector<8x8xf32>
    %108 = vector.extract_strided_slice %40 {offsets = [0, 64], sizes = [16, 32], strides = [1, 1]} : vector<16x96xf32> to vector<16x32xf32>
    %109 = vector.extract_strided_slice %108 {offsets = [8, 8], sizes = [8, 8], strides = [1, 1]} : vector<16x32xf32> to vector<8x8xf32>
    %110 = vector.extract_strided_slice %40 {offsets = [0, 64], sizes = [16, 32], strides = [1, 1]} : vector<16x96xf32> to vector<16x32xf32>
    %111 = vector.extract_strided_slice %110 {offsets = [8, 16], sizes = [8, 8], strides = [1, 1]} : vector<16x32xf32> to vector<8x8xf32>
    %112 = vector.extract_strided_slice %40 {offsets = [0, 64], sizes = [16, 32], strides = [1, 1]} : vector<16x96xf32> to vector<16x32xf32>
    %113 = vector.extract_strided_slice %112 {offsets = [8, 24], sizes = [8, 8], strides = [1, 1]} : vector<16x32xf32> to vector<8x8xf32>
    %114 = vector.shape_cast %99 : vector<8x8xf32> to vector<1x8x8xf32>
    %115 = vector.shape_cast %101 : vector<8x8xf32> to vector<1x8x8xf32>
    %116 = vector.shape_cast %103 : vector<8x8xf32> to vector<1x8x8xf32>
    %117 = vector.shape_cast %105 : vector<8x8xf32> to vector<1x8x8xf32>
    %118 = vector.shape_cast %107 : vector<8x8xf32> to vector<1x8x8xf32>
    %119 = vector.shape_cast %109 : vector<8x8xf32> to vector<1x8x8xf32>
    %120 = vector.shape_cast %111 : vector<8x8xf32> to vector<1x8x8xf32>
    %121 = vector.shape_cast %113 : vector<8x8xf32> to vector<1x8x8xf32>
    %122 = tpu.concatenate %114, %115, %116, %117, %118, %119, %120, %121 in 0 : vector<1x8x8xf32>, vector<1x8x8xf32>, vector<1x8x8xf32>, vector<1x8x8xf32>, vector<1x8x8xf32>, vector<1x8x8xf32>, vector<1x8x8xf32>, vector<1x8x8xf32> -> vector<8x8x8xf32>
    %123 = vector.extract_strided_slice %41 {offsets = [0, 0], sizes = [8, 7], strides = [1, 1]} : vector<16x28xf32> to vector<8x7xf32>
    %124 = vector.extract_strided_slice %41 {offsets = [0, 7], sizes = [8, 7], strides = [1, 1]} : vector<16x28xf32> to vector<8x7xf32>
    %125 = vector.extract_strided_slice %41 {offsets = [0, 14], sizes = [8, 7], strides = [1, 1]} : vector<16x28xf32> to vector<8x7xf32>
    %126 = vector.extract_strided_slice %41 {offsets = [0, 21], sizes = [8, 7], strides = [1, 1]} : vector<16x28xf32> to vector<8x7xf32>
    %127 = vector.extract_strided_slice %41 {offsets = [8, 0], sizes = [8, 7], strides = [1, 1]} : vector<16x28xf32> to vector<8x7xf32>
    %128 = vector.extract_strided_slice %41 {offsets = [8, 7], sizes = [8, 7], strides = [1, 1]} : vector<16x28xf32> to vector<8x7xf32>
    %129 = vector.extract_strided_slice %41 {offsets = [8, 14], sizes = [8, 7], strides = [1, 1]} : vector<16x28xf32> to vector<8x7xf32>
    %130 = vector.extract_strided_slice %41 {offsets = [8, 21], sizes = [8, 7], strides = [1, 1]} : vector<16x28xf32> to vector<8x7xf32>
    %131 = vector.shape_cast %123 : vector<8x7xf32> to vector<1x8x7xf32>
    %132 = vector.shape_cast %124 : vector<8x7xf32> to vector<1x8x7xf32>
    %133 = vector.shape_cast %125 : vector<8x7xf32> to vector<1x8x7xf32>
    %134 = vector.shape_cast %126 : vector<8x7xf32> to vector<1x8x7xf32>
    %135 = vector.shape_cast %127 : vector<8x7xf32> to vector<1x8x7xf32>
    %136 = vector.shape_cast %128 : vector<8x7xf32> to vector<1x8x7xf32>
    %137 = vector.shape_cast %129 : vector<8x7xf32> to vector<1x8x7xf32>
    %138 = vector.shape_cast %130 : vector<8x7xf32> to vector<1x8x7xf32>
    %139 = tpu.concatenate %131, %132, %133, %134, %135, %136, %137, %138 in 0 : vector<1x8x7xf32>, vector<1x8x7xf32>, vector<1x8x7xf32>, vector<1x8x7xf32>, vector<1x8x7xf32>, vector<1x8x7xf32>, vector<1x8x7xf32>, vector<1x8x7xf32> -> vector<8x8x7xf32>
    %140 = vector.extract_strided_slice %47 {offsets = [0, 0], sizes = [8, 1], strides = [1, 1]} : vector<16x4xf32> to vector<8x1xf32>
    %141 = vector.extract_strided_slice %47 {offsets = [0, 1], sizes = [8, 1], strides = [1, 1]} : vector<16x4xf32> to vector<8x1xf32>
    %142 = vector.extract_strided_slice %47 {offsets = [0, 2], sizes = [8, 1], strides = [1, 1]} : vector<16x4xf32> to vector<8x1xf32>
    %143 = vector.extract_strided_slice %47 {offsets = [0, 3], sizes = [8, 1], strides = [1, 1]} : vector<16x4xf32> to vector<8x1xf32>
    %144 = vector.extract_strided_slice %47 {offsets = [8, 0], sizes = [8, 1], strides = [1, 1]} : vector<16x4xf32> to vector<8x1xf32>
    %145 = vector.extract_strided_slice %47 {offsets = [8, 1], sizes = [8, 1], strides = [1, 1]} : vector<16x4xf32> to vector<8x1xf32>
    %146 = vector.extract_strided_slice %47 {offsets = [8, 2], sizes = [8, 1], strides = [1, 1]} : vector<16x4xf32> to vector<8x1xf32>
    %147 = vector.extract_strided_slice %47 {offsets = [8, 3], sizes = [8, 1], strides = [1, 1]} : vector<16x4xf32> to vector<8x1xf32>
    %148 = vector.shape_cast %140 : vector<8x1xf32> to vector<1x8x1xf32>
    %149 = vector.shape_cast %141 : vector<8x1xf32> to vector<1x8x1xf32>
    %150 = vector.shape_cast %142 : vector<8x1xf32> to vector<1x8x1xf32>
    %151 = vector.shape_cast %143 : vector<8x1xf32> to vector<1x8x1xf32>
    %152 = vector.shape_cast %144 : vector<8x1xf32> to vector<1x8x1xf32>
    %153 = vector.shape_cast %145 : vector<8x1xf32> to vector<1x8x1xf32>
    %154 = vector.shape_cast %146 : vector<8x1xf32> to vector<1x8x1xf32>
    %155 = vector.shape_cast %147 : vector<8x1xf32> to vector<1x8x1xf32>
    %156 = tpu.concatenate %148, %149, %150, %151, %152, %153, %154, %155 in 0 : vector<1x8x1xf32>, vector<1x8x1xf32>, vector<1x8x1xf32>, vector<1x8x1xf32>, vector<1x8x1xf32>, vector<1x8x1xf32>, vector<1x8x1xf32>, vector<1x8x1xf32> -> vector<8x8x1xf32>
    "tpu.trace_start"() <{level = 10 : i32, message = "gtd,gsd->gts"}> : () -> ()
    %cst_11 = arith.constant dense<0.000000e+00> : vector<8x8x8xf32>
    %157 = tpu.matmul %72, %97, %cst_11 {dimension_numbers = #tpu.dot_dimension_numbers<[2], [2], [1], [1], [0, 0, 0, 1, 1, 1], [0], [0]>} : vector<8x8x8xf32>, vector<8x8x8xf32>, vector<8x8x8xf32> -> vector<8x8x8xf32>
    "tpu.trace_stop"() : () -> ()
    %cst_12 = arith.constant 0.353553385 : f32
    %158 = vector.broadcast %cst_12 : f32 to vector<8x8x8xf32>
    %159 = arith.mulf %157, %158 : vector<8x8x8xf32>
    %160 = vector.shape_cast %159 : vector<8x8x8xf32> to vector<64x8xf32>
    %161 = tpu.iota {dimensions = array<i32: 0>} : vector<64x8xi32>
    %c8_i32 = arith.constant 8 : i32
    %c0_i32 = arith.constant 0 : i32
    %162 = arith.cmpi eq, %c8_i32, %c0_i32 : i32
    %c1_i32 = arith.constant 1 : i32
    %163 = arith.select %162, %c1_i32, %c8_i32 : i32
    %164 = vector.broadcast %163 : i32 to vector<64x8xi32>
    %165 = arith.remsi %161, %164 : vector<64x8xi32>
    %c0_i32_13 = arith.constant 0 : i32
    %166 = vector.broadcast %c0_i32_13 : i32 to vector<64x8xi32>
    %167 = arith.cmpi ne, %165, %166 : vector<64x8xi32>
    %c0_i32_14 = arith.constant 0 : i32
    %168 = vector.broadcast %c0_i32_14 : i32 to vector<64x8xi32>
    %169 = arith.cmpi slt, %165, %168 : vector<64x8xi32>
    %c0_i32_15 = arith.constant 0 : i32
    %170 = arith.cmpi slt, %163, %c0_i32_15 : i32
    %171 = vector.broadcast %170 : i1 to vector<64x8xi1>
    %172 = vector.broadcast %171 : vector<64x8xi1> to vector<64x8xi1>
    %173 = arith.xori %169, %172 : vector<64x8xi1>
    %174 = arith.andi %173, %167 : vector<64x8xi1>
    %175 = vector.broadcast %163 : i32 to vector<64x8xi32>
    %176 = arith.addi %165, %175 : vector<64x8xi32>
    %177 = arith.select %174, %176, %165 : vector<64x8xi1>, vector<64x8xi32>
    %178 = tpu.iota {dimensions = array<i32: 1>} : vector<64x8xi32>
    %179 = arith.cmpi sle, %178, %177 : vector<64x8xi32>
    %cst_16 = arith.constant -1.000000e+30 : f32
    %180 = vector.broadcast %cst_16 : f32 to vector<64x8xf32>
    %181 = arith.select %179, %160, %180 : vector<64x8xi1>, vector<64x8xf32>
    %cst_17 = arith.constant dense<0xFF800000> : vector<64xf32>
    %182 = vector.multi_reduction <maximumf>, %181, %cst_17 [1] : vector<64x8xf32> to vector<64xf32>
    %183 = vector.shape_cast %182 : vector<64xf32> to vector<64x1xf32>
    %184 = vector.broadcast %183 : vector<64x1xf32> to vector<64x8xf32>
    %185 = arith.subf %181, %184 : vector<64x8xf32>
    %186 = math.exp %185 : vector<64x8xf32>
    %cst_18 = arith.constant dense<0.000000e+00> : vector<64xf32>
    %187 = vector.multi_reduction <add>, %186, %cst_18 [1] : vector<64x8xf32> to vector<64xf32>
    %188 = vector.shape_cast %187 : vector<64xf32> to vector<64x1xf32>
    %189 = vector.broadcast %188 : vector<64x1xf32> to vector<64x8xf32>
    %190 = arith.divf %186, %189 : vector<64x8xf32>
    %cst_19 = arith.constant dense<0.000000e+00> : vector<64x56xf32>
    %191 = tpu.matmul %190, %9, %cst_19 {dimension_numbers = #tpu.dot_dimension_numbers<[1], [0], [0], [1], [0, 0, 1, 1], [], []>} : vector<64x8xf32>, vector<8x56xf32>, vector<64x56xf32> -> vector<64x56xf32>
    %192 = vector.shape_cast %139 : vector<8x8x7xf32> to vector<64x7xf32>
    %cst_20 = arith.constant dense<0xFF800000> : vector<64xf32>
    %193 = vector.multi_reduction <maximumf>, %192, %cst_20 [1] : vector<64x7xf32> to vector<64xf32>
    %194 = vector.shape_cast %193 : vector<64xf32> to vector<64x1xf32>
    %195 = vector.broadcast %194 : vector<64x1xf32> to vector<64x7xf32>
    %196 = arith.subf %192, %195 : vector<64x7xf32>
    %197 = math.exp %196 : vector<64x7xf32>
    %cst_21 = arith.constant dense<0.000000e+00> : vector<64xf32>
    %198 = vector.multi_reduction <add>, %197, %cst_21 [1] : vector<64x7xf32> to vector<64xf32>
    %199 = vector.shape_cast %198 : vector<64xf32> to vector<64x1xf32>
    %200 = vector.broadcast %199 : vector<64x1xf32> to vector<64x7xf32>
    %201 = arith.divf %197, %200 : vector<64x7xf32>
    %202 = vector.extract_strided_slice %201 {offsets = [0, 0], sizes = [64, 1], strides = [1, 1]} : vector<64x7xf32> to vector<64x1xf32>
    %203 = vector.extract_strided_slice %191 {offsets = [0, 0], sizes = [64, 8], strides = [1, 1]} : vector<64x56xf32> to vector<64x8xf32>
    %204 = vector.broadcast %202 : vector<64x1xf32> to vector<64x8xf32>
    %205 = arith.mulf %204, %203 : vector<64x8xf32>
    %206 = vector.extract_strided_slice %201 {offsets = [0, 1], sizes = [64, 1], strides = [1, 1]} : vector<64x7xf32> to vector<64x1xf32>
    %207 = vector.extract_strided_slice %191 {offsets = [0, 8], sizes = [64, 8], strides = [1, 1]} : vector<64x56xf32> to vector<64x8xf32>
    %208 = vector.broadcast %206 : vector<64x1xf32> to vector<64x8xf32>
    %209 = arith.mulf %208, %207 : vector<64x8xf32>
    %210 = arith.addf %205, %209 : vector<64x8xf32>
    %211 = vector.extract_strided_slice %201 {offsets = [0, 2], sizes = [64, 1], strides = [1, 1]} : vector<64x7xf32> to vector<64x1xf32>
    %212 = vector.extract_strided_slice %191 {offsets = [0, 16], sizes = [64, 8], strides = [1, 1]} : vector<64x56xf32> to vector<64x8xf32>
    %213 = vector.broadcast %211 : vector<64x1xf32> to vector<64x8xf32>
    %214 = arith.mulf %213, %212 : vector<64x8xf32>
    %215 = arith.addf %210, %214 : vector<64x8xf32>
    %216 = vector.extract_strided_slice %201 {offsets = [0, 3], sizes = [64, 1], strides = [1, 1]} : vector<64x7xf32> to vector<64x1xf32>
    %217 = vector.extract_strided_slice %191 {offsets = [0, 24], sizes = [64, 8], strides = [1, 1]} : vector<64x56xf32> to vector<64x8xf32>
    %218 = vector.broadcast %216 : vector<64x1xf32> to vector<64x8xf32>
    %219 = arith.mulf %218, %217 : vector<64x8xf32>
    %220 = arith.addf %215, %219 : vector<64x8xf32>
    %221 = vector.extract_strided_slice %201 {offsets = [0, 4], sizes = [64, 1], strides = [1, 1]} : vector<64x7xf32> to vector<64x1xf32>
    %222 = vector.extract_strided_slice %191 {offsets = [0, 32], sizes = [64, 8], strides = [1, 1]} : vector<64x56xf32> to vector<64x8xf32>
    %223 = vector.broadcast %221 : vector<64x1xf32> to vector<64x8xf32>
    %224 = arith.mulf %223, %222 : vector<64x8xf32>
    %225 = arith.addf %220, %224 : vector<64x8xf32>
    %226 = vector.extract_strided_slice %201 {offsets = [0, 5], sizes = [64, 1], strides = [1, 1]} : vector<64x7xf32> to vector<64x1xf32>
    %227 = vector.extract_strided_slice %191 {offsets = [0, 40], sizes = [64, 8], strides = [1, 1]} : vector<64x56xf32> to vector<64x8xf32>
    %228 = vector.broadcast %226 : vector<64x1xf32> to vector<64x8xf32>
    %229 = arith.mulf %228, %227 : vector<64x8xf32>
    %230 = arith.addf %225, %229 : vector<64x8xf32>
    %231 = vector.extract_strided_slice %201 {offsets = [0, 6], sizes = [64, 1], strides = [1, 1]} : vector<64x7xf32> to vector<64x1xf32>
    %232 = vector.extract_strided_slice %191 {offsets = [0, 48], sizes = [64, 8], strides = [1, 1]} : vector<64x56xf32> to vector<64x8xf32>
    %233 = vector.broadcast %231 : vector<64x1xf32> to vector<64x8xf32>
    %234 = arith.mulf %233, %232 : vector<64x8xf32>
    %235 = arith.addf %230, %234 : vector<64x8xf32>
    %cst_22 = arith.constant 0.000000e+00 : f32
    %236 = vector.broadcast %cst_22 : f32 to vector<64x8xf32>
    %237 = arith.select %179, %235, %236 : vector<64x8xi1>, vector<64x8xf32>
    %c0_23 = arith.constant 0 : index
    %238 = memref.load %arg1[%c0_23] : memref<1xi32, #tpu.memory_space<smem>>
    %c0_i32_24 = arith.constant 0 : i32
    %239 = arith.cmpi sgt, %238, %c0_i32_24 : i32
    %240 = vector.shape_cast %156 : vector<8x8x1xf32> to vector<64x1xf32>
    %cst_25 = arith.constant 1.000000e+00 : f32
    %241 = vector.broadcast %cst_25 : f32 to vector<64x1xf32>
    %242 = arith.select %239, %240, %241 : vector<64x1xf32>
    %243 = vector.broadcast %242 : vector<64x1xf32> to vector<64x8xf32>
    %244 = arith.mulf %243, %237 : vector<64x8xf32>
    %cst_26 = arith.constant 1.000000e+00 : f32
    %245 = vector.broadcast %cst_26 : f32 to vector<64x1xf32>
    %246 = arith.subf %245, %242 : vector<64x1xf32>
    %c0_27 = arith.constant 0 : index
    %c0_28 = arith.constant 0 : index
    %247 = vector.load %arg3[%c0_27, %c0_28] : memref<64x8xf32, #tpu.memory_space<vmem>>, vector<64x8xf32>
    %248 = vector.broadcast %246 : vector<64x1xf32> to vector<64x8xf32>
    %249 = arith.mulf %248, %247 : vector<64x8xf32>
    %250 = arith.addf %244, %249 : vector<64x8xf32>
    %c0_29 = arith.constant 0 : index
    %c0_30 = arith.constant 0 : index
    %251 = vector.load %arg8[%c0_29, %c0_30] : memref<64x8xf32, #tpu.memory_space<vmem>>, vector<64x8xf32>
    tpu.vector_store %arg8[%c0_29, %c0_30], %250 {strides = array<i32>} : memref<64x8xf32, #tpu.memory_space<vmem>>, vector<64x8xf32>,
    %252 = vector.shape_cast %250 : vector<64x8xf32> to vector<8x8x8xf32>
    "tpu.trace_start"() <{level = 10 : i32, message = "gts,gsd->gtd"}> : () -> ()
    %cst_31 = arith.constant dense<0.000000e+00> : vector<8x8x8xf32>
    %253 = tpu.matmul %252, %122, %cst_31 {dimension_numbers = #tpu.dot_dimension_numbers<[2], [1], [1], [2], [0, 0, 0, 1, 1, 2], [0], [0]>} : vector<8x8x8xf32>, vector<8x8x8xf32>, vector<8x8x8xf32> -> vector<8x8x8xf32>
    "tpu.trace_stop"() : () -> ()
    %254 = vector.extract_strided_slice %253 {offsets = [0, 0, 0], sizes = [1, 8, 8], strides = [1, 1, 1]} : vector<8x8x8xf32> to vector<1x8x8xf32>
    %255 = vector.shape_cast %254 : vector<1x8x8xf32> to vector<8x8xf32>
    %256 = vector.extract_strided_slice %253 {offsets = [1, 0, 0], sizes = [1, 8, 8], strides = [1, 1, 1]} : vector<8x8x8xf32> to vector<1x8x8xf32>
    %257 = vector.shape_cast %256 : vector<1x8x8xf32> to vector<8x8xf32>
    %258 = vector.extract_strided_slice %253 {offsets = [2, 0, 0], sizes = [1, 8, 8], strides = [1, 1, 1]} : vector<8x8x8xf32> to vector<1x8x8xf32>
    %259 = vector.shape_cast %258 : vector<1x8x8xf32> to vector<8x8xf32>
    %260 = vector.extract_strided_slice %253 {offsets = [3, 0, 0], sizes = [1, 8, 8], strides = [1, 1, 1]} : vector<8x8x8xf32> to vector<1x8x8xf32>
    %261 = vector.shape_cast %260 : vector<1x8x8xf32> to vector<8x8xf32>
    %262 = tpu.concatenate %255, %257, %259, %261 in 1 : vector<8x8xf32>, vector<8x8xf32>, vector<8x8xf32>, vector<8x8xf32> -> vector<8x32xf32>
    %263 = vector.extract_strided_slice %253 {offsets = [4, 0, 0], sizes = [1, 8, 8], strides = [1, 1, 1]} : vector<8x8x8xf32> to vector<1x8x8xf32>
    %264 = vector.shape_cast %263 : vector<1x8x8xf32> to vector<8x8xf32>
    %265 = vector.extract_strided_slice %253 {offsets = [5, 0, 0], sizes = [1, 8, 8], strides = [1, 1, 1]} : vector<8x8x8xf32> to vector<1x8x8xf32>
    %266 = vector.shape_cast %265 : vector<1x8x8xf32> to vector<8x8xf32>
    %267 = vector.extract_strided_slice %253 {offsets = [6, 0, 0], sizes = [1, 8, 8], strides = [1, 1, 1]} : vector<8x8x8xf32> to vector<1x8x8xf32>
    %268 = vector.shape_cast %267 : vector<1x8x8xf32> to vector<8x8xf32>
    %269 = vector.extract_strided_slice %253 {offsets = [7, 0, 0], sizes = [1, 8, 8], strides = [1, 1, 1]} : vector<8x8x8xf32> to vector<1x8x8xf32>
    %270 = vector.shape_cast %269 : vector<1x8x8xf32> to vector<8x8xf32>
    %271 = tpu.concatenate %264, %266, %268, %270 in 1 : vector<8x8xf32>, vector<8x8xf32>, vector<8x8xf32>, vector<8x8xf32> -> vector<8x32xf32>
    %272 = tpu.concatenate %262, %271 in 0 : vector<8x32xf32>, vector<8x32xf32> -> vector<16x32xf32>
    %cst_32 = arith.constant dense<0.000000e+00> : vector<16x32xf32>
    %273 = tpu.matmul %272, %13, %cst_32 {dimension_numbers = #tpu.dot_dimension_numbers<[1], [0], [0], [1], [0, 0, 1, 1], [], []>} : vector<16x32xf32>, vector<32x32xf32>, vector<16x32xf32> -> vector<16x32xf32>
    %274 = vector.broadcast %7 : vector<1x32xf32> to vector<16x32xf32>
    %275 = arith.addf %273, %274 : vector<16x32xf32>
    %276 = arith.addf %14, %275 : vector<16x32xf32>
    %cst_33 = arith.constant dense<0.000000e+00> : vector<16xf32>
    %277 = vector.multi_reduction <add>, %276, %cst_33 [1] : vector<16x32xf32> to vector<16xf32>
    %278 = vector.shape_cast %277 : vector<16xf32> to vector<16x1xf32>
    %cst_34 = arith.constant 3.200000e+01 : f32
    %279 = vector.broadcast %cst_34 : f32 to vector<16x1xf32>
    %280 = arith.divf %278, %279 : vector<16x1xf32>
    %281 = vector.broadcast %280 : vector<16x1xf32> to vector<16x32xf32>
    %282 = arith.subf %276, %281 : vector<16x32xf32>
    %283 = arith.mulf %282, %282 : vector<16x32xf32>
    %cst_35 = arith.constant dense<0.000000e+00> : vector<16xf32>
    %284 = vector.multi_reduction <add>, %283, %cst_35 [1] : vector<16x32xf32> to vector<16xf32>
    %285 = vector.shape_cast %284 : vector<16xf32> to vector<16x1xf32>
    %cst_36 = arith.constant 3.200000e+01 : f32
    %286 = vector.broadcast %cst_36 : f32 to vector<16x1xf32>
    %287 = arith.divf %285, %286 : vector<16x1xf32>
    %288 = vector.broadcast %280 : vector<16x1xf32> to vector<16x32xf32>
    %289 = arith.subf %276, %288 : vector<16x32xf32>
    %cst_37 = arith.constant 9.99999974E-6 : f32
    %290 = vector.broadcast %cst_37 : f32 to vector<16x1xf32>
    %291 = arith.addf %287, %290 : vector<16x1xf32>
    %292 = math.rsqrt %291 : vector<16x1xf32>
    %293 = vector.broadcast %292 : vector<16x1xf32> to vector<16x32xf32>
    %294 = arith.mulf %289, %293 : vector<16x32xf32>
    %295 = vector.broadcast %5 : vector<1x32xf32> to vector<16x32xf32>
    %296 = arith.mulf %294, %295 : vector<16x32xf32>
    %297 = vector.broadcast %6 : vector<1x32xf32> to vector<16x32xf32>
    %298 = arith.addf %296, %297 : vector<16x32xf32>
    %cst_38 = arith.constant dense<0.000000e+00> : vector<16x128xf32>
    %299 = tpu.matmul %298, %12, %cst_38 {dimension_numbers = #tpu.dot_dimension_numbers<[1], [0], [0], [1], [0, 0, 1, 1], [], []>} : vector<16x32xf32>, vector<32x128xf32>, vector<16x128xf32> -> vector<16x128xf32>
    %300 = vector.broadcast %2 : vector<1x128xf32> to vector<16x128xf32>
    %301 = arith.addf %299, %300 : vector<16x128xf32>
    %cst_39 = arith.constant 5.000000e-01 : f32
    %302 = vector.broadcast %cst_39 : f32 to vector<16x128xf32>
    %303 = arith.mulf %302, %301 : vector<16x128xf32>
    %cst_40 = arith.constant 4.471500e-02 : f32
    %304 = vector.broadcast %cst_40 : f32 to vector<16x128xf32>
    %305 = arith.mulf %304, %301 : vector<16x128xf32>
    %306 = arith.mulf %305, %301 : vector<16x128xf32>
    %307 = arith.mulf %306, %301 : vector<16x128xf32>
    %308 = arith.addf %301, %307 : vector<16x128xf32>
    %cst_41 = arith.constant 0.797884583 : f32
    %309 = vector.broadcast %cst_41 : f32 to vector<16x128xf32>
    %310 = arith.mulf %309, %308 : vector<16x128xf32>
    %311 = math.tanh %310 : vector<16x128xf32>
    %cst_42 = arith.constant 1.000000e+00 : f32
    %312 = vector.broadcast %cst_42 : f32 to vector<16x128xf32>
    %313 = arith.addf %312, %311 : vector<16x128xf32>
    %314 = arith.mulf %303, %313 : vector<16x128xf32>
    %c0_43 = arith.constant 0 : index
    %c0_44 = arith.constant 0 : index
    %315 = vector.load %arg6[%c0_43, %c0_44] : memref<128x32xf32, #tpu.memory_space<vmem>>, vector<128x32xf32>
    %cst_45 = arith.constant dense<0.000000e+00> : vector<16x32xf32>
    %316 = tpu.matmul %314, %315, %cst_45 {dimension_numbers = #tpu.dot_dimension_numbers<[1], [0], [0], [1], [0, 0, 1, 1], [], []>} : vector<16x128xf32>, vector<128x32xf32>, vector<16x32xf32> -> vector<16x32xf32>
    %317 = vector.broadcast %8 : vector<1x32xf32> to vector<16x32xf32>
    %318 = arith.addf %316, %317 : vector<16x32xf32>
    %319 = arith.addf %276, %318 : vector<16x32xf32>
    %c0_46 = arith.constant 0 : index
    %c0_47 = arith.constant 0 : index
    %320 = vector.load %arg7[%c0_46, %c0_47] : memref<16x32xf32, #tpu.memory_space<vmem>>, vector<16x32xf32>
    tpu.vector_store %arg7[%c0_46, %c0_47], %319 {strides = array<i32>} : memref<16x32xf32, #tpu.memory_space<vmem>>, vector<16x32xf32>,
    return
  }
  func.func @transform_0(%arg0: i32, %arg1: memref<1xi32, #tpu.memory_space<smem>>) -> (i32, i32) {
    %c0_i32 = arith.constant 0 : i32
    %c0_i32_0 = arith.constant 0 : i32
    %c0_i32_1 = arith.constant 0 : i32
    return %c0_i32, %c0_i32_0 : i32, i32
  }
  func.func @transform_1(%arg0: i32, %arg1: memref<1xi32, #tpu.memory_space<smem>>) -> (i32, i32) {
    %c0_i32 = arith.constant 0 : i32
    %c0_i32_0 = arith.constant 0 : i32
    %c0_i32_1 = arith.constant 0 : i32
    return %c0_i32, %c0_i32_0 : i32, i32
  }
  func.func @transform_2(%arg0: i32, %arg1: memref<1xi32, #tpu.memory_space<smem>>) -> (i32, i32) {
    %c0_i32 = arith.constant 0 : i32
    %c0_i32_0 = arith.constant 0 : i32
    %c0_i32_1 = arith.constant 0 : i32
    return %c0_i32, %c0_i32_0 : i32, i32
  }
  func.func @transform_3(%arg0: i32, %arg1: memref<1xi32, #tpu.memory_space<smem>>) -> (i32, i32) {
    %c0_i32 = arith.constant 0 : i32
    %c0_i32_0 = arith.constant 0 : i32
    %c0_i32_1 = arith.constant 0 : i32
    return %c0_i32, %c0_i32_0 : i32, i32
  }
  func.func @transform_4(%arg0: i32, %arg1: memref<1xi32, #tpu.memory_space<smem>>) -> (i32, i32) {
    %c0_i32 = arith.constant 0 : i32
    %c0_i32_0 = arith.constant 0 : i32
    %c0_i32_1 = arith.constant 0 : i32
    return %c0_i32, %c0_i32_0 : i32, i32
  }
  func.func @transform_5(%arg0: i32, %arg1: memref<1xi32, #tpu.memory_space<smem>>) -> (i32, i32) {
    %c0_i32 = arith.constant 0 : i32
    %c0_i32_0 = arith.constant 0 : i32
    %c0_i32_1 = arith.constant 0 : i32
    return %c0_i32, %c0_i32_0 : i32, i32
  }
  func.func @transform_6(%arg0: i32, %arg1: memref<1xi32, #tpu.memory_space<smem>>) -> (i32, i32) {
    %c0_i32 = arith.constant 0 : i32
    %c0_i32_0 = arith.constant 0 : i32
    %c0_i32_1 = arith.constant 0 : i32
    return %c0_i32, %c0_i32_0 : i32, i32
  }
}

</mosaic_0001>

<llo_original>
// kernel: tpu_custom_call.1
$region0: #{tpu_custom_call.1}
  #allocation0 [shape = 'u32[]', space=smem, size = 0x4, offset = 0x4, fixed_abs, tag = 'smem constant byte address 0x4 - core index']
  #allocation1 [shape = 'u32[144,128]{1,0:T(1,128)}', space=vmem, size = 0x12000, scoped, tag = 'internal scratch']
  #allocation2 [shape = 's32[1]{0}', space=sflag, size = 0x4, scoped, tag = 'scoped memory for tpu_custom_call.1']
  #allocation3 [shape = 's32[1]{0:T(128)S(6)}', space=smem, size = 0x200, scoped, tag = 'prefetched SMEM operand 0']
  %s0 = inlined_call_operand.<no memory space> [shape: s32[1], index: 0, kind: input, shape index: {}]
  %s1 = inlined_call_operand.vmem [shape: f32[16,32], index: 1, kind: input, shape index: {}]
  %s2 = inlined_call_operand.vmem [shape: f32[64,8], index: 2, kind: input, shape index: {}]
  %s3 = inlined_call_operand.vmem [shape: f32[16,128], index: 3, kind: input, shape index: {}]
  %s4 = inlined_call_operand.vmem [shape: f32[32,288], index: 4, kind: input, shape index: {}]
  %s5 = inlined_call_operand.vmem [shape: f32[128,32], index: 5, kind: input, shape index: {}]
  %s6 = inlined_call_operand.hbm [shape: f32[16,32], index: 6, kind: output, shape index: {0}]
  %s7 = inlined_call_operand.vmem [shape: f32[64,8], index: 7, kind: output, shape index: {1}]
  %8 = xla_tuple %s6, %s7
  %s9 = sld [smem:[#allocation0]]
  $region38: #{tpu_custom_call.1} parent=0
    _
  %s11 = ssub.s32 1, %s9
  %s12 = scalar_select 0, %s11, %s9
  %13 = sst [smem:[#allocation3]] %s0
  $region1: #{tpu_custom_call.1} parent=0
    #allocation4 [shape = 'u8[8192]{0}', space=vmem, size = 0x2000, scoped, tag = 'output window, operand 0, single buffered']
    #allocation5 [shape = 's32[1]{0}', space=sflag, size = 0x4, scoped, tag = 'scoped memory for tpu_custom_call.1']
    %14 = vsyncpa [#allocation5], 0
    // Predicated region
    $region2: #{tpu_custom_call.1} parent=1 // pred_check
      _
    $region3: #{tpu_custom_call.1} parent=1 // pred_check_branch
      %16 = sbr.rel (0) target = $region5
    $region4: #{tpu_custom_call.1} parent=1 // pred_region
      _
    $region5: #{tpu_custom_call.1} parent=1 // pred_fallthru
      _
    // Predicated region
    $region6: #{tpu_custom_call.1} parent=1 // pred_check
      _
    $region7: #{tpu_custom_call.1} parent=1 // pred_check_branch
      %18 = sbr.rel (0) target = $region9
    $region8: #{tpu_custom_call.1} parent=1 // pred_region
      _
    $region9: #{tpu_custom_call.1} parent=1 // pred_fallthru
      _
    // Predicated region
    $region10: #{tpu_custom_call.1} parent=1 // pred_check
      _
    $region11: #{tpu_custom_call.1} parent=1 // pred_check_branch
      %20 = sbr.rel (0) target = $region13
    $region12: #{tpu_custom_call.1} parent=1 // pred_region
      _
    $region13: #{tpu_custom_call.1} parent=1 // pred_fallthru
      _
    // Predicated region
    $region14: #{tpu_custom_call.1} parent=1 // pred_check
      _
    $region15: #{tpu_custom_call.1} parent=1 // pred_check_branch
      %22 = sbr.rel (0) target = $region17
    $region16: #{tpu_custom_call.1} parent=1 // pred_region
      _
    $region17: #{tpu_custom_call.1} parent=1 // pred_fallthru
      _
    // Predicated region
    $region18: #{tpu_custom_call.1} parent=1 // pred_check
      _
    $region19: #{tpu_custom_call.1} parent=1 // pred_check_branch
      %24 = sbr.rel (0) target = $region21
    $region20: #{tpu_custom_call.1} parent=1 // pred_region
      _
    $region21: #{tpu_custom_call.1} parent=1 // pred_fallthru
      _
    %v25 = vld [vmem:[%s3] sm:$0xff]
    %v26 = vld [vmem:[%s3 + $0x8] sm:$0xff]
    %v27 = vld [vmem:[%s4] sm:$0xff]
    %v28 = vld [vmem:[%s4 + $0x8] sm:$0xff]
    %v29 = vld [vmem:[%s4 + $0x10] sm:$0xff]
    %v30 = vld [vmem:[%s4 + $0x18] sm:$0xff]
    %v31 = vld [vmem:[%s4 + $0x20] sm:$0xff]
    %v32 = vld [vmem:[%s4 + $0x28] sm:$0xff]
    %v33 = vld [vmem:[%s4 + $0x30] sm:$0xff]
    %v34 = vld [vmem:[%s4 + $0x38] sm:$0xff]
    %v35 = vld [vmem:[%s4 + $0x40] sm:$0xff]
    %v36 = vld [vmem:[%s4 + $0x48] sm:$0xff]
    %v37 = vld [vmem:[%s4 + $0x50] sm:$0xff]
    %v38 = vld [vmem:[%s4 + $0x58] sm:$0xff]
    %v39 = vld [vmem:[%s1] sm:$0xff]
    %v40 = vld [vmem:[%s1 + $0x8] sm:$0xff]
    %vm41 = vcmask 261120
    %v42 = vsel %vm41, %v39, 0.0
    %43 = vadd.xlane.f32.xlu0 %v42
    %v44 = vpop.xlane.xlu0 %43
    %v45 = vsel %vm41, %v40, 0.0
    %46 = vadd.xlane.f32.xlu0 %v45
    %v47 = vpop.xlane.xlu0 %46
    %v48 = vrcp.pop 32.0
    %v49 = vmul.f32 %v44, %v48
    %v50 = vmul.f32 %v47, %v48
    %v51 = vsub.f32 %v39, %v49
    %v52 = vsub.f32 %v40, %v50
    %v53 = vmul.f32 %v51, %v51
    %v54 = vmul.f32 %v52, %v52
    %v55 = vsel %vm41, %v53, 0.0
    %56 = vadd.xlane.f32.xlu0 %v55
    %v57 = vpop.xlane.xlu0 %56
    %v58 = vsel %vm41, %v54, 0.0
    %59 = vadd.xlane.f32.xlu0 %v58
    %v60 = vpop.xlane.xlu0 %59
    %v61 = vmul.f32 %v57, %v48
    %v62 = vmul.f32 %v60, %v48
    %v63 = vadd.f32 %v61, 1e-05
    %v64 = vadd.f32 %v62, 1e-05
    %v65 = vrsqrt.pop %v63
    %v66 = vrsqrt.pop %v64
    %v67 = vmul.f32 %v51, %v65
    %v68 = vmul.f32 %v52, %v66
    %v69 = vlaneseq
    %v70 = vshrl.u32 %v69, 7
    %v71 = vsub.s32 2, %v70
    %v72 = vrot.slane %v25, %v71
    %v73 = vmul.f32 %v67, %v72
    %v74 = vmul.f32 %v68, %v72
    %v75 = vlaneseq
    %v76 = vshrl.u32 %v75, 7
    %v77 = vsub.s32 3, %v76
    %v78 = vrot.slane %v25, %v77
    %v79 = vadd.f32 %v73, %v78
    %v80 = vadd.f32 %v74, %v78
    %v81 = vlaneseq
    %v82 = vshrl.u32 %v81, 7
    %v83 = vsub.s32 0, %v82
    %v84 = vrot.slane %v25, %v83
    %v86 = vsel %vm41, %v79, 0
    %v89 = vsel %vm41, %v80, 0
    %91 = vmatprep.subr.mxu0 0.0
    %92 = vmatpush1.msra.mxu0 %v27
    %93 = vmatprep.subr.mxu0 0.0
    %94 = vmatpush1.msra.mxu0 %v30
    %95 = vmatprep.subr.mxu0 0.0
    %96 = vmatpush1.msra.mxu0 %v33
    %97 = vmatprep.subr.mxu0 0.0
    %98 = vmatpush1.msra.mxu0 %v36
    %99 = vmatprep.subr.mxu0 0.0
    %100 = vmatpush1.msra.mxu0 0.0
    %101 = vmatprep.subr.mxu0 0.0
    %102 = vmatpush1.msra.mxu0 0.0
    %103 = vmatprep.subr.mxu0 0.0
    %104 = vmatpush1.msra.mxu0 0.0
    %105 = vmatprep.subr.mxu0 0.0
    %106 = vmatpush1.msra.mxu0 0.0
    %107 = vmatprep.subr.mxu0 0.0
    %108 = vmatpush1.msra.mxu0 0.0
    %109 = vmatprep.subr.mxu0 0.0
    %110 = vmatpush1.msra.mxu0 0.0
    %111 = vmatprep.subr.mxu0 0.0
    %112 = vmatpush1.msra.mxu0 0.0
    %113 = vmatprep.subr.mxu0 0.0
    %114 = vmatpush1.msra.mxu0 0.0
    %115 = vmatprep.subr.mxu0 0.0
    %116 = vmatpush1.msra.mxu0 0.0
    %117 = vmatprep.subr.mxu0 0.0
    %118 = vmatpush1.msra.mxu0 0.0
    %119 = vmatprep.subr.mxu0 0.0
    %120 = vmatpush1.msra.mxu0 0.0
    %121 = vmatprep.subr.mxu0 0.0
    %122 = vmatpush1.msra.mxu0 0.0
    %123 = vmatprep.subr.mxu0 0.0
    %124 = vmatpush1.msra.mxu0 0.0
    %125 = vmatprep.subr.mxu0 0.0
    %126 = vmatpush1.msra.mxu0 0.0
    %127 = vmatprep.subr.mxu0 0.0
    %128 = vmatpush1.msra.mxu0 0.0
    %129 = vmatprep.subr.mxu0 0.0
    %130 = vmatpush1.msra.mxu0 0.0
    %131 = vmatprep.subr.mxu0 0.0
    %132 = vmatpush1.msra.mxu0 0.0
    %133 = vmatprep.subr.mxu0 0.0
    %134 = vmatpush1.msra.mxu0 0.0
    %135 = vmatprep.subr.mxu0 0.0
    %136 = vmatpush1.msra.mxu0 0.0
    %137 = vmatprep.subr.mxu0 0.0
    %138 = vmatpush1.msra.mxu0 0.0
    %139 = vmatprep.subr.mxu0 0.0
    %140 = vmatpush1.msra.mxu0 0.0
    %141 = vmatprep.subr.mxu0 0.0
    %142 = vmatpush1.msra.mxu0 0.0
    %143 = vmatprep.subr.mxu0 0.0
    %144 = vmatpush1.msra.mxu0 0.0
    %145 = vmatprep.subr.mxu0 0.0
    %146 = vmatpush1.msra.mxu0 0.0
    %147 = vmatprep.subr.mxu0 0.0
    %148 = vmatpush1.msra.mxu0 0.0
    %149 = vmatprep.subr.mxu0 0.0
    %150 = vmatpush1.msra.mxu0 0.0
    %151 = vmatprep.subr.mxu0 0.0
    %152 = vmatpush1.msra.mxu0 0.0
    %153 = vmatprep.subr.mxu0 0.0
    %154 = vmatpush1.msra.mxu0 0.0
    %155 = vmatprep.mubr.f32.mxu0 0.0
    %156 = vmatmul.mubr.f32.gmra.mrb[0].mxu0 %v86
    %v157 = vpop.f32.mrb[0].mxu0
    %v158 = vadd.f32 %v84, %v157
    %v159 = vpop.f32.mrb[0].mxu0
    %160 = vmatprep.mubr.f32.mxu0 0.0
    %161 = vmatmul.mubr.f32.gmra.mrb[0].mxu0 %v89
    %v162 = vpop.f32.mrb[0].mxu0
    %v163 = vadd.f32 %v84, %v162
    %v164 = vpop.f32.mrb[0].mxu0
    %165 = vdwg.mxu0
    %v166 = vxor.u32 %v158, 2147483648
    %v167 = vxor.u32 %v163, 2147483648
    %v168 = vmul.f32 %v166, 1.442695
    %v169 = vpow.pop %v168
    %v170 = vmul.f32 %v167, 1.442695
    %v171 = vpow.pop %v170
    %v172 = vadd.f32 %v169, 1.0
    %v173 = vadd.f32 %v171, 1.0
    %v174 = vrcp.pop %v172
    %v175 = vmul.f32 1.0, %v174
    %v176 = vrcp.pop %v173
    %v177 = vmul.f32 1.0, %v176
    %179 = vrot.lane.b32.xlu0 %v158, 120
    %v180 = vpop.permute.xlu0 %179
    %181 = vrot.lane.b32.xlu0 %v158, 112
    %v182 = vpop.permute.xlu0 %181
    %183 = vrot.lane.b32.xlu0 %v158, 104
    %v184 = vpop.permute.xlu0 %183
    %186 = vrot.lane.b32.xlu0 %v163, 120
    %v187 = vpop.permute.xlu0 %186
    %188 = vrot.lane.b32.xlu0 %v163, 112
    %v189 = vpop.permute.xlu0 %188
    %190 = vrot.lane.b32.xlu0 %v163, 104
    %v191 = vpop.permute.xlu0 %190
    %192 = vrot.lane.b32.xlu0 %v158, 121
    %v193 = vpop.permute.xlu0 %192
    %195 = vrot.lane.b32.xlu0 %v158, 114
    %v196 = vpop.permute.xlu0 %195
    %198 = vrot.lane.b32.xlu0 %v158, 107
    %v199 = vpop.permute.xlu0 %198
    %201 = vrot.lane.b32.xlu0 %v163, 121
    %v202 = vpop.permute.xlu0 %201
    %204 = vrot.lane.b32.xlu0 %v163, 114
    %v205 = vpop.permute.xlu0 %204
    %207 = vrot.lane.b32.xlu0 %v163, 107
    %v208 = vpop.permute.xlu0 %207
    %211 = vrot.lane.b32.xlu0 %v175, 127
    %v212 = vpop.permute.xlu0 %211
    %214 = vrot.lane.b32.xlu0 %v175, 126
    %v215 = vpop.permute.xlu0 %214
    %217 = vrot.lane.b32.xlu0 %v175, 125
    %v218 = vpop.permute.xlu0 %217
    %221 = vrot.lane.b32.xlu0 %v177, 127
    %v222 = vpop.permute.xlu0 %221
    %224 = vrot.lane.b32.xlu0 %v177, 126
    %v225 = vpop.permute.xlu0 %224
    %227 = vrot.lane.b32.xlu0 %v177, 125
    %v228 = vpop.permute.xlu0 %227
    %230 = vrot.lane.b32.xlu0 %v158, 96
    %v231 = vpop.permute.xlu0 %230
    %vm232 = vcmask 64512
    %v233 = vsel %vm232, %v158, 0
    %v235 = vsel %vm232, %v231, 0
    %237 = vmatprep.subr.mxu0 0.0
    %238 = vmatpush1.xpose.msra.mxu0 %v235
    %239 = vmatprep.subr.mxu0 0.0
    %240 = vmatpush1.xpose.msra.mxu0 0.0
    %241 = vmatprep.subr.mxu0 0.0
    %242 = vmatpush1.xpose.msra.mxu0 0.0
    %243 = vmatprep.subr.mxu0 0.0
    %244 = vmatpush1.xpose.msra.mxu0 0.0
    %245 = vmatprep.subr.mxu0 0.0
    %246 = vmatpush1.xpose.msra.mxu0 0.0
    %247 = vmatprep.subr.mxu0 0.0
    %248 = vmatpush1.xpose.msra.mxu0 0.0
    %249 = vmatprep.subr.mxu0 0.0
    %250 = vmatpush1.xpose.msra.mxu0 0.0
    %251 = vmatprep.subr.mxu0 0.0
    %252 = vmatpush1.xpose.msra.mxu0 0.0
    %253 = vmatprep.subr.mxu0 0.0
    %254 = vmatpush1.xpose.msra.mxu0 0.0
    %255 = vmatprep.subr.mxu0 0.0
    %256 = vmatpush1.xpose.msra.mxu0 0.0
    %257 = vmatprep.subr.mxu0 0.0
    %258 = vmatpush1.xpose.msra.mxu0 0.0
    %259 = vmatprep.subr.mxu0 0.0
    %260 = vmatpush1.xpose.msra.mxu0 0.0
    %261 = vmatprep.subr.mxu0 0.0
    %262 = vmatpush1.xpose.msra.mxu0 0.0
    %263 = vmatprep.subr.mxu0 0.0
    %264 = vmatpush1.xpose.msra.mxu0 0.0
    %265 = vmatprep.subr.mxu0 0.0
    %266 = vmatpush1.xpose.msra.mxu0 0.0
    %267 = vmatprep.subr.mxu0 0.0
    %268 = vmatpush1.xpose.msra.mxu0 0.0
    %269 = vmatprep.subr.mxu0 0.0
    %270 = vmatpush1.xpose.msra.mxu0 0.0
    %271 = vmatprep.subr.mxu0 0.0
    %272 = vmatpush1.xpose.msra.mxu0 0.0
    %273 = vmatprep.subr.mxu0 0.0
    %274 = vmatpush1.xpose.msra.mxu0 0.0
    %275 = vmatprep.subr.mxu0 0.0
    %276 = vmatpush1.xpose.msra.mxu0 0.0
    %277 = vmatprep.subr.mxu0 0.0
    %278 = vmatpush1.xpose.msra.mxu0 0.0
    %279 = vmatprep.subr.mxu0 0.0
    %280 = vmatpush1.xpose.msra.mxu0 0.0
    %281 = vmatprep.subr.mxu0 0.0
    %282 = vmatpush1.xpose.msra.mxu0 0.0
    %283 = vmatprep.subr.mxu0 0.0
    %284 = vmatpush1.xpose.msra.mxu0 0.0
    %285 = vmatprep.subr.mxu0 0.0
    %286 = vmatpush1.xpose.msra.mxu0 0.0
    %287 = vmatprep.subr.mxu0 0.0
    %288 = vmatpush1.xpose.msra.mxu0 0.0
    %289 = vmatprep.subr.mxu0 0.0
    %290 = vmatpush1.xpose.msra.mxu0 0.0
    %291 = vmatprep.subr.mxu0 0.0
    %292 = vmatpush1.xpose.msra.mxu0 0.0
    %293 = vmatprep.subr.mxu0 0.0
    %294 = vmatpush1.xpose.msra.mxu0 0.0
    %295 = vmatprep.subr.mxu0 0.0
    %296 = vmatpush1.xpose.msra.mxu0 0.0
    %297 = vmatprep.subr.mxu0 0.0
    %298 = vmatpush1.xpose.msra.mxu0 0.0
    %299 = vmatprep.subr.mxu0 0.0
    %300 = vmatpush1.xpose.msra.mxu0 0.0
    %301 = vmatprep.mubr.f32.mxu0 0.0
    %302 = vmatmul.mubr.f32.gmra.mrb[0].mxu0 %v233
    %v303 = vpop.f32.mrb[0].mxu0
    %v304 = vadd.f32 0.0, %v303
    %v305 = vpop.f32.mrb[0].mxu0
    %306 = vdwg.mxu0
    %307 = vrot.lane.b32.xlu0 %v180, 96
    %v308 = vpop.permute.xlu0 %307
    %v309 = vsel %vm232, %v180, 0
    %v311 = vsel %vm232, %v308, 0
    %313 = vmatprep.subr.mxu0 0.0
    %314 = vmatpush1.xpose.msra.mxu0 %v311
    %315 = vmatprep.subr.mxu0 0.0
    %316 = vmatpush1.xpose.msra.mxu0 0.0
    %317 = vmatprep.subr.mxu0 0.0
    %318 = vmatpush1.xpose.msra.mxu0 0.0
    %319 = vmatprep.subr.mxu0 0.0
    %320 = vmatpush1.xpose.msra.mxu0 0.0
    %321 = vmatprep.subr.mxu0 0.0
    %322 = vmatpush1.xpose.msra.mxu0 0.0
    %323 = vmatprep.subr.mxu0 0.0
    %324 = vmatpush1.xpose.msra.mxu0 0.0
    %325 = vmatprep.subr.mxu0 0.0
    %326 = vmatpush1.xpose.msra.mxu0 0.0
    %327 = vmatprep.subr.mxu0 0.0
    %328 = vmatpush1.xpose.msra.mxu0 0.0
    %329 = vmatprep.subr.mxu0 0.0
    %330 = vmatpush1.xpose.msra.mxu0 0.0
    %331 = vmatprep.subr.mxu0 0.0
    %332 = vmatpush1.xpose.msra.mxu0 0.0
    %333 = vmatprep.subr.mxu0 0.0
    %334 = vmatpush1.xpose.msra.mxu0 0.0
    %335 = vmatprep.subr.mxu0 0.0
    %336 = vmatpush1.xpose.msra.mxu0 0.0
    %337 = vmatprep.subr.mxu0 0.0
    %338 = vmatpush1.xpose.msra.mxu0 0.0
    %339 = vmatprep.subr.mxu0 0.0
    %340 = vmatpush1.xpose.msra.mxu0 0.0
    %341 = vmatprep.subr.mxu0 0.0
    %342 = vmatpush1.xpose.msra.mxu0 0.0
    %343 = vmatprep.subr.mxu0 0.0
    %344 = vmatpush1.xpose.msra.mxu0 0.0
    %345 = vmatprep.subr.mxu0 0.0
    %346 = vmatpush1.xpose.msra.mxu0 0.0
    %347 = vmatprep.subr.mxu0 0.0
    %348 = vmatpush1.xpose.msra.mxu0 0.0
    %349 = vmatprep.subr.mxu0 0.0
    %350 = vmatpush1.xpose.msra.mxu0 0.0
    %351 = vmatprep.subr.mxu0 0.0
    %352 = vmatpush1.xpose.msra.mxu0 0.0
    %353 = vmatprep.subr.mxu0 0.0
    %354 = vmatpush1.xpose.msra.mxu0 0.0
    %355 = vmatprep.subr.mxu0 0.0
    %356 = vmatpush1.xpose.msra.mxu0 0.0
    %357 = vmatprep.subr.mxu0 0.0
    %358 = vmatpush1.xpose.msra.mxu0 0.0
    %359 = vmatprep.subr.mxu0 0.0
    %360 = vmatpush1.xpose.msra.mxu0 0.0
    %361 = vmatprep.subr.mxu0 0.0
    %362 = vmatpush1.xpose.msra.mxu0 0.0
    %363 = vmatprep.subr.mxu0 0.0
    %364 = vmatpush1.xpose.msra.mxu0 0.0
    %365 = vmatprep.subr.mxu0 0.0
    %366 = vmatpush1.xpose.msra.mxu0 0.0
    %367 = vmatprep.subr.mxu0 0.0
    %368 = vmatpush1.xpose.msra.mxu0 0.0
    %369 = vmatprep.subr.mxu0 0.0
    %370 = vmatpush1.xpose.msra.mxu0 0.0
    %371 = vmatprep.subr.mxu0 0.0
    %372 = vmatpush1.xpose.msra.mxu0 0.0
    %373 = vmatprep.subr.mxu0 0.0
    %374 = vmatpush1.xpose.msra.mxu0 0.0
    %375 = vmatprep.subr.mxu0 0.0
    %376 = vmatpush1.xpose.msra.mxu0 0.0
    %377 = vmatprep.mubr.f32.mxu0 0.0
    %378 = vmatmul.mubr.f32.gmra.mrb[0].mxu0 %v309
    %v379 = vpop.f32.mrb[0].mxu0
    %v380 = vadd.f32 0.0, %v379
    %v381 = vpop.f32.mrb[0].mxu0
    %382 = vdwg.mxu0
    %383 = vrot.lane.b32.xlu0 %v182, 96
    %v384 = vpop.permute.xlu0 %383
    %v385 = vsel %vm232, %v182, 0
    %v387 = vsel %vm232, %v384, 0
    %389 = vmatprep.subr.mxu0 0.0
    %390 = vmatpush1.xpose.msra.mxu0 %v387
    %391 = vmatprep.subr.mxu0 0.0
    %392 = vmatpush1.xpose.msra.mxu0 0.0
    %393 = vmatprep.subr.mxu0 0.0
    %394 = vmatpush1.xpose.msra.mxu0 0.0
    %395 = vmatprep.subr.mxu0 0.0
    %396 = vmatpush1.xpose.msra.mxu0 0.0
    %397 = vmatprep.subr.mxu0 0.0
    %398 = vmatpush1.xpose.msra.mxu0 0.0
    %399 = vmatprep.subr.mxu0 0.0
    %400 = vmatpush1.xpose.msra.mxu0 0.0
    %401 = vmatprep.subr.mxu0 0.0
    %402 = vmatpush1.xpose.msra.mxu0 0.0
    %403 = vmatprep.subr.mxu0 0.0
    %404 = vmatpush1.xpose.msra.mxu0 0.0
    %405 = vmatprep.subr.mxu0 0.0
    %406 = vmatpush1.xpose.msra.mxu0 0.0
    %407 = vmatprep.subr.mxu0 0.0
    %408 = vmatpush1.xpose.msra.mxu0 0.0
    %409 = vmatprep.subr.mxu0 0.0
    %410 = vmatpush1.xpose.msra.mxu0 0.0
    %411 = vmatprep.subr.mxu0 0.0
    %412 = vmatpush1.xpose.msra.mxu0 0.0
    %413 = vmatprep.subr.mxu0 0.0
    %414 = vmatpush1.xpose.msra.mxu0 0.0
    %415 = vmatprep.subr.mxu0 0.0
    %416 = vmatpush1.xpose.msra.mxu0 0.0
    %417 = vmatprep.subr.mxu0 0.0
    %418 = vmatpush1.xpose.msra.mxu0 0.0
    %419 = vmatprep.subr.mxu0 0.0
    %420 = vmatpush1.xpose.msra.mxu0 0.0
    %421 = vmatprep.subr.mxu0 0.0
    %422 = vmatpush1.xpose.msra.mxu0 0.0
    %423 = vmatprep.subr.mxu0 0.0
    %424 = vmatpush1.xpose.msra.mxu0 0.0
    %425 = vmatprep.subr.mxu0 0.0
    %426 = vmatpush1.xpose.msra.mxu0 0.0
    %427 = vmatprep.subr.mxu0 0.0
    %428 = vmatpush1.xpose.msra.mxu0 0.0
    %429 = vmatprep.subr.mxu0 0.0
    %430 = vmatpush1.xpose.msra.mxu0 0.0
    %431 = vmatprep.subr.mxu0 0.0
    %432 = vmatpush1.xpose.msra.mxu0 0.0
    %433 = vmatprep.subr.mxu0 0.0
    %434 = vmatpush1.xpose.msra.mxu0 0.0
    %435 = vmatprep.subr.mxu0 0.0
    %436 = vmatpush1.xpose.msra.mxu0 0.0
    %437 = vmatprep.subr.mxu0 0.0
    %438 = vmatpush1.xpose.msra.mxu0 0.0
    %439 = vmatprep.subr.mxu0 0.0
    %440 = vmatpush1.xpose.msra.mxu0 0.0
    %441 = vmatprep.subr.mxu0 0.0
    %442 = vmatpush1.xpose.msra.mxu0 0.0
    %443 = vmatprep.subr.mxu0 0.0
    %444 = vmatpush1.xpose.msra.mxu0 0.0
    %445 = vmatprep.subr.mxu0 0.0
    %446 = vmatpush1.xpose.msra.mxu0 0.0
    %447 = vmatprep.subr.mxu0 0.0
    %448 = vmatpush1.xpose.msra.mxu0 0.0
    %449 = vmatprep.subr.mxu0 0.0
    %450 = vmatpush1.xpose.msra.mxu0 0.0
    %451 = vmatprep.subr.mxu0 0.0
    %452 = vmatpush1.xpose.msra.mxu0 0.0
    %453 = vmatprep.mubr.f32.mxu0 0.0
    %454 = vmatmul.mubr.f32.gmra.mrb[0].mxu0 %v385
    %v455 = vpop.f32.mrb[0].mxu0
    %v456 = vadd.f32 0.0, %v455
    %v457 = vpop.f32.mrb[0].mxu0
    %458 = vdwg.mxu0
    %459 = vrot.lane.b32.xlu0 %v184, 96
    %v460 = vpop.permute.xlu0 %459
    %v461 = vsel %vm232, %v184, 0
    %v463 = vsel %vm232, %v460, 0
    %465 = vmatprep.subr.mxu0 0.0
    %466 = vmatpush1.xpose.msra.mxu0 %v463
    %467 = vmatprep.subr.mxu0 0.0
    %468 = vmatpush1.xpose.msra.mxu0 0.0
    %469 = vmatprep.subr.mxu0 0.0
    %470 = vmatpush1.xpose.msra.mxu0 0.0
    %471 = vmatprep.subr.mxu0 0.0
    %472 = vmatpush1.xpose.msra.mxu0 0.0
    %473 = vmatprep.subr.mxu0 0.0
    %474 = vmatpush1.xpose.msra.mxu0 0.0
    %475 = vmatprep.subr.mxu0 0.0
    %476 = vmatpush1.xpose.msra.mxu0 0.0
    %477 = vmatprep.subr.mxu0 0.0
    %478 = vmatpush1.xpose.msra.mxu0 0.0
    %479 = vmatprep.subr.mxu0 0.0
    %480 = vmatpush1.xpose.msra.mxu0 0.0
    %481 = vmatprep.subr.mxu0 0.0
    %482 = vmatpush1.xpose.msra.mxu0 0.0
    %483 = vmatprep.subr.mxu0 0.0
    %484 = vmatpush1.xpose.msra.mxu0 0.0
    %485 = vmatprep.subr.mxu0 0.0
    %486 = vmatpush1.xpose.msra.mxu0 0.0
    %487 = vmatprep.subr.mxu0 0.0
    %488 = vmatpush1.xpose.msra.mxu0 0.0
    %489 = vmatprep.subr.mxu0 0.0
    %490 = vmatpush1.xpose.msra.mxu0 0.0
    %491 = vmatprep.subr.mxu0 0.0
    %492 = vmatpush1.xpose.msra.mxu0 0.0
    %493 = vmatprep.subr.mxu0 0.0
    %494 = vmatpush1.xpose.msra.mxu0 0.0
    %495 = vmatprep.subr.mxu0 0.0
    %496 = vmatpush1.xpose.msra.mxu0 0.0
    %497 = vmatprep.subr.mxu0 0.0
    %498 = vmatpush1.xpose.msra.mxu0 0.0
    %499 = vmatprep.subr.mxu0 0.0
    %500 = vmatpush1.xpose.msra.mxu0 0.0
    %501 = vmatprep.subr.mxu0 0.0
    %502 = vmatpush1.xpose.msra.mxu0 0.0
    %503 = vmatprep.subr.mxu0 0.0
    %504 = vmatpush1.xpose.msra.mxu0 0.0
    %505 = vmatprep.subr.mxu0 0.0
    %506 = vmatpush1.xpose.msra.mxu0 0.0
    %507 = vmatprep.subr.mxu0 0.0
    %508 = vmatpush1.xpose.msra.mxu0 0.0
    %509 = vmatprep.subr.mxu0 0.0
    %510 = vmatpush1.xpose.msra.mxu0 0.0
    %511 = vmatprep.subr.mxu0 0.0
    %512 = vmatpush1.xpose.msra.mxu0 0.0
    %513 = vmatprep.subr.mxu0 0.0
    %514 = vmatpush1.xpose.msra.mxu0 0.0
    %515 = vmatprep.subr.mxu0 0.0
    %516 = vmatpush1.xpose.msra.mxu0 0.0
    %517 = vmatprep.subr.mxu0 0.0
    %518 = vmatpush1.xpose.msra.mxu0 0.0
    %519 = vmatprep.subr.mxu0 0.0
    %520 = vmatpush1.xpose.msra.mxu0 0.0
    %521 = vmatprep.subr.mxu0 0.0
    %522 = vmatpush1.xpose.msra.mxu0 0.0
    %523 = vmatprep.subr.mxu0 0.0
    %524 = vmatpush1.xpose.msra.mxu0 0.0
    %525 = vmatprep.subr.mxu0 0.0
    %526 = vmatpush1.xpose.msra.mxu0 0.0
    %527 = vmatprep.subr.mxu0 0.0
    %528 = vmatpush1.xpose.msra.mxu0 0.0
    %529 = vmatprep.mubr.f32.mxu0 0.0
    %530 = vmatmul.mubr.f32.gmra.mrb[0].mxu0 %v461
    %v531 = vpop.f32.mrb[0].mxu0
    %v532 = vadd.f32 0.0, %v531
    %v533 = vpop.f32.mrb[0].mxu0
    %534 = vdwg.mxu0
    %535 = vrot.lane.b32.xlu0 %v163, 96
    %v536 = vpop.permute.xlu0 %535
    %v537 = vsel %vm232, %v163, 0
    %v539 = vsel %vm232, %v536, 0
    %541 = vmatprep.subr.mxu0 0.0
    %542 = vmatpush1.xpose.msra.mxu0 %v539
    %543 = vmatprep.subr.mxu0 0.0
    %544 = vmatpush1.xpose.msra.mxu0 0.0
    %545 = vmatprep.subr.mxu0 0.0
    %546 = vmatpush1.xpose.msra.mxu0 0.0
    %547 = vmatprep.subr.mxu0 0.0
    %548 = vmatpush1.xpose.msra.mxu0 0.0
    %549 = vmatprep.subr.mxu0 0.0
    %550 = vmatpush1.xpose.msra.mxu0 0.0
    %551 = vmatprep.subr.mxu0 0.0
    %552 = vmatpush1.xpose.msra.mxu0 0.0
    %553 = vmatprep.subr.mxu0 0.0
    %554 = vmatpush1.xpose.msra.mxu0 0.0
    %555 = vmatprep.subr.mxu0 0.0
    %556 = vmatpush1.xpose.msra.mxu0 0.0
    %557 = vmatprep.subr.mxu0 0.0
    %558 = vmatpush1.xpose.msra.mxu0 0.0
    %559 = vmatprep.subr.mxu0 0.0
    %560 = vmatpush1.xpose.msra.mxu0 0.0
    %561 = vmatprep.subr.mxu0 0.0
    %562 = vmatpush1.xpose.msra.mxu0 0.0
    %563 = vmatprep.subr.mxu0 0.0
    %564 = vmatpush1.xpose.msra.mxu0 0.0
    %565 = vmatprep.subr.mxu0 0.0
    %566 = vmatpush1.xpose.msra.mxu0 0.0
    %567 = vmatprep.subr.mxu0 0.0
    %568 = vmatpush1.xpose.msra.mxu0 0.0
    %569 = vmatprep.subr.mxu0 0.0
    %570 = vmatpush1.xpose.msra.mxu0 0.0
    %571 = vmatprep.subr.mxu0 0.0
    %572 = vmatpush1.xpose.msra.mxu0 0.0
    %573 = vmatprep.subr.mxu0 0.0
    %574 = vmatpush1.xpose.msra.mxu0 0.0
    %575 = vmatprep.subr.mxu0 0.0
    %576 = vmatpush1.xpose.msra.mxu0 0.0
    %577 = vmatprep.subr.mxu0 0.0
    %578 = vmatpush1.xpose.msra.mxu0 0.0
    %579 = vmatprep.subr.mxu0 0.0
    %580 = vmatpush1.xpose.msra.mxu0 0.0
    %581 = vmatprep.subr.mxu0 0.0
    %582 = vmatpush1.xpose.msra.mxu0 0.0
    %583 = vmatprep.subr.mxu0 0.0
    %584 = vmatpush1.xpose.msra.mxu0 0.0
    %585 = vmatprep.subr.mxu0 0.0
    %586 = vmatpush1.xpose.msra.mxu0 0.0
    %587 = vmatprep.subr.mxu0 0.0
    %588 = vmatpush1.xpose.msra.mxu0 0.0
    %589 = vmatprep.subr.mxu0 0.0
    %590 = vmatpush1.xpose.msra.mxu0 0.0
    %591 = vmatprep.subr.mxu0 0.0
    %592 = vmatpush1.xpose.msra.mxu0 0.0
    %593 = vmatprep.subr.mxu0 0.0
    %594 = vmatpush1.xpose.msra.mxu0 0.0
    %595 = vmatprep.subr.mxu0 0.0
    %596 = vmatpush1.xpose.msra.mxu0 0.0
    %597 = vmatprep.subr.mxu0 0.0
    %598 = vmatpush1.xpose.msra.mxu0 0.0
    %599 = vmatprep.subr.mxu0 0.0
    %600 = vmatpush1.xpose.msra.mxu0 0.0
    %601 = vmatprep.subr.mxu0 0.0
    %602 = vmatpush1.xpose.msra.mxu0 0.0
    %603 = vmatprep.subr.mxu0 0.0
    %604 = vmatpush1.xpose.msra.mxu0 0.0
    %605 = vmatprep.mubr.f32.mxu0 0.0
    %606 = vmatmul.mubr.f32.gmra.mrb[0].mxu0 %v537
    %v607 = vpop.f32.mrb[0].mxu0
    %v608 = vadd.f32 0.0, %v607
    %v609 = vpop.f32.mrb[0].mxu0
    %610 = vdwg.mxu0
    %611 = vrot.lane.b32.xlu0 %v187, 96
    %v612 = vpop.permute.xlu0 %611
    %v613 = vsel %vm232, %v187, 0
    %v615 = vsel %vm232, %v612, 0
    %617 = vmatprep.subr.mxu0 0.0
    %618 = vmatpush1.xpose.msra.mxu0 %v615
    %619 = vmatprep.subr.mxu0 0.0
    %620 = vmatpush1.xpose.msra.mxu0 0.0
    %621 = vmatprep.subr.mxu0 0.0
    %622 = vmatpush1.xpose.msra.mxu0 0.0
    %623 = vmatprep.subr.mxu0 0.0
    %624 = vmatpush1.xpose.msra.mxu0 0.0
    %625 = vmatprep.subr.mxu0 0.0
    %626 = vmatpush1.xpose.msra.mxu0 0.0
    %627 = vmatprep.subr.mxu0 0.0
    %628 = vmatpush1.xpose.msra.mxu0 0.0
    %629 = vmatprep.subr.mxu0 0.0
    %630 = vmatpush1.xpose.msra.mxu0 0.0
    %631 = vmatprep.subr.mxu0 0.0
    %632 = vmatpush1.xpose.msra.mxu0 0.0
    %633 = vmatprep.subr.mxu0 0.0
    %634 = vmatpush1.xpose.msra.mxu0 0.0
    %635 = vmatprep.subr.mxu0 0.0
    %636 = vmatpush1.xpose.msra.mxu0 0.0
    %637 = vmatprep.subr.mxu0 0.0
    %638 = vmatpush1.xpose.msra.mxu0 0.0
    %639 = vmatprep.subr.mxu0 0.0
    %640 = vmatpush1.xpose.msra.mxu0 0.0
    %641 = vmatprep.subr.mxu0 0.0
    %642 = vmatpush1.xpose.msra.mxu0 0.0
    %643 = vmatprep.subr.mxu0 0.0
    %644 = vmatpush1.xpose.msra.mxu0 0.0
    %645 = vmatprep.subr.mxu0 0.0
    %646 = vmatpush1.xpose.msra.mxu0 0.0
    %647 = vmatprep.subr.mxu0 0.0
    %648 = vmatpush1.xpose.msra.mxu0 0.0
    %649 = vmatprep.subr.mxu0 0.0
    %650 = vmatpush1.xpose.msra.mxu0 0.0
    %651 = vmatprep.subr.mxu0 0.0
    %652 = vmatpush1.xpose.msra.mxu0 0.0
    %653 = vmatprep.subr.mxu0 0.0
    %654 = vmatpush1.xpose.msra.mxu0 0.0
    %655 = vmatprep.subr.mxu0 0.0
    %656 = vmatpush1.xpose.msra.mxu0 0.0
    %657 = vmatprep.subr.mxu0 0.0
    %658 = vmatpush1.xpose.msra.mxu0 0.0
    %659 = vmatprep.subr.mxu0 0.0
    %660 = vmatpush1.xpose.msra.mxu0 0.0
    %661 = vmatprep.subr.mxu0 0.0
    %662 = vmatpush1.xpose.msra.mxu0 0.0
    %663 = vmatprep.subr.mxu0 0.0
    %664 = vmatpush1.xpose.msra.mxu0 0.0
    %665 = vmatprep.subr.mxu0 0.0
    %666 = vmatpush1.xpose.msra.mxu0 0.0
    %667 = vmatprep.subr.mxu0 0.0
    %668 = vmatpush1.xpose.msra.mxu0 0.0
    %669 = vmatprep.subr.mxu0 0.0
    %670 = vmatpush1.xpose.msra.mxu0 0.0
    %671 = vmatprep.subr.mxu0 0.0
    %672 = vmatpush1.xpose.msra.mxu0 0.0
    %673 = vmatprep.subr.mxu0 0.0
    %674 = vmatpush1.xpose.msra.mxu0 0.0
    %675 = vmatprep.subr.mxu0 0.0
    %676 = vmatpush1.xpose.msra.mxu0 0.0
    %677 = vmatprep.subr.mxu0 0.0
    %678 = vmatpush1.xpose.msra.mxu0 0.0
    %679 = vmatprep.subr.mxu0 0.0
    %680 = vmatpush1.xpose.msra.mxu0 0.0
    %681 = vmatprep.mubr.f32.mxu0 0.0
    %682 = vmatmul.mubr.f32.gmra.mrb[0].mxu0 %v613
    %v683 = vpop.f32.mrb[0].mxu0
    %v684 = vadd.f32 0.0, %v683
    %v685 = vpop.f32.mrb[0].mxu0
    %686 = vdwg.mxu0
    %687 = vrot.lane.b32.xlu0 %v189, 96
    %v688 = vpop.permute.xlu0 %687
    %v689 = vsel %vm232, %v189, 0
    %v691 = vsel %vm232, %v688, 0
    %693 = vmatprep.subr.mxu0 0.0
    %694 = vmatpush1.xpose.msra.mxu0 %v691
    %695 = vmatprep.subr.mxu0 0.0
    %696 = vmatpush1.xpose.msra.mxu0 0.0
    %697 = vmatprep.subr.mxu0 0.0
    %698 = vmatpush1.xpose.msra.mxu0 0.0
    %699 = vmatprep.subr.mxu0 0.0
    %700 = vmatpush1.xpose.msra.mxu0 0.0
    %701 = vmatprep.subr.mxu0 0.0
    %702 = vmatpush1.xpose.msra.mxu0 0.0
    %703 = vmatprep.subr.mxu0 0.0
    %704 = vmatpush1.xpose.msra.mxu0 0.0
    %705 = vmatprep.subr.mxu0 0.0
    %706 = vmatpush1.xpose.msra.mxu0 0.0
    %707 = vmatprep.subr.mxu0 0.0
    %708 = vmatpush1.xpose.msra.mxu0 0.0
    %709 = vmatprep.subr.mxu0 0.0
    %710 = vmatpush1.xpose.msra.mxu0 0.0
    %711 = vmatprep.subr.mxu0 0.0
    %712 = vmatpush1.xpose.msra.mxu0 0.0
    %713 = vmatprep.subr.mxu0 0.0
    %714 = vmatpush1.xpose.msra.mxu0 0.0
    %715 = vmatprep.subr.mxu0 0.0
    %716 = vmatpush1.xpose.msra.mxu0 0.0
    %717 = vmatprep.subr.mxu0 0.0
    %718 = vmatpush1.xpose.msra.mxu0 0.0
    %719 = vmatprep.subr.mxu0 0.0
    %720 = vmatpush1.xpose.msra.mxu0 0.0
    %721 = vmatprep.subr.mxu0 0.0
    %722 = vmatpush1.xpose.msra.mxu0 0.0
    %723 = vmatprep.subr.mxu0 0.0
    %724 = vmatpush1.xpose.msra.mxu0 0.0
    %725 = vmatprep.subr.mxu0 0.0
    %726 = vmatpush1.xpose.msra.mxu0 0.0
    %727 = vmatprep.subr.mxu0 0.0
    %728 = vmatpush1.xpose.msra.mxu0 0.0
    %729 = vmatprep.subr.mxu0 0.0
    %730 = vmatpush1.xpose.msra.mxu0 0.0
    %731 = vmatprep.subr.mxu0 0.0
    %732 = vmatpush1.xpose.msra.mxu0 0.0
    %733 = vmatprep.subr.mxu0 0.0
    %734 = vmatpush1.xpose.msra.mxu0 0.0
    %735 = vmatprep.subr.mxu0 0.0
    %736 = vmatpush1.xpose.msra.mxu0 0.0
    %737 = vmatprep.subr.mxu0 0.0
    %738 = vmatpush1.xpose.msra.mxu0 0.0
    %739 = vmatprep.subr.mxu0 0.0
    %740 = vmatpush1.xpose.msra.mxu0 0.0
    %741 = vmatprep.subr.mxu0 0.0
    %742 = vmatpush1.xpose.msra.mxu0 0.0
    %743 = vmatprep.subr.mxu0 0.0
    %744 = vmatpush1.xpose.msra.mxu0 0.0
    %745 = vmatprep.subr.mxu0 0.0
    %746 = vmatpush1.xpose.msra.mxu0 0.0
    %747 = vmatprep.subr.mxu0 0.0
    %748 = vmatpush1.xpose.msra.mxu0 0.0
    %749 = vmatprep.subr.mxu0 0.0
    %750 = vmatpush1.xpose.msra.mxu0 0.0
    %751 = vmatprep.subr.mxu0 0.0
    %752 = vmatpush1.xpose.msra.mxu0 0.0
    %753 = vmatprep.subr.mxu0 0.0
    %754 = vmatpush1.xpose.msra.mxu0 0.0
    %755 = vmatprep.subr.mxu0 0.0
    %756 = vmatpush1.xpose.msra.mxu0 0.0
    %757 = vmatprep.mubr.f32.mxu0 0.0
    %758 = vmatmul.mubr.f32.gmra.mrb[0].mxu0 %v689
    %v759 = vpop.f32.mrb[0].mxu0
    %v760 = vadd.f32 0.0, %v759
    %v761 = vpop.f32.mrb[0].mxu0
    %762 = vdwg.mxu0
    %763 = vrot.lane.b32.xlu0 %v191, 96
    %v764 = vpop.permute.xlu0 %763
    %v765 = vsel %vm232, %v191, 0
    %v767 = vsel %vm232, %v764, 0
    %769 = vmatprep.subr.mxu0 0.0
    %770 = vmatpush1.xpose.msra.mxu0 %v767
    %771 = vmatprep.subr.mxu0 0.0
    %772 = vmatpush1.xpose.msra.mxu0 0.0
    %773 = vmatprep.subr.mxu0 0.0
    %774 = vmatpush1.xpose.msra.mxu0 0.0
    %775 = vmatprep.subr.mxu0 0.0
    %776 = vmatpush1.xpose.msra.mxu0 0.0
    %777 = vmatprep.subr.mxu0 0.0
    %778 = vmatpush1.xpose.msra.mxu0 0.0
    %779 = vmatprep.subr.mxu0 0.0
    %780 = vmatpush1.xpose.msra.mxu0 0.0
    %781 = vmatprep.subr.mxu0 0.0
    %782 = vmatpush1.xpose.msra.mxu0 0.0
    %783 = vmatprep.subr.mxu0 0.0
    %784 = vmatpush1.xpose.msra.mxu0 0.0
    %785 = vmatprep.subr.mxu0 0.0
    %786 = vmatpush1.xpose.msra.mxu0 0.0
    %787 = vmatprep.subr.mxu0 0.0
    %788 = vmatpush1.xpose.msra.mxu0 0.0
    %789 = vmatprep.subr.mxu0 0.0
    %790 = vmatpush1.xpose.msra.mxu0 0.0
    %791 = vmatprep.subr.mxu0 0.0
    %792 = vmatpush1.xpose.msra.mxu0 0.0
    %793 = vmatprep.subr.mxu0 0.0
    %794 = vmatpush1.xpose.msra.mxu0 0.0
    %795 = vmatprep.subr.mxu0 0.0
    %796 = vmatpush1.xpose.msra.mxu0 0.0
    %797 = vmatprep.subr.mxu0 0.0
    %798 = vmatpush1.xpose.msra.mxu0 0.0
    %799 = vmatprep.subr.mxu0 0.0
    %800 = vmatpush1.xpose.msra.mxu0 0.0
    %801 = vmatprep.subr.mxu0 0.0
    %802 = vmatpush1.xpose.msra.mxu0 0.0
    %803 = vmatprep.subr.mxu0 0.0
    %804 = vmatpush1.xpose.msra.mxu0 0.0
    %805 = vmatprep.subr.mxu0 0.0
    %806 = vmatpush1.xpose.msra.mxu0 0.0
    %807 = vmatprep.subr.mxu0 0.0
    %808 = vmatpush1.xpose.msra.mxu0 0.0
    %809 = vmatprep.subr.mxu0 0.0
    %810 = vmatpush1.xpose.msra.mxu0 0.0
    %811 = vmatprep.subr.mxu0 0.0
    %812 = vmatpush1.xpose.msra.mxu0 0.0
    %813 = vmatprep.subr.mxu0 0.0
    %814 = vmatpush1.xpose.msra.mxu0 0.0
    %815 = vmatprep.subr.mxu0 0.0
    %816 = vmatpush1.xpose.msra.mxu0 0.0
    %817 = vmatprep.subr.mxu0 0.0
    %818 = vmatpush1.xpose.msra.mxu0 0.0
    %819 = vmatprep.subr.mxu0 0.0
    %820 = vmatpush1.xpose.msra.mxu0 0.0
    %821 = vmatprep.subr.mxu0 0.0
    %822 = vmatpush1.xpose.msra.mxu0 0.0
    %823 = vmatprep.subr.mxu0 0.0
    %824 = vmatpush1.xpose.msra.mxu0 0.0
    %825 = vmatprep.subr.mxu0 0.0
    %826 = vmatpush1.xpose.msra.mxu0 0.0
    %827 = vmatprep.subr.mxu0 0.0
    %828 = vmatpush1.xpose.msra.mxu0 0.0
    %829 = vmatprep.subr.mxu0 0.0
    %830 = vmatpush1.xpose.msra.mxu0 0.0
    %831 = vmatprep.subr.mxu0 0.0
    %832 = vmatpush1.xpose.msra.mxu0 0.0
    %833 = vmatprep.mubr.f32.mxu0 0.0
    %834 = vmatmul.mubr.f32.gmra.mrb[0].mxu0 %v765
    %v835 = vpop.f32.mrb[0].mxu0
    %v836 = vadd.f32 0.0, %v835
    %v837 = vpop.f32.mrb[0].mxu0
    %838 = vdwg.mxu0
    %v839 = vmul.f32 %v304, 0.35355338
    %v840 = vmul.f32 %v380, 0.35355338
    %v841 = vmul.f32 %v456, 0.35355338
    %v842 = vmul.f32 %v532, 0.35355338
    %v843 = vmul.f32 %v608, 0.35355338
    %v844 = vmul.f32 %v684, 0.35355338
    %v845 = vmul.f32 %v760, 0.35355338
    %v846 = vmul.f32 %v836, 0.35355338
    %v847 = vlaneseq
    %v848 = vshrl.u32 %v847, 7
    %v849 = vadd.s32 %v848, 8
    %v850 = vadd.s32 %v848, 16
    %v851 = vadd.s32 %v848, 24
    %v852 = vadd.s32 %v848, 32
    %v853 = vadd.s32 %v848, 40
    %v854 = vadd.s32 %v848, 48
    %v855 = vadd.s32 %v848, 56
    %vm856 = vcmp.lt.s32.totalorder %v848, 0
    %v857 = vsub.s32 0, %v848
    %v858 = vsel %vm856, %v857, %v848
    %v859 = vshrl.u32 %v858, 3
    %v860 = vand.u32 %v858, 7
    %v861 = vsub.s32 0, %v860
    %v862 = vsel %vm856, %v861, %v860
    %vm863 = vcmp.lt.s32.totalorder %v849, 0
    %v864 = vsub.s32 0, %v849
    %v865 = vsel %vm863, %v864, %v849
    %v866 = vshrl.u32 %v865, 3
    %v867 = vand.u32 %v865, 7
    %v868 = vsub.s32 0, %v867
    %v869 = vsel %vm863, %v868, %v867
    %vm870 = vcmp.lt.s32.totalorder %v850, 0
    %v871 = vsub.s32 0, %v850
    %v872 = vsel %vm870, %v871, %v850
    %v873 = vshrl.u32 %v872, 3
    %v874 = vand.u32 %v872, 7
    %v875 = vsub.s32 0, %v874
    %v876 = vsel %vm870, %v875, %v874
    %vm877 = vcmp.lt.s32.totalorder %v851, 0
    %v878 = vsub.s32 0, %v851
    %v879 = vsel %vm877, %v878, %v851
    %v880 = vshrl.u32 %v879, 3
    %v881 = vand.u32 %v879, 7
    %v882 = vsub.s32 0, %v881
    %v883 = vsel %vm877, %v882, %v881
    %vm884 = vcmp.lt.s32.totalorder %v852, 0
    %v885 = vsub.s32 0, %v852
    %v886 = vsel %vm884, %v885, %v852
    %v887 = vshrl.u32 %v886, 3
    %v888 = vand.u32 %v886, 7
    %v889 = vsub.s32 0, %v888
    %v890 = vsel %vm884, %v889, %v888
    %vm891 = vcmp.lt.s32.totalorder %v853, 0
    %v892 = vsub.s32 0, %v853
    %v893 = vsel %vm891, %v892, %v853
    %v894 = vshrl.u32 %v893, 3
    %v895 = vand.u32 %v893, 7
    %v896 = vsub.s32 0, %v895
    %v897 = vsel %vm891, %v896, %v895
    %vm898 = vcmp.lt.s32.totalorder %v854, 0
    %v899 = vsub.s32 0, %v854
    %v900 = vsel %vm898, %v899, %v854
    %v901 = vshrl.u32 %v900, 3
    %v902 = vand.u32 %v900, 7
    %v903 = vsub.s32 0, %v902
    %v904 = vsel %vm898, %v903, %v902
    %vm905 = vcmp.lt.s32.totalorder %v855, 0
    %v906 = vsub.s32 0, %v855
    %v907 = vsel %vm905, %v906, %v855
    %v908 = vshrl.u32 %v907, 3
    %v909 = vand.u32 %v907, 7
    %v910 = vsub.s32 0, %v909
    %v911 = vsel %vm905, %v910, %v909
    %vm912 = vcmp.ne.s32.totalorder %v862, 0
    %vm913 = vcmp.ne.s32.totalorder %v869, 0
    %vm914 = vcmp.ne.s32.totalorder %v876, 0
    %vm915 = vcmp.ne.s32.totalorder %v883, 0
    %vm916 = vcmp.ne.s32.totalorder %v890, 0
    %vm917 = vcmp.ne.s32.totalorder %v897, 0
    %vm918 = vcmp.ne.s32.totalorder %v904, 0
    %vm919 = vcmp.ne.s32.totalorder %v911, 0
    %vm920 = vcmp.lt.s32.totalorder %v862, 0
    %vm921 = vcmp.lt.s32.totalorder %v869, 0
    %vm922 = vcmp.lt.s32.totalorder %v876, 0
    %vm923 = vcmp.lt.s32.totalorder %v883, 0
    %vm924 = vcmp.lt.s32.totalorder %v890, 0
    %vm925 = vcmp.lt.s32.totalorder %v897, 0
    %vm926 = vcmp.lt.s32.totalorder %v904, 0
    %vm927 = vcmp.lt.s32.totalorder %v911, 0
    %vm928 = vmand %vm920, %vm912
    %vm929 = vmand %vm921, %vm913
    %vm930 = vmand %vm922, %vm914
    %vm931 = vmand %vm923, %vm915
    %vm932 = vmand %vm924, %vm916
    %vm933 = vmand %vm925, %vm917
    %vm934 = vmand %vm926, %vm918
    %vm935 = vmand %vm927, %vm919
    %v936 = vadd.s32 %v862, 8
    %v937 = vadd.s32 %v869, 8
    %v938 = vadd.s32 %v876, 8
    %v939 = vadd.s32 %v883, 8
    %v940 = vadd.s32 %v890, 8
    %v941 = vadd.s32 %v897, 8
    %v942 = vadd.s32 %v904, 8
    %v943 = vadd.s32 %v911, 8
    %v944 = vsel %vm928, %v936, %v862
    %v945 = vsel %vm929, %v937, %v869
    %v946 = vsel %vm930, %v938, %v876
    %v947 = vsel %vm931, %v939, %v883
    %v948 = vsel %vm932, %v940, %v890
    %v949 = vsel %vm933, %v941, %v897
    %v950 = vsel %vm934, %v942, %v904
    %v951 = vsel %vm935, %v943, %v911
    %v952 = vlaneseq
    %v953 = vand.u32 %v952, 127
    %vm954 = vcmp.le.s32.totalorder %v953, %v944
    %vm955 = vcmp.le.s32.totalorder %v953, %v945
    %vm956 = vcmp.le.s32.totalorder %v953, %v946
    %vm957 = vcmp.le.s32.totalorder %v953, %v947
    %vm958 = vcmp.le.s32.totalorder %v953, %v948
    %vm959 = vcmp.le.s32.totalorder %v953, %v949
    %vm960 = vcmp.le.s32.totalorder %v953, %v950
    %vm961 = vcmp.le.s32.totalorder %v953, %v951
    %v962 = vsel %vm954, %v839, -1e+30
    %v963 = vsel %vm955, %v840, -1e+30
    %v964 = vsel %vm956, %v841, -1e+30
    %v965 = vsel %vm957, %v842, -1e+30
    %v966 = vsel %vm958, %v843, -1e+30
    %v967 = vsel %vm959, %v844, -1e+30
    %v968 = vsel %vm960, %v845, -1e+30
    %v969 = vsel %vm961, %v846, -1e+30
    %v970 = vsel %vm232, %v962, -inf
    %971 = vmax.xlane.f32.xlu0 %v970
    %v972 = vpop.xlane.xlu0 %971
    %v973 = vsel %vm232, %v963, -inf
    %974 = vmax.xlane.f32.xlu0 %v973
    %v975 = vpop.xlane.xlu0 %974
    %v976 = vsel %vm232, %v964, -inf
    %977 = vmax.xlane.f32.xlu0 %v976
    %v978 = vpop.xlane.xlu0 %977
    %v979 = vsel %vm232, %v965, -inf
    %980 = vmax.xlane.f32.xlu0 %v979
    %v981 = vpop.xlane.xlu0 %980
    %v982 = vsel %vm232, %v966, -inf
    %983 = vmax.xlane.f32.xlu0 %v982
    %v984 = vpop.xlane.xlu0 %983
    %v985 = vsel %vm232, %v967, -inf
    %986 = vmax.xlane.f32.xlu0 %v985
    %v987 = vpop.xlane.xlu0 %986
    %v988 = vsel %vm232, %v968, -inf
    %989 = vmax.xlane.f32.xlu0 %v988
    %v990 = vpop.xlane.xlu0 %989
    %v991 = vsel %vm232, %v969, -inf
    %992 = vmax.xlane.f32.xlu0 %v991
    %v993 = vpop.xlane.xlu0 %992
    %v994 = vsub.f32 %v962, %v972
    %v995 = vsub.f32 %v963, %v975
    %v996 = vsub.f32 %v964, %v978
    %v997 = vsub.f32 %v965, %v981
    %v998 = vsub.f32 %v966, %v984
    %v999 = vsub.f32 %v967, %v987
    %v1000 = vsub.f32 %v968, %v990
    %v1001 = vsub.f32 %v969, %v993
    %v1002 = vmul.f32 %v994, 1.442695
    %v1003 = vpow.pop %v1002
    %v1004 = vmul.f32 %v995, 1.442695
    %v1005 = vpow.pop %v1004
    %v1006 = vmul.f32 %v996, 1.442695
    %v1007 = vpow.pop %v1006
    %v1008 = vmul.f32 %v997, 1.442695
    %v1009 = vpow.pop %v1008
    %v1010 = vmul.f32 %v998, 1.442695
    %v1011 = vpow.pop %v1010
    %v1012 = vmul.f32 %v999, 1.442695
    %v1013 = vpow.pop %v1012
    %v1014 = vmul.f32 %v1000, 1.442695
    %v1015 = vpow.pop %v1014
    %v1016 = vmul.f32 %v1001, 1.442695
    %v1017 = vpow.pop %v1016
    %v1018 = vsel %vm232, %v1003, 0.0
    %1019 = vadd.xlane.f32.xlu0 %v1018
    %v1020 = vpop.xlane.xlu0 %1019
    %v1021 = vsel %vm232, %v1005, 0.0
    %1022 = vadd.xlane.f32.xlu0 %v1021
    %v1023 = vpop.xlane.xlu0 %1022
    %v1024 = vsel %vm232, %v1007, 0.0
    %1025 = vadd.xlane.f32.xlu0 %v1024
    %v1026 = vpop.xlane.xlu0 %1025
    %v1027 = vsel %vm232, %v1009, 0.0
    %1028 = vadd.xlane.f32.xlu0 %v1027
    %v1029 = vpop.xlane.xlu0 %1028
    %v1030 = vsel %vm232, %v1011, 0.0
    %1031 = vadd.xlane.f32.xlu0 %v1030
    %v1032 = vpop.xlane.xlu0 %1031
    %v1033 = vsel %vm232, %v1013, 0.0
    %1034 = vadd.xlane.f32.xlu0 %v1033
    %v1035 = vpop.xlane.xlu0 %1034
    %v1036 = vsel %vm232, %v1015, 0.0
    %1037 = vadd.xlane.f32.xlu0 %v1036
    %v1038 = vpop.xlane.xlu0 %1037
    %v1039 = vsel %vm232, %v1017, 0.0
    %1040 = vadd.xlane.f32.xlu0 %v1039
    %v1041 = vpop.xlane.xlu0 %1040
    %v1042 = vrcp.pop %v1020
    %v1043 = vmul.f32 %v1003, %v1042
    %v1044 = vrcp.pop %v1023
    %v1045 = vmul.f32 %v1005, %v1044
    %v1046 = vrcp.pop %v1026
    %v1047 = vmul.f32 %v1007, %v1046
    %v1048 = vrcp.pop %v1029
    %v1049 = vmul.f32 %v1009, %v1048
    %v1050 = vrcp.pop %v1032
    %v1051 = vmul.f32 %v1011, %v1050
    %v1052 = vrcp.pop %v1035
    %v1053 = vmul.f32 %v1013, %v1052
    %v1054 = vrcp.pop %v1038
    %v1055 = vmul.f32 %v1015, %v1054
    %v1056 = vrcp.pop %v1041
    %v1057 = vmul.f32 %v1017, %v1056
    %v1059 = vsel %vm232, %v1043, 0
    %v1062 = vsel %vm232, %v1045, 0
    %v1065 = vsel %vm232, %v1047, 0
    %v1068 = vsel %vm232, %v1049, 0
    %v1071 = vsel %vm232, %v1051, 0
    %v1074 = vsel %vm232, %v1053, 0
    %v1077 = vsel %vm232, %v1055, 0
    %v1080 = vsel %vm232, %v1057, 0
    %1082 = vmatprep.subr.mxu0 0.0
    %1083 = vmatpush1.msra.mxu0 %v26
    %1084 = vmatprep.subr.mxu0 0.0
    %1085 = vmatpush1.msra.mxu0 0.0
    %1086 = vmatprep.subr.mxu0 0.0
    %1087 = vmatpush1.msra.mxu0 0.0
    %1088 = vmatprep.subr.mxu0 0.0
    %1089 = vmatpush1.msra.mxu0 0.0
    %1090 = vmatprep.subr.mxu0 0.0
    %1091 = vmatpush1.msra.mxu0 0.0
    %1092 = vmatprep.subr.mxu0 0.0
    %1093 = vmatpush1.msra.mxu0 0.0
    %1094 = vmatprep.subr.mxu0 0.0
    %1095 = vmatpush1.msra.mxu0 0.0
    %1096 = vmatprep.subr.mxu0 0.0
    %1097 = vmatpush1.msra.mxu0 0.0
    %1098 = vmatprep.subr.mxu0 0.0
    %1099 = vmatpush1.msra.mxu0 0.0
    %1100 = vmatprep.subr.mxu0 0.0
    %1101 = vmatpush1.msra.mxu0 0.0
    %1102 = vmatprep.subr.mxu0 0.0
    %1103 = vmatpush1.msra.mxu0 0.0
    %1104 = vmatprep.subr.mxu0 0.0
    %1105 = vmatpush1.msra.mxu0 0.0
    %1106 = vmatprep.subr.mxu0 0.0
    %1107 = vmatpush1.msra.mxu0 0.0
    %1108 = vmatprep.subr.mxu0 0.0
    %1109 = vmatpush1.msra.mxu0 0.0
    %1110 = vmatprep.subr.mxu0 0.0
    %1111 = vmatpush1.msra.mxu0 0.0
    %1112 = vmatprep.subr.mxu0 0.0
    %1113 = vmatpush1.msra.mxu0 0.0
    %1114 = vmatprep.subr.mxu0 0.0
    %1115 = vmatpush1.msra.mxu0 0.0
    %1116 = vmatprep.subr.mxu0 0.0
    %1117 = vmatpush1.msra.mxu0 0.0
    %1118 = vmatprep.subr.mxu0 0.0
    %1119 = vmatpush1.msra.mxu0 0.0
    %1120 = vmatprep.subr.mxu0 0.0
    %1121 = vmatpush1.msra.mxu0 0.0
    %1122 = vmatprep.subr.mxu0 0.0
    %1123 = vmatpush1.msra.mxu0 0.0
    %1124 = vmatprep.subr.mxu0 0.0
    %1125 = vmatpush1.msra.mxu0 0.0
    %1126 = vmatprep.subr.mxu0 0.0
    %1127 = vmatpush1.msra.mxu0 0.0
    %1128 = vmatprep.subr.mxu0 0.0
    %1129 = vmatpush1.msra.mxu0 0.0
    %1130 = vmatprep.subr.mxu0 0.0
    %1131 = vmatpush1.msra.mxu0 0.0
    %1132 = vmatprep.subr.mxu0 0.0
    %1133 = vmatpush1.msra.mxu0 0.0
    %1134 = vmatprep.subr.mxu0 0.0
    %1135 = vmatpush1.msra.mxu0 0.0
    %1136 = vmatprep.subr.mxu0 0.0
    %1137 = vmatpush1.msra.mxu0 0.0
    %1138 = vmatprep.subr.mxu0 0.0
    %1139 = vmatpush1.msra.mxu0 0.0
    %1140 = vmatprep.subr.mxu0 0.0
    %1141 = vmatpush1.msra.mxu0 0.0
    %1142 = vmatprep.subr.mxu0 0.0
    %1143 = vmatpush1.msra.mxu0 0.0
    %1144 = vmatprep.subr.mxu0 0.0
    %1145 = vmatpush1.msra.mxu0 0.0
    %1146 = vmatprep.mubr.f32.mxu0 0.0
    %1147 = vmatmul.mubr.f32.gmra.mrb[0].mxu0 %v1059
    %v1148 = vpop.f32.mrb[0].mxu0
    %v1149 = vadd.f32 0.0, %v1148
    %v1150 = vpop.f32.mrb[0].mxu0
    %1151 = vmatprep.mubr.f32.mxu0 0.0
    %1152 = vmatmul.mubr.f32.gmra.mrb[0].mxu0 %v1062
    %v1153 = vpop.f32.mrb[0].mxu0
    %v1154 = vadd.f32 0.0, %v1153
    %v1155 = vpop.f32.mrb[0].mxu0
    %1156 = vmatprep.mubr.f32.mxu0 0.0
    %1157 = vmatmul.mubr.f32.gmra.mrb[0].mxu0 %v1065
    %v1158 = vpop.f32.mrb[0].mxu0
    %v1159 = vadd.f32 0.0, %v1158
    %v1160 = vpop.f32.mrb[0].mxu0
    %1161 = vmatprep.mubr.f32.mxu0 0.0
    %1162 = vmatmul.mubr.f32.gmra.mrb[0].mxu0 %v1068
    %v1163 = vpop.f32.mrb[0].mxu0
    %v1164 = vadd.f32 0.0, %v1163
    %v1165 = vpop.f32.mrb[0].mxu0
    %1166 = vmatprep.mubr.f32.mxu0 0.0
    %1167 = vmatmul.mubr.f32.gmra.mrb[0].mxu0 %v1071
    %v1168 = vpop.f32.mrb[0].mxu0
    %v1169 = vadd.f32 0.0, %v1168
    %v1170 = vpop.f32.mrb[0].mxu0
    %1171 = vmatprep.mubr.f32.mxu0 0.0
    %1172 = vmatmul.mubr.f32.gmra.mrb[0].mxu0 %v1074
    %v1173 = vpop.f32.mrb[0].mxu0
    %v1174 = vadd.f32 0.0, %v1173
    %v1175 = vpop.f32.mrb[0].mxu0
    %1176 = vmatprep.mubr.f32.mxu0 0.0
    %1177 = vmatmul.mubr.f32.gmra.mrb[0].mxu0 %v1077
    %v1178 = vpop.f32.mrb[0].mxu0
    %v1179 = vadd.f32 0.0, %v1178
    %v1180 = vpop.f32.mrb[0].mxu0
    %1181 = vmatprep.mubr.f32.mxu0 0.0
    %1182 = vmatmul.mubr.f32.gmra.mrb[0].mxu0 %v1080
    %v1183 = vpop.f32.mrb[0].mxu0
    %v1184 = vadd.f32 0.0, %v1183
    %v1185 = vpop.f32.mrb[0].mxu0
    %1186 = vdwg.mxu0
    %vm1187 = vcmask 843520
    %v1188 = vsel %vm1187, %v158, -inf
    %1189 = vmax.xlane.f32.xlu0 %v1188
    %v1190 = vpop.xlane.xlu0 %1189
    %v1191 = vsel %vm1187, %v193, -inf
    %1192 = vmax.xlane.f32.xlu0 %v1191
    %v1193 = vpop.xlane.xlu0 %1192
    %v1194 = vsel %vm1187, %v196, -inf
    %1195 = vmax.xlane.f32.xlu0 %v1194
    %v1196 = vpop.xlane.xlu0 %1195
    %v1197 = vsel %vm1187, %v199, -inf
    %1198 = vmax.xlane.f32.xlu0 %v1197
    %v1199 = vpop.xlane.xlu0 %1198
    %v1200 = vsel %vm1187, %v163, -inf
    %1201 = vmax.xlane.f32.xlu0 %v1200
    %v1202 = vpop.xlane.xlu0 %1201
    %v1203 = vsel %vm1187, %v202, -inf
    %1204 = vmax.xlane.f32.xlu0 %v1203
    %v1205 = vpop.xlane.xlu0 %1204
    %v1206 = vsel %vm1187, %v205, -inf
    %1207 = vmax.xlane.f32.xlu0 %v1206
    %v1208 = vpop.xlane.xlu0 %1207
    %v1209 = vsel %vm1187, %v208, -inf
    %1210 = vmax.xlane.f32.xlu0 %v1209
    %v1211 = vpop.xlane.xlu0 %1210
    %v1212 = vsub.f32 %v158, %v1190
    %v1213 = vsub.f32 %v193, %v1193
    %v1214 = vsub.f32 %v196, %v1196
    %v1215 = vsub.f32 %v199, %v1199
    %v1216 = vsub.f32 %v163, %v1202
    %v1217 = vsub.f32 %v202, %v1205
    %v1218 = vsub.f32 %v205, %v1208
    %v1219 = vsub.f32 %v208, %v1211
    %v1220 = vmul.f32 %v1212, 1.442695
    %v1221 = vpow.pop %v1220
    %v1222 = vmul.f32 %v1213, 1.442695
    %v1223 = vpow.pop %v1222
    %v1224 = vmul.f32 %v1214, 1.442695
    %v1225 = vpow.pop %v1224
    %v1226 = vmul.f32 %v1215, 1.442695
    %v1227 = vpow.pop %v1226
    %v1228 = vmul.f32 %v1216, 1.442695
    %v1229 = vpow.pop %v1228
    %v1230 = vmul.f32 %v1217, 1.442695
    %v1231 = vpow.pop %v1230
    %v1232 = vmul.f32 %v1218, 1.442695
    %v1233 = vpow.pop %v1232
    %v1234 = vmul.f32 %v1219, 1.442695
    %v1235 = vpow.pop %v1234
    %1244 = vrot.lane.b32.xlu0 %v1221, 32
    %v1245 = vpop.permute.xlu0 %1244
    %1246 = vrot.lane.b32.xlu0 %v1223, 32
    %v1247 = vpop.permute.xlu0 %1246
    %1248 = vrot.lane.b32.xlu0 %v1225, 32
    %v1249 = vpop.permute.xlu0 %1248
    %1250 = vrot.lane.b32.xlu0 %v1227, 32
    %v1251 = vpop.permute.xlu0 %1250
    %1252 = vrot.lane.b32.xlu0 %v1229, 32
    %v1253 = vpop.permute.xlu0 %1252
    %1254 = vrot.lane.b32.xlu0 %v1231, 32
    %v1255 = vpop.permute.xlu0 %1254
    %1256 = vrot.lane.b32.xlu0 %v1233, 32
    %v1257 = vpop.permute.xlu0 %1256
    %1258 = vrot.lane.b32.xlu0 %v1235, 32
    %v1259 = vpop.permute.xlu0 %1258
    %vm1268 = vcmask 56320
    %v1269 = vsel %vm1268, %v1245, 0.0
    %1270 = vadd.xlane.f32.xlu0 %v1269
    %v1271 = vpop.xlane.xlu0 %1270
    %v1272 = vsel %vm1268, %v1247, 0.0
    %1273 = vadd.xlane.f32.xlu0 %v1272
    %v1274 = vpop.xlane.xlu0 %1273
    %v1275 = vsel %vm1268, %v1249, 0.0
    %1276 = vadd.xlane.f32.xlu0 %v1275
    %v1277 = vpop.xlane.xlu0 %1276
    %v1278 = vsel %vm1268, %v1251, 0.0
    %1279 = vadd.xlane.f32.xlu0 %v1278
    %v1280 = vpop.xlane.xlu0 %1279
    %v1281 = vsel %vm1268, %v1253, 0.0
    %1282 = vadd.xlane.f32.xlu0 %v1281
    %v1283 = vpop.xlane.xlu0 %1282
    %v1284 = vsel %vm1268, %v1255, 0.0
    %1285 = vadd.xlane.f32.xlu0 %v1284
    %v1286 = vpop.xlane.xlu0 %1285
    %v1287 = vsel %vm1268, %v1257, 0.0
    %1288 = vadd.xlane.f32.xlu0 %v1287
    %v1289 = vpop.xlane.xlu0 %1288
    %v1290 = vsel %vm1268, %v1259, 0.0
    %1291 = vadd.xlane.f32.xlu0 %v1290
    %v1292 = vpop.xlane.xlu0 %1291
    %v1293 = vrcp.pop %v1271
    %v1294 = vmul.f32 %v1221, %v1293
    %v1295 = vrcp.pop %v1274
    %v1296 = vmul.f32 %v1223, %v1295
    %v1297 = vrcp.pop %v1277
    %v1298 = vmul.f32 %v1225, %v1297
    %v1299 = vrcp.pop %v1280
    %v1300 = vmul.f32 %v1227, %v1299
    %v1301 = vrcp.pop %v1283
    %v1302 = vmul.f32 %v1229, %v1301
    %v1303 = vrcp.pop %v1286
    %v1304 = vmul.f32 %v1231, %v1303
    %v1305 = vrcp.pop %v1289
    %v1306 = vmul.f32 %v1233, %v1305
    %v1307 = vrcp.pop %v1292
    %v1308 = vmul.f32 %v1235, %v1307
    %1310 = vset.pattern.permute.xlu0 96
    %1311 = vperm.xlu0 %1310, %v1294
    %v1312 = vpop.permute.xlu0 %1311
    %1315 = vset.pattern.permute.xlu0 96
    %1316 = vperm.xlu0 %1315, %v1296
    %v1317 = vpop.permute.xlu0 %1316
    %1320 = vset.pattern.permute.xlu0 96
    %1321 = vperm.xlu0 %1320, %v1298
    %v1322 = vpop.permute.xlu0 %1321
    %1325 = vset.pattern.permute.xlu0 96
    %1326 = vperm.xlu0 %1325, %v1300
    %v1327 = vpop.permute.xlu0 %1326
    %1330 = vset.pattern.permute.xlu0 96
    %1331 = vperm.xlu0 %1330, %v1302
    %v1332 = vpop.permute.xlu0 %1331
    %1335 = vset.pattern.permute.xlu0 96
    %1336 = vperm.xlu0 %1335, %v1304
    %v1337 = vpop.permute.xlu0 %1336
    %1340 = vset.pattern.permute.xlu0 96
    %1341 = vperm.xlu0 %1340, %v1306
    %v1342 = vpop.permute.xlu0 %1341
    %1345 = vset.pattern.permute.xlu0 96
    %1346 = vperm.xlu0 %1345, %v1308
    %v1347 = vpop.permute.xlu0 %1346
    %v1349 = vmul.f32 %v1312, %v1149
    %v1350 = vmul.f32 %v1317, %v1154
    %v1351 = vmul.f32 %v1322, %v1159
    %v1352 = vmul.f32 %v1327, %v1164
    %v1353 = vmul.f32 %v1332, %v1169
    %v1354 = vmul.f32 %v1337, %v1174
    %v1355 = vmul.f32 %v1342, %v1179
    %v1356 = vmul.f32 %v1347, %v1184
    %1357 = vset.pattern.permute.xlu0 97
    %1358 = vperm.xlu0 %1357, %v1294
    %v1359 = vpop.permute.xlu0 %1358
    %1361 = vset.pattern.permute.xlu0 97
    %1362 = vperm.xlu0 %1361, %v1296
    %v1363 = vpop.permute.xlu0 %1362
    %1365 = vset.pattern.permute.xlu0 97
    %1366 = vperm.xlu0 %1365, %v1298
    %v1367 = vpop.permute.xlu0 %1366
    %1369 = vset.pattern.permute.xlu0 97
    %1370 = vperm.xlu0 %1369, %v1300
    %v1371 = vpop.permute.xlu0 %1370
    %1373 = vset.pattern.permute.xlu0 97
    %1374 = vperm.xlu0 %1373, %v1302
    %v1375 = vpop.permute.xlu0 %1374
    %1377 = vset.pattern.permute.xlu0 97
    %1378 = vperm.xlu0 %1377, %v1304
    %v1379 = vpop.permute.xlu0 %1378
    %1381 = vset.pattern.permute.xlu0 97
    %1382 = vperm.xlu0 %1381, %v1306
    %v1383 = vpop.permute.xlu0 %1382
    %1385 = vset.pattern.permute.xlu0 97
    %1386 = vperm.xlu0 %1385, %v1308
    %v1387 = vpop.permute.xlu0 %1386
    %v1389 = vmul.f32 %v1359, %v1149
    %v1390 = vmul.f32 %v1363, %v1154
    %v1391 = vmul.f32 %v1367, %v1159
    %v1392 = vmul.f32 %v1371, %v1164
    %v1393 = vmul.f32 %v1375, %v1169
    %v1394 = vmul.f32 %v1379, %v1174
    %v1395 = vmul.f32 %v1383, %v1179
    %v1396 = vmul.f32 %v1387, %v1184
    %1405 = vrot.lane.b32.xlu0 %v1389, 120
    %v1406 = vpop.permute.xlu0 %1405
    %1407 = vrot.lane.b32.xlu0 %v1390, 120
    %v1408 = vpop.permute.xlu0 %1407
    %1409 = vrot.lane.b32.xlu0 %v1391, 120
    %v1410 = vpop.permute.xlu0 %1409
    %1411 = vrot.lane.b32.xlu0 %v1392, 120
    %v1412 = vpop.permute.xlu0 %1411
    %1413 = vrot.lane.b32.xlu0 %v1393, 120
    %v1414 = vpop.permute.xlu0 %1413
    %1415 = vrot.lane.b32.xlu0 %v1394, 120
    %v1416 = vpop.permute.xlu0 %1415
    %1417 = vrot.lane.b32.xlu0 %v1395, 120
    %v1418 = vpop.permute.xlu0 %1417
    %1419 = vrot.lane.b32.xlu0 %v1396, 120
    %v1420 = vpop.permute.xlu0 %1419
    %v1429 = vadd.f32 %v1349, %v1406
    %v1430 = vadd.f32 %v1350, %v1408
    %v1431 = vadd.f32 %v1351, %v1410
    %v1432 = vadd.f32 %v1352, %v1412
    %v1433 = vadd.f32 %v1353, %v1414
    %v1434 = vadd.f32 %v1354, %v1416
    %v1435 = vadd.f32 %v1355, %v1418
    %v1436 = vadd.f32 %v1356, %v1420
    %1437 = vset.pattern.permute.xlu0 98
    %1438 = vperm.xlu0 %1437, %v1294
    %v1439 = vpop.permute.xlu0 %1438
    %1441 = vset.pattern.permute.xlu0 98
    %1442 = vperm.xlu0 %1441, %v1296
    %v1443 = vpop.permute.xlu0 %1442
    %1445 = vset.pattern.permute.xlu0 98
    %1446 = vperm.xlu0 %1445, %v1298
    %v1447 = vpop.permute.xlu0 %1446
    %1449 = vset.pattern.permute.xlu0 98
    %1450 = vperm.xlu0 %1449, %v1300
    %v1451 = vpop.permute.xlu0 %1450
    %1453 = vset.pattern.permute.xlu0 98
    %1454 = vperm.xlu0 %1453, %v1302
    %v1455 = vpop.permute.xlu0 %1454
    %1457 = vset.pattern.permute.xlu0 98
    %1458 = vperm.xlu0 %1457, %v1304
    %v1459 = vpop.permute.xlu0 %1458
    %1461 = vset.pattern.permute.xlu0 98
    %1462 = vperm.xlu0 %1461, %v1306
    %v1463 = vpop.permute.xlu0 %1462
    %1465 = vset.pattern.permute.xlu0 98
    %1466 = vperm.xlu0 %1465, %v1308
    %v1467 = vpop.permute.xlu0 %1466
    %v1469 = vmul.f32 %v1439, %v1149
    %v1470 = vmul.f32 %v1443, %v1154
    %v1471 = vmul.f32 %v1447, %v1159
    %v1472 = vmul.f32 %v1451, %v1164
    %v1473 = vmul.f32 %v1455, %v1169
    %v1474 = vmul.f32 %v1459, %v1174
    %v1475 = vmul.f32 %v1463, %v1179
    %v1476 = vmul.f32 %v1467, %v1184
    %1485 = vrot.lane.b32.xlu0 %v1469, 112
    %v1486 = vpop.permute.xlu0 %1485
    %1487 = vrot.lane.b32.xlu0 %v1470, 112
    %v1488 = vpop.permute.xlu0 %1487
    %1489 = vrot.lane.b32.xlu0 %v1471, 112
    %v1490 = vpop.permute.xlu0 %1489
    %1491 = vrot.lane.b32.xlu0 %v1472, 112
    %v1492 = vpop.permute.xlu0 %1491
    %1493 = vrot.lane.b32.xlu0 %v1473, 112
    %v1494 = vpop.permute.xlu0 %1493
    %1495 = vrot.lane.b32.xlu0 %v1474, 112
    %v1496 = vpop.permute.xlu0 %1495
    %1497 = vrot.lane.b32.xlu0 %v1475, 112
    %v1498 = vpop.permute.xlu0 %1497
    %1499 = vrot.lane.b32.xlu0 %v1476, 112
    %v1500 = vpop.permute.xlu0 %1499
    %v1509 = vadd.f32 %v1429, %v1486
    %v1510 = vadd.f32 %v1430, %v1488
    %v1511 = vadd.f32 %v1431, %v1490
    %v1512 = vadd.f32 %v1432, %v1492
    %v1513 = vadd.f32 %v1433, %v1494
    %v1514 = vadd.f32 %v1434, %v1496
    %v1515 = vadd.f32 %v1435, %v1498
    %v1516 = vadd.f32 %v1436, %v1500
    %1517 = vset.pattern.permute.xlu0 99
    %1518 = vperm.xlu0 %1517, %v1294
    %v1519 = vpop.permute.xlu0 %1518
    %1521 = vset.pattern.permute.xlu0 99
    %1522 = vperm.xlu0 %1521, %v1296
    %v1523 = vpop.permute.xlu0 %1522
    %1525 = vset.pattern.permute.xlu0 99
    %1526 = vperm.xlu0 %1525, %v1298
    %v1527 = vpop.permute.xlu0 %1526
    %1529 = vset.pattern.permute.xlu0 99
    %1530 = vperm.xlu0 %1529, %v1300
    %v1531 = vpop.permute.xlu0 %1530
    %1533 = vset.pattern.permute.xlu0 99
    %1534 = vperm.xlu0 %1533, %v1302
    %v1535 = vpop.permute.xlu0 %1534
    %1537 = vset.pattern.permute.xlu0 99
    %1538 = vperm.xlu0 %1537, %v1304
    %v1539 = vpop.permute.xlu0 %1538
    %1541 = vset.pattern.permute.xlu0 99
    %1542 = vperm.xlu0 %1541, %v1306
    %v1543 = vpop.permute.xlu0 %1542
    %1545 = vset.pattern.permute.xlu0 99
    %1546 = vperm.xlu0 %1545, %v1308
    %v1547 = vpop.permute.xlu0 %1546
    %v1549 = vmul.f32 %v1519, %v1149
    %v1550 = vmul.f32 %v1523, %v1154
    %v1551 = vmul.f32 %v1527, %v1159
    %v1552 = vmul.f32 %v1531, %v1164
    %v1553 = vmul.f32 %v1535, %v1169
    %v1554 = vmul.f32 %v1539, %v1174
    %v1555 = vmul.f32 %v1543, %v1179
    %v1556 = vmul.f32 %v1547, %v1184
    %1565 = vrot.lane.b32.xlu0 %v1549, 104
    %v1566 = vpop.permute.xlu0 %1565
    %1567 = vrot.lane.b32.xlu0 %v1550, 104
    %v1568 = vpop.permute.xlu0 %1567
    %1569 = vrot.lane.b32.xlu0 %v1551, 104
    %v1570 = vpop.permute.xlu0 %1569
    %1571 = vrot.lane.b32.xlu0 %v1552, 104
    %v1572 = vpop.permute.xlu0 %1571
    %1573 = vrot.lane.b32.xlu0 %v1553, 104
    %v1574 = vpop.permute.xlu0 %1573
    %1575 = vrot.lane.b32.xlu0 %v1554, 104
    %v1576 = vpop.permute.xlu0 %1575
    %1577 = vrot.lane.b32.xlu0 %v1555, 104
    %v1578 = vpop.permute.xlu0 %1577
    %1579 = vrot.lane.b32.xlu0 %v1556, 104
    %v1580 = vpop.permute.xlu0 %1579
    %v1589 = vadd.f32 %v1509, %v1566
    %v1590 = vadd.f32 %v1510, %v1568
    %v1591 = vadd.f32 %v1511, %v1570
    %v1592 = vadd.f32 %v1512, %v1572
    %v1593 = vadd.f32 %v1513, %v1574
    %v1594 = vadd.f32 %v1514, %v1576
    %v1595 = vadd.f32 %v1515, %v1578
    %v1596 = vadd.f32 %v1516, %v1580
    %1597 = vset.pattern.permute.xlu0 100
    %1598 = vperm.xlu0 %1597, %v1294
    %v1599 = vpop.permute.xlu0 %1598
    %1601 = vset.pattern.permute.xlu0 100
    %1602 = vperm.xlu0 %1601, %v1296
    %v1603 = vpop.permute.xlu0 %1602
    %1605 = vset.pattern.permute.xlu0 100
    %1606 = vperm.xlu0 %1605, %v1298
    %v1607 = vpop.permute.xlu0 %1606
    %1609 = vset.pattern.permute.xlu0 100
    %1610 = vperm.xlu0 %1609, %v1300
    %v1611 = vpop.permute.xlu0 %1610
    %1613 = vset.pattern.permute.xlu0 100
    %1614 = vperm.xlu0 %1613, %v1302
    %v1615 = vpop.permute.xlu0 %1614
    %1617 = vset.pattern.permute.xlu0 100
    %1618 = vperm.xlu0 %1617, %v1304
    %v1619 = vpop.permute.xlu0 %1618
    %1621 = vset.pattern.permute.xlu0 100
    %1622 = vperm.xlu0 %1621, %v1306
    %v1623 = vpop.permute.xlu0 %1622
    %1625 = vset.pattern.permute.xlu0 100
    %1626 = vperm.xlu0 %1625, %v1308
    %v1627 = vpop.permute.xlu0 %1626
    %v1629 = vmul.f32 %v1599, %v1149
    %v1630 = vmul.f32 %v1603, %v1154
    %v1631 = vmul.f32 %v1607, %v1159
    %v1632 = vmul.f32 %v1611, %v1164
    %v1633 = vmul.f32 %v1615, %v1169
    %v1634 = vmul.f32 %v1619, %v1174
    %v1635 = vmul.f32 %v1623, %v1179
    %v1636 = vmul.f32 %v1627, %v1184
    %1645 = vrot.lane.b32.xlu0 %v1629, 96
    %v1646 = vpop.permute.xlu0 %1645
    %1647 = vrot.lane.b32.xlu0 %v1630, 96
    %v1648 = vpop.permute.xlu0 %1647
    %1649 = vrot.lane.b32.xlu0 %v1631, 96
    %v1650 = vpop.permute.xlu0 %1649
    %1651 = vrot.lane.b32.xlu0 %v1632, 96
    %v1652 = vpop.permute.xlu0 %1651
    %1653 = vrot.lane.b32.xlu0 %v1633, 96
    %v1654 = vpop.permute.xlu0 %1653
    %1655 = vrot.lane.b32.xlu0 %v1634, 96
    %v1656 = vpop.permute.xlu0 %1655
    %1657 = vrot.lane.b32.xlu0 %v1635, 96
    %v1658 = vpop.permute.xlu0 %1657
    %1659 = vrot.lane.b32.xlu0 %v1636, 96
    %v1660 = vpop.permute.xlu0 %1659
    %v1669 = vadd.f32 %v1589, %v1646
    %v1670 = vadd.f32 %v1590, %v1648
    %v1671 = vadd.f32 %v1591, %v1650
    %v1672 = vadd.f32 %v1592, %v1652
    %v1673 = vadd.f32 %v1593, %v1654
    %v1674 = vadd.f32 %v1594, %v1656
    %v1675 = vadd.f32 %v1595, %v1658
    %v1676 = vadd.f32 %v1596, %v1660
    %1677 = vset.pattern.permute.xlu0 101
    %1678 = vperm.xlu0 %1677, %v1294
    %v1679 = vpop.permute.xlu0 %1678
    %1681 = vset.pattern.permute.xlu0 101
    %1682 = vperm.xlu0 %1681, %v1296
    %v1683 = vpop.permute.xlu0 %1682
    %1685 = vset.pattern.permute.xlu0 101
    %1686 = vperm.xlu0 %1685, %v1298
    %v1687 = vpop.permute.xlu0 %1686
    %1689 = vset.pattern.permute.xlu0 101
    %1690 = vperm.xlu0 %1689, %v1300
    %v1691 = vpop.permute.xlu0 %1690
    %1693 = vset.pattern.permute.xlu0 101
    %1694 = vperm.xlu0 %1693, %v1302
    %v1695 = vpop.permute.xlu0 %1694
    %1697 = vset.pattern.permute.xlu0 101
    %1698 = vperm.xlu0 %1697, %v1304
    %v1699 = vpop.permute.xlu0 %1698
    %1701 = vset.pattern.permute.xlu0 101
    %1702 = vperm.xlu0 %1701, %v1306
    %v1703 = vpop.permute.xlu0 %1702
    %1705 = vset.pattern.permute.xlu0 101
    %1706 = vperm.xlu0 %1705, %v1308
    %v1707 = vpop.permute.xlu0 %1706
    %v1709 = vmul.f32 %v1679, %v1149
    %v1710 = vmul.f32 %v1683, %v1154
    %v1711 = vmul.f32 %v1687, %v1159
    %v1712 = vmul.f32 %v1691, %v1164
    %v1713 = vmul.f32 %v1695, %v1169
    %v1714 = vmul.f32 %v1699, %v1174
    %v1715 = vmul.f32 %v1703, %v1179
    %v1716 = vmul.f32 %v1707, %v1184
    %1725 = vrot.lane.b32.xlu0 %v1709, 88
    %v1726 = vpop.permute.xlu0 %1725
    %1727 = vrot.lane.b32.xlu0 %v1710, 88
    %v1728 = vpop.permute.xlu0 %1727
    %1729 = vrot.lane.b32.xlu0 %v1711, 88
    %v1730 = vpop.permute.xlu0 %1729
    %1731 = vrot.lane.b32.xlu0 %v1712, 88
    %v1732 = vpop.permute.xlu0 %1731
    %1733 = vrot.lane.b32.xlu0 %v1713, 88
    %v1734 = vpop.permute.xlu0 %1733
    %1735 = vrot.lane.b32.xlu0 %v1714, 88
    %v1736 = vpop.permute.xlu0 %1735
    %1737 = vrot.lane.b32.xlu0 %v1715, 88
    %v1738 = vpop.permute.xlu0 %1737
    %1739 = vrot.lane.b32.xlu0 %v1716, 88
    %v1740 = vpop.permute.xlu0 %1739
    %v1749 = vadd.f32 %v1669, %v1726
    %v1750 = vadd.f32 %v1670, %v1728
    %v1751 = vadd.f32 %v1671, %v1730
    %v1752 = vadd.f32 %v1672, %v1732
    %v1753 = vadd.f32 %v1673, %v1734
    %v1754 = vadd.f32 %v1674, %v1736
    %v1755 = vadd.f32 %v1675, %v1738
    %v1756 = vadd.f32 %v1676, %v1740
    %1757 = vset.pattern.permute.xlu0 102
    %1758 = vperm.xlu0 %1757, %v1294
    %v1759 = vpop.permute.xlu0 %1758
    %1761 = vset.pattern.permute.xlu0 102
    %1762 = vperm.xlu0 %1761, %v1296
    %v1763 = vpop.permute.xlu0 %1762
    %1765 = vset.pattern.permute.xlu0 102
    %1766 = vperm.xlu0 %1765, %v1298
    %v1767 = vpop.permute.xlu0 %1766
    %1769 = vset.pattern.permute.xlu0 102
    %1770 = vperm.xlu0 %1769, %v1300
    %v1771 = vpop.permute.xlu0 %1770
    %1773 = vset.pattern.permute.xlu0 102
    %1774 = vperm.xlu0 %1773, %v1302
    %v1775 = vpop.permute.xlu0 %1774
    %1777 = vset.pattern.permute.xlu0 102
    %1778 = vperm.xlu0 %1777, %v1304
    %v1779 = vpop.permute.xlu0 %1778
    %1781 = vset.pattern.permute.xlu0 102
    %1782 = vperm.xlu0 %1781, %v1306
    %v1783 = vpop.permute.xlu0 %1782
    %1785 = vset.pattern.permute.xlu0 102
    %1786 = vperm.xlu0 %1785, %v1308
    %v1787 = vpop.permute.xlu0 %1786
    %v1789 = vmul.f32 %v1759, %v1149
    %v1790 = vmul.f32 %v1763, %v1154
    %v1791 = vmul.f32 %v1767, %v1159
    %v1792 = vmul.f32 %v1771, %v1164
    %v1793 = vmul.f32 %v1775, %v1169
    %v1794 = vmul.f32 %v1779, %v1174
    %v1795 = vmul.f32 %v1783, %v1179
    %v1796 = vmul.f32 %v1787, %v1184
    %1805 = vrot.lane.b32.xlu0 %v1789, 80
    %v1806 = vpop.permute.xlu0 %1805
    %1807 = vrot.lane.b32.xlu0 %v1790, 80
    %v1808 = vpop.permute.xlu0 %1807
    %1809 = vrot.lane.b32.xlu0 %v1791, 80
    %v1810 = vpop.permute.xlu0 %1809
    %1811 = vrot.lane.b32.xlu0 %v1792, 80
    %v1812 = vpop.permute.xlu0 %1811
    %1813 = vrot.lane.b32.xlu0 %v1793, 80
    %v1814 = vpop.permute.xlu0 %1813
    %1815 = vrot.lane.b32.xlu0 %v1794, 80
    %v1816 = vpop.permute.xlu0 %1815
    %1817 = vrot.lane.b32.xlu0 %v1795, 80
    %v1818 = vpop.permute.xlu0 %1817
    %1819 = vrot.lane.b32.xlu0 %v1796, 80
    %v1820 = vpop.permute.xlu0 %1819
    %v1829 = vadd.f32 %v1749, %v1806
    %v1830 = vadd.f32 %v1750, %v1808
    %v1831 = vadd.f32 %v1751, %v1810
    %v1832 = vadd.f32 %v1752, %v1812
    %v1833 = vadd.f32 %v1753, %v1814
    %v1834 = vadd.f32 %v1754, %v1816
    %v1835 = vadd.f32 %v1755, %v1818
    %v1836 = vadd.f32 %v1756, %v1820
    %v1837 = vsel %vm954, %v1829, 0.0
    %v1838 = vsel %vm955, %v1830, 0.0
    %v1839 = vsel %vm956, %v1831, 0.0
    %v1840 = vsel %vm957, %v1832, 0.0
    %v1841 = vsel %vm958, %v1833, 0.0
    %v1842 = vsel %vm959, %v1834, 0.0
    %v1843 = vsel %vm960, %v1835, 0.0
    %v1844 = vsel %vm961, %v1836, 0.0
    %s1845 = sld [smem:[#allocation3]]
    %p1846 = scmp.gt.s32.totalorder %s1845, 0
    %s1847 = scalar_select %p1846, 1, 0
    %v1848 = vstv %s1847
    %vm1849 = vcmp.eq.s32.totalorder %v1848, 1
    %v1850 = vsel %vm1849, %v175, 1.0
    %v1851 = vsel %vm1849, %v212, 1.0
    %v1852 = vsel %vm1849, %v215, 1.0
    %v1853 = vsel %vm1849, %v218, 1.0
    %v1854 = vsel %vm1849, %v177, 1.0
    %v1855 = vsel %vm1849, %v222, 1.0
    %v1856 = vsel %vm1849, %v225, 1.0
    %v1857 = vsel %vm1849, %v228, 1.0
    %1859 = vset.pattern.permute.xlu0 124
    %1860 = vperm.xlu0 %1859, %v1850
    %v1861 = vpop.permute.xlu0 %1860
    %1864 = vset.pattern.permute.xlu0 124
    %1865 = vperm.xlu0 %1864, %v1851
    %v1866 = vpop.permute.xlu0 %1865
    %1869 = vset.pattern.permute.xlu0 124
    %1870 = vperm.xlu0 %1869, %v1852
    %v1871 = vpop.permute.xlu0 %1870
    %1874 = vset.pattern.permute.xlu0 124
    %1875 = vperm.xlu0 %1874, %v1853
    %v1876 = vpop.permute.xlu0 %1875
    %1879 = vset.pattern.permute.xlu0 124
    %1880 = vperm.xlu0 %1879, %v1854
    %v1881 = vpop.permute.xlu0 %1880
    %1884 = vset.pattern.permute.xlu0 124
    %1885 = vperm.xlu0 %1884, %v1855
    %v1886 = vpop.permute.xlu0 %1885
    %1889 = vset.pattern.permute.xlu0 124
    %1890 = vperm.xlu0 %1889, %v1856
    %v1891 = vpop.permute.xlu0 %1890
    %1894 = vset.pattern.permute.xlu0 124
    %1895 = vperm.xlu0 %1894, %v1857
    %v1896 = vpop.permute.xlu0 %1895
    %v1898 = vmul.f32 %v1861, %v1837
    %v1899 = vmul.f32 %v1866, %v1838
    %v1900 = vmul.f32 %v1871, %v1839
    %v1901 = vmul.f32 %v1876, %v1840
    %v1902 = vmul.f32 %v1881, %v1841
    %v1903 = vmul.f32 %v1886, %v1842
    %v1904 = vmul.f32 %v1891, %v1843
    %v1905 = vmul.f32 %v1896, %v1844
    %v1906 = vsub.f32 1.0, %v1850
    %v1907 = vsub.f32 1.0, %v1851
    %v1908 = vsub.f32 1.0, %v1852
    %v1909 = vsub.f32 1.0, %v1853
    %v1910 = vsub.f32 1.0, %v1854
    %v1911 = vsub.f32 1.0, %v1855
    %v1912 = vsub.f32 1.0, %v1856
    %v1913 = vsub.f32 1.0, %v1857
    %v1914 = vld [vmem:[%s2] sm:$0xff]
    %v1915 = vld [vmem:[%s2 + $0x8] sm:$0xff]
    %v1916 = vld [vmem:[%s2 + $0x10] sm:$0xff]
    %v1917 = vld [vmem:[%s2 + $0x18] sm:$0xff]
    %v1918 = vld [vmem:[%s2 + $0x20] sm:$0xff]
    %v1919 = vld [vmem:[%s2 + $0x28] sm:$0xff]
    %v1920 = vld [vmem:[%s2 + $0x30] sm:$0xff]
    %v1921 = vld [vmem:[%s2 + $0x38] sm:$0xff]
    %1923 = vset.pattern.permute.xlu0 124
    %1924 = vperm.xlu0 %1923, %v1906
    %v1925 = vpop.permute.xlu0 %1924
    %1928 = vset.pattern.permute.xlu0 124
    %1929 = vperm.xlu0 %1928, %v1907
    %v1930 = vpop.permute.xlu0 %1929
    %1933 = vset.pattern.permute.xlu0 124
    %1934 = vperm.xlu0 %1933, %v1908
    %v1935 = vpop.permute.xlu0 %1934
    %1938 = vset.pattern.permute.xlu0 124
    %1939 = vperm.xlu0 %1938, %v1909
    %v1940 = vpop.permute.xlu0 %1939
    %1943 = vset.pattern.permute.xlu0 124
    %1944 = vperm.xlu0 %1943, %v1910
    %v1945 = vpop.permute.xlu0 %1944
    %1948 = vset.pattern.permute.xlu0 124
    %1949 = vperm.xlu0 %1948, %v1911
    %v1950 = vpop.permute.xlu0 %1949
    %1953 = vset.pattern.permute.xlu0 124
    %1954 = vperm.xlu0 %1953, %v1912
    %v1955 = vpop.permute.xlu0 %1954
    %1958 = vset.pattern.permute.xlu0 124
    %1959 = vperm.xlu0 %1958, %v1913
    %v1960 = vpop.permute.xlu0 %1959
    %v1962 = vmul.f32 %v1925, %v1914
    %v1963 = vmul.f32 %v1930, %v1915
    %v1964 = vmul.f32 %v1935, %v1916
    %v1965 = vmul.f32 %v1940, %v1917
    %v1966 = vmul.f32 %v1945, %v1918
    %v1967 = vmul.f32 %v1950, %v1919
    %v1968 = vmul.f32 %v1955, %v1920
    %v1969 = vmul.f32 %v1960, %v1921
    %v1970 = vadd.f32 %v1898, %v1962
    %v1971 = vadd.f32 %v1899, %v1963
    %v1972 = vadd.f32 %v1900, %v1964
    %v1973 = vadd.f32 %v1901, %v1965
    %v1974 = vadd.f32 %v1902, %v1966
    %v1975 = vadd.f32 %v1903, %v1967
    %v1976 = vadd.f32 %v1904, %v1968
    %v1977 = vadd.f32 %v1905, %v1969
    %1978 = vst.msk [vmem:[%s7] sm:$0xff] %vm232, %v1970
    %1979 = vst.msk [vmem:[%s7 + $0x8] sm:$0xff] %vm232, %v1971
    %1980 = vst.msk [vmem:[%s7 + $0x10] sm:$0xff] %vm232, %v1972
    %1981 = vst.msk [vmem:[%s7 + $0x18] sm:$0xff] %vm232, %v1973
    %1982 = vst.msk [vmem:[%s7 + $0x20] sm:$0xff] %vm232, %v1974
    %1983 = vst.msk [vmem:[%s7 + $0x28] sm:$0xff] %vm232, %v1975
    %1984 = vst.msk [vmem:[%s7 + $0x30] sm:$0xff] %vm232, %v1976
    %1985 = vst.msk [vmem:[%s7 + $0x38] sm:$0xff] %vm232, %v1977
    %1986 = vrot.lane.b32.xlu0 %v158, 64
    %v1987 = vpop.permute.xlu0 %1986
    %v1990 = vsel %vm232, %v1970, 0
    %1992 = vmatprep.subr.mxu0 0.0
    %1993 = vmatpush1.msra.mxu0 %v1987
    %1994 = vmatprep.subr.mxu0 0.0
    %1995 = vmatpush1.msra.mxu0 0.0
    %1996 = vmatprep.subr.mxu0 0.0
    %1997 = vmatpush1.msra.mxu0 0.0
    %1998 = vmatprep.subr.mxu0 0.0
    %1999 = vmatpush1.msra.mxu0 0.0
    %2000 = vmatprep.subr.mxu0 0.0
    %2001 = vmatpush1.msra.mxu0 0.0
    %2002 = vmatprep.subr.mxu0 0.0
    %2003 = vmatpush1.msra.mxu0 0.0
    %2004 = vmatprep.subr.mxu0 0.0
    %2005 = vmatpush1.msra.mxu0 0.0
    %2006 = vmatprep.subr.mxu0 0.0
    %2007 = vmatpush1.msra.mxu0 0.0
    %2008 = vmatprep.subr.mxu0 0.0
    %2009 = vmatpush1.msra.mxu0 0.0
    %2010 = vmatprep.subr.mxu0 0.0
    %2011 = vmatpush1.msra.mxu0 0.0
    %2012 = vmatprep.subr.mxu0 0.0
    %2013 = vmatpush1.msra.mxu0 0.0
    %2014 = vmatprep.subr.mxu0 0.0
    %2015 = vmatpush1.msra.mxu0 0.0
    %2016 = vmatprep.subr.mxu0 0.0
    %2017 = vmatpush1.msra.mxu0 0.0
    %2018 = vmatprep.subr.mxu0 0.0
    %2019 = vmatpush1.msra.mxu0 0.0
    %2020 = vmatprep.subr.mxu0 0.0
    %2021 = vmatpush1.msra.mxu0 0.0
    %2022 = vmatprep.subr.mxu0 0.0
    %2023 = vmatpush1.msra.mxu0 0.0
    %2024 = vmatprep.subr.mxu0 0.0
    %2025 = vmatpush1.msra.mxu0 0.0
    %2026 = vmatprep.subr.mxu0 0.0
    %2027 = vmatpush1.msra.mxu0 0.0
    %2028 = vmatprep.subr.mxu0 0.0
    %2029 = vmatpush1.msra.mxu0 0.0
    %2030 = vmatprep.subr.mxu0 0.0
    %2031 = vmatpush1.msra.mxu0 0.0
    %2032 = vmatprep.subr.mxu0 0.0
    %2033 = vmatpush1.msra.mxu0 0.0
    %2034 = vmatprep.subr.mxu0 0.0
    %2035 = vmatpush1.msra.mxu0 0.0
    %2036 = vmatprep.subr.mxu0 0.0
    %2037 = vmatpush1.msra.mxu0 0.0
    %2038 = vmatprep.subr.mxu0 0.0
    %2039 = vmatpush1.msra.mxu0 0.0
    %2040 = vmatprep.subr.mxu0 0.0
    %2041 = vmatpush1.msra.mxu0 0.0
    %2042 = vmatprep.subr.mxu0 0.0
    %2043 = vmatpush1.msra.mxu0 0.0
    %2044 = vmatprep.subr.mxu0 0.0
    %2045 = vmatpush1.msra.mxu0 0.0
    %2046 = vmatprep.subr.mxu0 0.0
    %2047 = vmatpush1.msra.mxu0 0.0
    %2048 = vmatprep.subr.mxu0 0.0
    %2049 = vmatpush1.msra.mxu0 0.0
    %2050 = vmatprep.subr.mxu0 0.0
    %2051 = vmatpush1.msra.mxu0 0.0
    %2052 = vmatprep.subr.mxu0 0.0
    %2053 = vmatpush1.msra.mxu0 0.0
    %2054 = vmatprep.subr.mxu0 0.0
    %2055 = vmatpush1.msra.mxu0 0.0
    %2056 = vmatprep.mubr.f32.mxu0 0.0
    %2057 = vmatmul.mubr.f32.gmra.mrb[0].mxu0 %v1990
    %v2058 = vpop.f32.mrb[0].mxu0
    %v2059 = vadd.f32 0.0, %v2058
    %v2060 = vpop.f32.mrb[0].mxu0
    %2061 = vdwg.mxu0
    %2062 = vrot.lane.b32.xlu0 %v180, 64
    %v2063 = vpop.permute.xlu0 %2062
    %v2066 = vsel %vm232, %v1971, 0
    %2068 = vmatprep.subr.mxu0 0.0
    %2069 = vmatpush1.msra.mxu0 %v2063
    %2070 = vmatprep.subr.mxu0 0.0
    %2071 = vmatpush1.msra.mxu0 0.0
    %2072 = vmatprep.subr.mxu0 0.0
    %2073 = vmatpush1.msra.mxu0 0.0
    %2074 = vmatprep.subr.mxu0 0.0
    %2075 = vmatpush1.msra.mxu0 0.0
    %2076 = vmatprep.subr.mxu0 0.0
    %2077 = vmatpush1.msra.mxu0 0.0
    %2078 = vmatprep.subr.mxu0 0.0
    %2079 = vmatpush1.msra.mxu0 0.0
    %2080 = vmatprep.subr.mxu0 0.0
    %2081 = vmatpush1.msra.mxu0 0.0
    %2082 = vmatprep.subr.mxu0 0.0
    %2083 = vmatpush1.msra.mxu0 0.0
    %2084 = vmatprep.subr.mxu0 0.0
    %2085 = vmatpush1.msra.mxu0 0.0
    %2086 = vmatprep.subr.mxu0 0.0
    %2087 = vmatpush1.msra.mxu0 0.0
    %2088 = vmatprep.subr.mxu0 0.0
    %2089 = vmatpush1.msra.mxu0 0.0
    %2090 = vmatprep.subr.mxu0 0.0
    %2091 = vmatpush1.msra.mxu0 0.0
    %2092 = vmatprep.subr.mxu0 0.0
    %2093 = vmatpush1.msra.mxu0 0.0
    %2094 = vmatprep.subr.mxu0 0.0
    %2095 = vmatpush1.msra.mxu0 0.0
    %2096 = vmatprep.subr.mxu0 0.0
    %2097 = vmatpush1.msra.mxu0 0.0
    %2098 = vmatprep.subr.mxu0 0.0
    %2099 = vmatpush1.msra.mxu0 0.0
    %2100 = vmatprep.subr.mxu0 0.0
    %2101 = vmatpush1.msra.mxu0 0.0
    %2102 = vmatprep.subr.mxu0 0.0
    %2103 = vmatpush1.msra.mxu0 0.0
    %2104 = vmatprep.subr.mxu0 0.0
    %2105 = vmatpush1.msra.mxu0 0.0
    %2106 = vmatprep.subr.mxu0 0.0
    %2107 = vmatpush1.msra.mxu0 0.0
    %2108 = vmatprep.subr.mxu0 0.0
    %2109 = vmatpush1.msra.mxu0 0.0
    %2110 = vmatprep.subr.mxu0 0.0
    %2111 = vmatpush1.msra.mxu0 0.0
    %2112 = vmatprep.subr.mxu0 0.0
    %2113 = vmatpush1.msra.mxu0 0.0
    %2114 = vmatprep.subr.mxu0 0.0
    %2115 = vmatpush1.msra.mxu0 0.0
    %2116 = vmatprep.subr.mxu0 0.0
    %2117 = vmatpush1.msra.mxu0 0.0
    %2118 = vmatprep.subr.mxu0 0.0
    %2119 = vmatpush1.msra.mxu0 0.0
    %2120 = vmatprep.subr.mxu0 0.0
    %2121 = vmatpush1.msra.mxu0 0.0
    %2122 = vmatprep.subr.mxu0 0.0
    %2123 = vmatpush1.msra.mxu0 0.0
    %2124 = vmatprep.subr.mxu0 0.0
    %2125 = vmatpush1.msra.mxu0 0.0
    %2126 = vmatprep.subr.mxu0 0.0
    %2127 = vmatpush1.msra.mxu0 0.0
    %2128 = vmatprep.subr.mxu0 0.0
    %2129 = vmatpush1.msra.mxu0 0.0
    %2130 = vmatprep.subr.mxu0 0.0
    %2131 = vmatpush1.msra.mxu0 0.0
    %2132 = vmatprep.mubr.f32.mxu0 0.0
    %2133 = vmatmul.mubr.f32.gmra.mrb[0].mxu0 %v2066
    %v2134 = vpop.f32.mrb[0].mxu0
    %v2135 = vadd.f32 0.0, %v2134
    %v2136 = vpop.f32.mrb[0].mxu0
    %2137 = vdwg.mxu0
    %2138 = vrot.lane.b32.xlu0 %v182, 64
    %v2139 = vpop.permute.xlu0 %2138
    %v2142 = vsel %vm232, %v1972, 0
    %2144 = vmatprep.subr.mxu0 0.0
    %2145 = vmatpush1.msra.mxu0 %v2139
    %2146 = vmatprep.subr.mxu0 0.0
    %2147 = vmatpush1.msra.mxu0 0.0
    %2148 = vmatprep.subr.mxu0 0.0
    %2149 = vmatpush1.msra.mxu0 0.0
    %2150 = vmatprep.subr.mxu0 0.0
    %2151 = vmatpush1.msra.mxu0 0.0
    %2152 = vmatprep.subr.mxu0 0.0
    %2153 = vmatpush1.msra.mxu0 0.0
    %2154 = vmatprep.subr.mxu0 0.0
    %2155 = vmatpush1.msra.mxu0 0.0
    %2156 = vmatprep.subr.mxu0 0.0
    %2157 = vmatpush1.msra.mxu0 0.0
    %2158 = vmatprep.subr.mxu0 0.0
    %2159 = vmatpush1.msra.mxu0 0.0
    %2160 = vmatprep.subr.mxu0 0.0
    %2161 = vmatpush1.msra.mxu0 0.0
    %2162 = vmatprep.subr.mxu0 0.0
    %2163 = vmatpush1.msra.mxu0 0.0
    %2164 = vmatprep.subr.mxu0 0.0
    %2165 = vmatpush1.msra.mxu0 0.0
    %2166 = vmatprep.subr.mxu0 0.0
    %2167 = vmatpush1.msra.mxu0 0.0
    %2168 = vmatprep.subr.mxu0 0.0
    %2169 = vmatpush1.msra.mxu0 0.0
    %2170 = vmatprep.subr.mxu0 0.0
    %2171 = vmatpush1.msra.mxu0 0.0
    %2172 = vmatprep.subr.mxu0 0.0
    %2173 = vmatpush1.msra.mxu0 0.0
    %2174 = vmatprep.subr.mxu0 0.0
    %2175 = vmatpush1.msra.mxu0 0.0
    %2176 = vmatprep.subr.mxu0 0.0
    %2177 = vmatpush1.msra.mxu0 0.0
    %2178 = vmatprep.subr.mxu0 0.0
    %2179 = vmatpush1.msra.mxu0 0.0
    %2180 = vmatprep.subr.mxu0 0.0
    %2181 = vmatpush1.msra.mxu0 0.0
    %2182 = vmatprep.subr.mxu0 0.0
    %2183 = vmatpush1.msra.mxu0 0.0
    %2184 = vmatprep.subr.mxu0 0.0
    %2185 = vmatpush1.msra.mxu0 0.0
    %2186 = vmatprep.subr.mxu0 0.0
    %2187 = vmatpush1.msra.mxu0 0.0
    %2188 = vmatprep.subr.mxu0 0.0
    %2189 = vmatpush1.msra.mxu0 0.0
    %2190 = vmatprep.subr.mxu0 0.0
    %2191 = vmatpush1.msra.mxu0 0.0
    %2192 = vmatprep.subr.mxu0 0.0
    %2193 = vmatpush1.msra.mxu0 0.0
    %2194 = vmatprep.subr.mxu0 0.0
    %2195 = vmatpush1.msra.mxu0 0.0
    %2196 = vmatprep.subr.mxu0 0.0
    %2197 = vmatpush1.msra.mxu0 0.0
    %2198 = vmatprep.subr.mxu0 0.0
    %2199 = vmatpush1.msra.mxu0 0.0
    %2200 = vmatprep.subr.mxu0 0.0
    %2201 = vmatpush1.msra.mxu0 0.0
    %2202 = vmatprep.subr.mxu0 0.0
    %2203 = vmatpush1.msra.mxu0 0.0
    %2204 = vmatprep.subr.mxu0 0.0
    %2205 = vmatpush1.msra.mxu0 0.0
    %2206 = vmatprep.subr.mxu0 0.0
    %2207 = vmatpush1.msra.mxu0 0.0
    %2208 = vmatprep.mubr.f32.mxu0 0.0
    %2209 = vmatmul.mubr.f32.gmra.mrb[0].mxu0 %v2142
    %v2210 = vpop.f32.mrb[0].mxu0
    %v2211 = vadd.f32 0.0, %v2210
    %v2212 = vpop.f32.mrb[0].mxu0
    %2213 = vdwg.mxu0
    %2214 = vrot.lane.b32.xlu0 %v184, 64
    %v2215 = vpop.permute.xlu0 %2214
    %v2218 = vsel %vm232, %v1973, 0
    %2220 = vmatprep.subr.mxu0 0.0
    %2221 = vmatpush1.msra.mxu0 %v2215
    %2222 = vmatprep.subr.mxu0 0.0
    %2223 = vmatpush1.msra.mxu0 0.0
    %2224 = vmatprep.subr.mxu0 0.0
    %2225 = vmatpush1.msra.mxu0 0.0
    %2226 = vmatprep.subr.mxu0 0.0
    %2227 = vmatpush1.msra.mxu0 0.0
    %2228 = vmatprep.subr.mxu0 0.0
    %2229 = vmatpush1.msra.mxu0 0.0
    %2230 = vmatprep.subr.mxu0 0.0
    %2231 = vmatpush1.msra.mxu0 0.0
    %2232 = vmatprep.subr.mxu0 0.0
    %2233 = vmatpush1.msra.mxu0 0.0
    %2234 = vmatprep.subr.mxu0 0.0
    %2235 = vmatpush1.msra.mxu0 0.0
    %2236 = vmatprep.subr.mxu0 0.0
    %2237 = vmatpush1.msra.mxu0 0.0
    %2238 = vmatprep.subr.mxu0 0.0
    %2239 = vmatpush1.msra.mxu0 0.0
    %2240 = vmatprep.subr.mxu0 0.0
    %2241 = vmatpush1.msra.mxu0 0.0
    %2242 = vmatprep.subr.mxu0 0.0
    %2243 = vmatpush1.msra.mxu0 0.0
    %2244 = vmatprep.subr.mxu0 0.0
    %2245 = vmatpush1.msra.mxu0 0.0
    %2246 = vmatprep.subr.mxu0 0.0
    %2247 = vmatpush1.msra.mxu0 0.0
    %2248 = vmatprep.subr.mxu0 0.0
    %2249 = vmatpush1.msra.mxu0 0.0
    %2250 = vmatprep.subr.mxu0 0.0
    %2251 = vmatpush1.msra.mxu0 0.0
    %2252 = vmatprep.subr.mxu0 0.0
    %2253 = vmatpush1.msra.mxu0 0.0
    %2254 = vmatprep.subr.mxu0 0.0
    %2255 = vmatpush1.msra.mxu0 0.0
    %2256 = vmatprep.subr.mxu0 0.0
    %2257 = vmatpush1.msra.mxu0 0.0
    %2258 = vmatprep.subr.mxu0 0.0
    %2259 = vmatpush1.msra.mxu0 0.0
    %2260 = vmatprep.subr.mxu0 0.0
    %2261 = vmatpush1.msra.mxu0 0.0
    %2262 = vmatprep.subr.mxu0 0.0
    %2263 = vmatpush1.msra.mxu0 0.0
    %2264 = vmatprep.subr.mxu0 0.0
    %2265 = vmatpush1.msra.mxu0 0.0
    %2266 = vmatprep.subr.mxu0 0.0
    %2267 = vmatpush1.msra.mxu0 0.0
    %2268 = vmatprep.subr.mxu0 0.0
    %2269 = vmatpush1.msra.mxu0 0.0
    %2270 = vmatprep.subr.mxu0 0.0
    %2271 = vmatpush1.msra.mxu0 0.0
    %2272 = vmatprep.subr.mxu0 0.0
    %2273 = vmatpush1.msra.mxu0 0.0
    %2274 = vmatprep.subr.mxu0 0.0
    %2275 = vmatpush1.msra.mxu0 0.0
    %2276 = vmatprep.subr.mxu0 0.0
    %2277 = vmatpush1.msra.mxu0 0.0
    %2278 = vmatprep.subr.mxu0 0.0
    %2279 = vmatpush1.msra.mxu0 0.0
    %2280 = vmatprep.subr.mxu0 0.0
    %2281 = vmatpush1.msra.mxu0 0.0
    %2282 = vmatprep.subr.mxu0 0.0
    %2283 = vmatpush1.msra.mxu0 0.0
    %2284 = vmatprep.mubr.f32.mxu0 0.0
    %2285 = vmatmul.mubr.f32.gmra.mrb[0].mxu0 %v2218
    %v2286 = vpop.f32.mrb[0].mxu0
    %v2287 = vadd.f32 0.0, %v2286
    %v2288 = vpop.f32.mrb[0].mxu0
    %2289 = vdwg.mxu0
    %2290 = vrot.lane.b32.xlu0 %v163, 64
    %v2291 = vpop.permute.xlu0 %2290
    %v2294 = vsel %vm232, %v1974, 0
    %2296 = vmatprep.subr.mxu0 0.0
    %2297 = vmatpush1.msra.mxu0 %v2291
    %2298 = vmatprep.subr.mxu0 0.0
    %2299 = vmatpush1.msra.mxu0 0.0
    %2300 = vmatprep.subr.mxu0 0.0
    %2301 = vmatpush1.msra.mxu0 0.0
    %2302 = vmatprep.subr.mxu0 0.0
    %2303 = vmatpush1.msra.mxu0 0.0
    %2304 = vmatprep.subr.mxu0 0.0
    %2305 = vmatpush1.msra.mxu0 0.0
    %2306 = vmatprep.subr.mxu0 0.0
    %2307 = vmatpush1.msra.mxu0 0.0
    %2308 = vmatprep.subr.mxu0 0.0
    %2309 = vmatpush1.msra.mxu0 0.0
    %2310 = vmatprep.subr.mxu0 0.0
    %2311 = vmatpush1.msra.mxu0 0.0
    %2312 = vmatprep.subr.mxu0 0.0
    %2313 = vmatpush1.msra.mxu0 0.0
    %2314 = vmatprep.subr.mxu0 0.0
    %2315 = vmatpush1.msra.mxu0 0.0
    %2316 = vmatprep.subr.mxu0 0.0
    %2317 = vmatpush1.msra.mxu0 0.0
    %2318 = vmatprep.subr.mxu0 0.0
    %2319 = vmatpush1.msra.mxu0 0.0
    %2320 = vmatprep.subr.mxu0 0.0
    %2321 = vmatpush1.msra.mxu0 0.0
    %2322 = vmatprep.subr.mxu0 0.0
    %2323 = vmatpush1.msra.mxu0 0.0
    %2324 = vmatprep.subr.mxu0 0.0
    %2325 = vmatpush1.msra.mxu0 0.0
    %2326 = vmatprep.subr.mxu0 0.0
    %2327 = vmatpush1.msra.mxu0 0.0
    %2328 = vmatprep.subr.mxu0 0.0
    %2329 = vmatpush1.msra.mxu0 0.0
    %2330 = vmatprep.subr.mxu0 0.0
    %2331 = vmatpush1.msra.mxu0 0.0
    %2332 = vmatprep.subr.mxu0 0.0
    %2333 = vmatpush1.msra.mxu0 0.0
    %2334 = vmatprep.subr.mxu0 0.0
    %2335 = vmatpush1.msra.mxu0 0.0
    %2336 = vmatprep.subr.mxu0 0.0
    %2337 = vmatpush1.msra.mxu0 0.0
    %2338 = vmatprep.subr.mxu0 0.0
    %2339 = vmatpush1.msra.mxu0 0.0
    %2340 = vmatprep.subr.mxu0 0.0
    %2341 = vmatpush1.msra.mxu0 0.0
    %2342 = vmatprep.subr.mxu0 0.0
    %2343 = vmatpush1.msra.mxu0 0.0
    %2344 = vmatprep.subr.mxu0 0.0
    %2345 = vmatpush1.msra.mxu0 0.0
    %2346 = vmatprep.subr.mxu0 0.0
    %2347 = vmatpush1.msra.mxu0 0.0
    %2348 = vmatprep.subr.mxu0 0.0
    %2349 = vmatpush1.msra.mxu0 0.0
    %2350 = vmatprep.subr.mxu0 0.0
    %2351 = vmatpush1.msra.mxu0 0.0
    %2352 = vmatprep.subr.mxu0 0.0
    %2353 = vmatpush1.msra.mxu0 0.0
    %2354 = vmatprep.subr.mxu0 0.0
    %2355 = vmatpush1.msra.mxu0 0.0
    %2356 = vmatprep.subr.mxu0 0.0
    %2357 = vmatpush1.msra.mxu0 0.0
    %2358 = vmatprep.subr.mxu0 0.0
    %2359 = vmatpush1.msra.mxu0 0.0
    %2360 = vmatprep.mubr.f32.mxu0 0.0
    %2361 = vmatmul.mubr.f32.gmra.mrb[0].mxu0 %v2294
    %v2362 = vpop.f32.mrb[0].mxu0
    %v2363 = vadd.f32 0.0, %v2362
    %v2364 = vpop.f32.mrb[0].mxu0
    %2365 = vdwg.mxu0
    %2366 = vrot.lane.b32.xlu0 %v187, 64
    %v2367 = vpop.permute.xlu0 %2366
    %v2370 = vsel %vm232, %v1975, 0
    %2372 = vmatprep.subr.mxu0 0.0
    %2373 = vmatpush1.msra.mxu0 %v2367
    %2374 = vmatprep.subr.mxu0 0.0
    %2375 = vmatpush1.msra.mxu0 0.0
    %2376 = vmatprep.subr.mxu0 0.0
    %2377 = vmatpush1.msra.mxu0 0.0
    %2378 = vmatprep.subr.mxu0 0.0
    %2379 = vmatpush1.msra.mxu0 0.0
    %2380 = vmatprep.subr.mxu0 0.0
    %2381 = vmatpush1.msra.mxu0 0.0
    %2382 = vmatprep.subr.mxu0 0.0
    %2383 = vmatpush1.msra.mxu0 0.0
    %2384 = vmatprep.subr.mxu0 0.0
    %2385 = vmatpush1.msra.mxu0 0.0
    %2386 = vmatprep.subr.mxu0 0.0
    %2387 = vmatpush1.msra.mxu0 0.0
    %2388 = vmatprep.subr.mxu0 0.0
    %2389 = vmatpush1.msra.mxu0 0.0
    %2390 = vmatprep.subr.mxu0 0.0
    %2391 = vmatpush1.msra.mxu0 0.0
    %2392 = vmatprep.subr.mxu0 0.0
    %2393 = vmatpush1.msra.mxu0 0.0
    %2394 = vmatprep.subr.mxu0 0.0
    %2395 = vmatpush1.msra.mxu0 0.0
    %2396 = vmatprep.subr.mxu0 0.0
    %2397 = vmatpush1.msra.mxu0 0.0
    %2398 = vmatprep.subr.mxu0 0.0
    %2399 = vmatpush1.msra.mxu0 0.0
    %2400 = vmatprep.subr.mxu0 0.0
    %2401 = vmatpush1.msra.mxu0 0.0
    %2402 = vmatprep.subr.mxu0 0.0
    %2403 = vmatpush1.msra.mxu0 0.0
    %2404 = vmatprep.subr.mxu0 0.0
    %2405 = vmatpush1.msra.mxu0 0.0
    %2406 = vmatprep.subr.mxu0 0.0
    %2407 = vmatpush1.msra.mxu0 0.0
    %2408 = vmatprep.subr.mxu0 0.0
    %2409 = vmatpush1.msra.mxu0 0.0
    %2410 = vmatprep.subr.mxu0 0.0
    %2411 = vmatpush1.msra.mxu0 0.0
    %2412 = vmatprep.subr.mxu0 0.0
    %2413 = vmatpush1.msra.mxu0 0.0
    %2414 = vmatprep.subr.mxu0 0.0
    %2415 = vmatpush1.msra.mxu0 0.0
    %2416 = vmatprep.subr.mxu0 0.0
    %2417 = vmatpush1.msra.mxu0 0.0
    %2418 = vmatprep.subr.mxu0 0.0
    %2419 = vmatpush1.msra.mxu0 0.0
    %2420 = vmatprep.subr.mxu0 0.0
    %2421 = vmatpush1.msra.mxu0 0.0
    %2422 = vmatprep.subr.mxu0 0.0
    %2423 = vmatpush1.msra.mxu0 0.0
    %2424 = vmatprep.subr.mxu0 0.0
    %2425 = vmatpush1.msra.mxu0 0.0
    %2426 = vmatprep.subr.mxu0 0.0
    %2427 = vmatpush1.msra.mxu0 0.0
    %2428 = vmatprep.subr.mxu0 0.0
    %2429 = vmatpush1.msra.mxu0 0.0
    %2430 = vmatprep.subr.mxu0 0.0
    %2431 = vmatpush1.msra.mxu0 0.0
    %2432 = vmatprep.subr.mxu0 0.0
    %2433 = vmatpush1.msra.mxu0 0.0
    %2434 = vmatprep.subr.mxu0 0.0
    %2435 = vmatpush1.msra.mxu0 0.0
    %2436 = vmatprep.mubr.f32.mxu0 0.0
    %2437 = vmatmul.mubr.f32.gmra.mrb[0].mxu0 %v2370
    %v2438 = vpop.f32.mrb[0].mxu0
    %v2439 = vadd.f32 0.0, %v2438
    %v2440 = vpop.f32.mrb[0].mxu0
    %2441 = vdwg.mxu0
    %2442 = vrot.lane.b32.xlu0 %v189, 64
    %v2443 = vpop.permute.xlu0 %2442
    %v2446 = vsel %vm232, %v1976, 0
    %2448 = vmatprep.subr.mxu0 0.0
    %2449 = vmatpush1.msra.mxu0 %v2443
    %2450 = vmatprep.subr.mxu0 0.0
    %2451 = vmatpush1.msra.mxu0 0.0
    %2452 = vmatprep.subr.mxu0 0.0
    %2453 = vmatpush1.msra.mxu0 0.0
    %2454 = vmatprep.subr.mxu0 0.0
    %2455 = vmatpush1.msra.mxu0 0.0
    %2456 = vmatprep.subr.mxu0 0.0
    %2457 = vmatpush1.msra.mxu0 0.0
    %2458 = vmatprep.subr.mxu0 0.0
    %2459 = vmatpush1.msra.mxu0 0.0
    %2460 = vmatprep.subr.mxu0 0.0
    %2461 = vmatpush1.msra.mxu0 0.0
    %2462 = vmatprep.subr.mxu0 0.0
    %2463 = vmatpush1.msra.mxu0 0.0
    %2464 = vmatprep.subr.mxu0 0.0
    %2465 = vmatpush1.msra.mxu0 0.0
    %2466 = vmatprep.subr.mxu0 0.0
    %2467 = vmatpush1.msra.mxu0 0.0
    %2468 = vmatprep.subr.mxu0 0.0
    %2469 = vmatpush1.msra.mxu0 0.0
    %2470 = vmatprep.subr.mxu0 0.0
    %2471 = vmatpush1.msra.mxu0 0.0
    %2472 = vmatprep.subr.mxu0 0.0
    %2473 = vmatpush1.msra.mxu0 0.0
    %2474 = vmatprep.subr.mxu0 0.0
    %2475 = vmatpush1.msra.mxu0 0.0
    %2476 = vmatprep.subr.mxu0 0.0
    %2477 = vmatpush1.msra.mxu0 0.0
    %2478 = vmatprep.subr.mxu0 0.0
    %2479 = vmatpush1.msra.mxu0 0.0
    %2480 = vmatprep.subr.mxu0 0.0
    %2481 = vmatpush1.msra.mxu0 0.0
    %2482 = vmatprep.subr.mxu0 0.0
    %2483 = vmatpush1.msra.mxu0 0.0
    %2484 = vmatprep.subr.mxu0 0.0
    %2485 = vmatpush1.msra.mxu0 0.0
    %2486 = vmatprep.subr.mxu0 0.0
    %2487 = vmatpush1.msra.mxu0 0.0
    %2488 = vmatprep.subr.mxu0 0.0
    %2489 = vmatpush1.msra.mxu0 0.0
    %2490 = vmatprep.subr.mxu0 0.0
    %2491 = vmatpush1.msra.mxu0 0.0
    %2492 = vmatprep.subr.mxu0 0.0
    %2493 = vmatpush1.msra.mxu0 0.0
    %2494 = vmatprep.subr.mxu0 0.0
    %2495 = vmatpush1.msra.mxu0 0.0
    %2496 = vmatprep.subr.mxu0 0.0
    %2497 = vmatpush1.msra.mxu0 0.0
    %2498 = vmatprep.subr.mxu0 0.0
    %2499 = vmatpush1.msra.mxu0 0.0
    %2500 = vmatprep.subr.mxu0 0.0
    %2501 = vmatpush1.msra.mxu0 0.0
    %2502 = vmatprep.subr.mxu0 0.0
    %2503 = vmatpush1.msra.mxu0 0.0
    %2504 = vmatprep.subr.mxu0 0.0
    %2505 = vmatpush1.msra.mxu0 0.0
    %2506 = vmatprep.subr.mxu0 0.0
    %2507 = vmatpush1.msra.mxu0 0.0
    %2508 = vmatprep.subr.mxu0 0.0
    %2509 = vmatpush1.msra.mxu0 0.0
    %2510 = vmatprep.subr.mxu0 0.0
    %2511 = vmatpush1.msra.mxu0 0.0
    %2512 = vmatprep.mubr.f32.mxu0 0.0
    %2513 = vmatmul.mubr.f32.gmra.mrb[0].mxu0 %v2446
    %v2514 = vpop.f32.mrb[0].mxu0
    %v2515 = vadd.f32 0.0, %v2514
    %v2516 = vpop.f32.mrb[0].mxu0
    %2517 = vdwg.mxu0
    %2518 = vrot.lane.b32.xlu0 %v191, 64
    %v2519 = vpop.permute.xlu0 %2518
    %v2522 = vsel %vm232, %v1977, 0
    %2524 = vmatprep.subr.mxu0 0.0
    %2525 = vmatpush1.msra.mxu0 %v2519
    %2526 = vmatprep.subr.mxu0 0.0
    %2527 = vmatpush1.msra.mxu0 0.0
    %2528 = vmatprep.subr.mxu0 0.0
    %2529 = vmatpush1.msra.mxu0 0.0
    %2530 = vmatprep.subr.mxu0 0.0
    %2531 = vmatpush1.msra.mxu0 0.0
    %2532 = vmatprep.subr.mxu0 0.0
    %2533 = vmatpush1.msra.mxu0 0.0
    %2534 = vmatprep.subr.mxu0 0.0
    %2535 = vmatpush1.msra.mxu0 0.0
    %2536 = vmatprep.subr.mxu0 0.0
    %2537 = vmatpush1.msra.mxu0 0.0
    %2538 = vmatprep.subr.mxu0 0.0
    %2539 = vmatpush1.msra.mxu0 0.0
    %2540 = vmatprep.subr.mxu0 0.0
    %2541 = vmatpush1.msra.mxu0 0.0
    %2542 = vmatprep.subr.mxu0 0.0
    %2543 = vmatpush1.msra.mxu0 0.0
    %2544 = vmatprep.subr.mxu0 0.0
    %2545 = vmatpush1.msra.mxu0 0.0
    %2546 = vmatprep.subr.mxu0 0.0
    %2547 = vmatpush1.msra.mxu0 0.0
    %2548 = vmatprep.subr.mxu0 0.0
    %2549 = vmatpush1.msra.mxu0 0.0
    %2550 = vmatprep.subr.mxu0 0.0
    %2551 = vmatpush1.msra.mxu0 0.0
    %2552 = vmatprep.subr.mxu0 0.0
    %2553 = vmatpush1.msra.mxu0 0.0
    %2554 = vmatprep.subr.mxu0 0.0
    %2555 = vmatpush1.msra.mxu0 0.0
    %2556 = vmatprep.subr.mxu0 0.0
    %2557 = vmatpush1.msra.mxu0 0.0
    %2558 = vmatprep.subr.mxu0 0.0
    %2559 = vmatpush1.msra.mxu0 0.0
    %2560 = vmatprep.subr.mxu0 0.0
    %2561 = vmatpush1.msra.mxu0 0.0
    %2562 = vmatprep.subr.mxu0 0.0
    %2563 = vmatpush1.msra.mxu0 0.0
    %2564 = vmatprep.subr.mxu0 0.0
    %2565 = vmatpush1.msra.mxu0 0.0
    %2566 = vmatprep.subr.mxu0 0.0
    %2567 = vmatpush1.msra.mxu0 0.0
    %2568 = vmatprep.subr.mxu0 0.0
    %2569 = vmatpush1.msra.mxu0 0.0
    %2570 = vmatprep.subr.mxu0 0.0
    %2571 = vmatpush1.msra.mxu0 0.0
    %2572 = vmatprep.subr.mxu0 0.0
    %2573 = vmatpush1.msra.mxu0 0.0
    %2574 = vmatprep.subr.mxu0 0.0
    %2575 = vmatpush1.msra.mxu0 0.0
    %2576 = vmatprep.subr.mxu0 0.0
    %2577 = vmatpush1.msra.mxu0 0.0
    %2578 = vmatprep.subr.mxu0 0.0
    %2579 = vmatpush1.msra.mxu0 0.0
    %2580 = vmatprep.subr.mxu0 0.0
    %2581 = vmatpush1.msra.mxu0 0.0
    %2582 = vmatprep.subr.mxu0 0.0
    %2583 = vmatpush1.msra.mxu0 0.0
    %2584 = vmatprep.subr.mxu0 0.0
    %2585 = vmatpush1.msra.mxu0 0.0
    %2586 = vmatprep.subr.mxu0 0.0
    %2587 = vmatpush1.msra.mxu0 0.0
    %2588 = vmatprep.mubr.f32.mxu0 0.0
    %2589 = vmatmul.mubr.f32.gmra.mrb[0].mxu0 %v2522
    %v2590 = vpop.f32.mrb[0].mxu0
    %v2591 = vadd.f32 0.0, %v2590
    %v2592 = vpop.f32.mrb[0].mxu0
    %2593 = vdwg.mxu0
    %2595 = vrot.lane.b32.xlu0 %v2135, 8
    %v2596 = vpop.permute.xlu0 %2595
    %2599 = vrot.lane.b32.xlu0 %v2211, 16
    %v2600 = vpop.permute.xlu0 %2599
    %2603 = vrot.lane.b32.xlu0 %v2287, 24
    %v2604 = vpop.permute.xlu0 %2603
    %v2606 = vsel %vm232, %v2059, %v2596
    %vm2607 = vcmask 130048
    %v2608 = vsel %vm2607, %v2606, %v2600
    %vm2609 = vcmask 195584
    %v2610 = vsel %vm2609, %v2608, %v2604
    %2612 = vrot.lane.b32.xlu0 %v2439, 8
    %v2613 = vpop.permute.xlu0 %2612
    %2616 = vrot.lane.b32.xlu0 %v2515, 16
    %v2617 = vpop.permute.xlu0 %2616
    %2620 = vrot.lane.b32.xlu0 %v2591, 24
    %v2621 = vpop.permute.xlu0 %2620
    %v2623 = vsel %vm232, %v2363, %v2613
    %v2624 = vsel %vm2607, %v2623, %v2617
    %v2625 = vsel %vm2609, %v2624, %v2621
    %v2626 = vlaneseq
    %v2627 = vshrl.u32 %v2626, 7
    %v2628 = vsub.s32 6, %v2627
    %v2629 = vrot.slane %v25, %v2628
    %v2631 = vsel %vm41, %v2610, 0
    %v2634 = vsel %vm41, %v2625, 0
    %2636 = vmatprep.subr.mxu0 0.0
    %2637 = vmatpush1.msra.mxu0 %v29
    %2638 = vmatprep.subr.mxu0 0.0
    %2639 = vmatpush1.msra.mxu0 %v32
    %2640 = vmatprep.subr.mxu0 0.0
    %2641 = vmatpush1.msra.mxu0 %v35
    %2642 = vmatprep.subr.mxu0 0.0
    %2643 = vmatpush1.msra.mxu0 %v38
    %2644 = vmatprep.subr.mxu0 0.0
    %2645 = vmatpush1.msra.mxu0 0.0
    %2646 = vmatprep.subr.mxu0 0.0
    %2647 = vmatpush1.msra.mxu0 0.0
    %2648 = vmatprep.subr.mxu0 0.0
    %2649 = vmatpush1.msra.mxu0 0.0
    %2650 = vmatprep.subr.mxu0 0.0
    %2651 = vmatpush1.msra.mxu0 0.0
    %2652 = vmatprep.subr.mxu0 0.0
    %2653 = vmatpush1.msra.mxu0 0.0
    %2654 = vmatprep.subr.mxu0 0.0
    %2655 = vmatpush1.msra.mxu0 0.0
    %2656 = vmatprep.subr.mxu0 0.0
    %2657 = vmatpush1.msra.mxu0 0.0
    %2658 = vmatprep.subr.mxu0 0.0
    %2659 = vmatpush1.msra.mxu0 0.0
    %2660 = vmatprep.subr.mxu0 0.0
    %2661 = vmatpush1.msra.mxu0 0.0
    %2662 = vmatprep.subr.mxu0 0.0
    %2663 = vmatpush1.msra.mxu0 0.0
    %2664 = vmatprep.subr.mxu0 0.0
    %2665 = vmatpush1.msra.mxu0 0.0
    %2666 = vmatprep.subr.mxu0 0.0
    %2667 = vmatpush1.msra.mxu0 0.0
    %2668 = vmatprep.subr.mxu0 0.0
    %2669 = vmatpush1.msra.mxu0 0.0
    %2670 = vmatprep.subr.mxu0 0.0
    %2671 = vmatpush1.msra.mxu0 0.0
    %2672 = vmatprep.subr.mxu0 0.0
    %2673 = vmatpush1.msra.mxu0 0.0
    %2674 = vmatprep.subr.mxu0 0.0
    %2675 = vmatpush1.msra.mxu0 0.0
    %2676 = vmatprep.subr.mxu0 0.0
    %2677 = vmatpush1.msra.mxu0 0.0
    %2678 = vmatprep.subr.mxu0 0.0
    %2679 = vmatpush1.msra.mxu0 0.0
    %2680 = vmatprep.subr.mxu0 0.0
    %2681 = vmatpush1.msra.mxu0 0.0
    %2682 = vmatprep.subr.mxu0 0.0
    %2683 = vmatpush1.msra.mxu0 0.0
    %2684 = vmatprep.subr.mxu0 0.0
    %2685 = vmatpush1.msra.mxu0 0.0
    %2686 = vmatprep.subr.mxu0 0.0
    %2687 = vmatpush1.msra.mxu0 0.0
    %2688 = vmatprep.subr.mxu0 0.0
    %2689 = vmatpush1.msra.mxu0 0.0
    %2690 = vmatprep.subr.mxu0 0.0
    %2691 = vmatpush1.msra.mxu0 0.0
    %2692 = vmatprep.subr.mxu0 0.0
    %2693 = vmatpush1.msra.mxu0 0.0
    %2694 = vmatprep.subr.mxu0 0.0
    %2695 = vmatpush1.msra.mxu0 0.0
    %2696 = vmatprep.subr.mxu0 0.0
    %2697 = vmatpush1.msra.mxu0 0.0
    %2698 = vmatprep.subr.mxu0 0.0
    %2699 = vmatpush1.msra.mxu0 0.0
    %2700 = vmatprep.mubr.f32.mxu0 0.0
    %2701 = vmatmul.mubr.f32.gmra.mrb[0].mxu0 %v2631
    %v2702 = vpop.f32.mrb[0].mxu0
    %v2703 = vadd.f32 %v2629, %v2702
    %v2704 = vpop.f32.mrb[0].mxu0
    %2705 = vmatprep.mubr.f32.mxu0 0.0
    %2706 = vmatmul.mubr.f32.gmra.mrb[0].mxu0 %v2634
    %v2707 = vpop.f32.mrb[0].mxu0
    %v2708 = vadd.f32 %v2629, %v2707
    %v2709 = vpop.f32.mrb[0].mxu0
    %2710 = vdwg.mxu0
    %v2711 = vadd.f32 %v39, %v2703
    %v2712 = vadd.f32 %v40, %v2708
    %v2713 = vsel %vm41, %v2711, 0.0
    %2714 = vadd.xlane.f32.xlu0 %v2713
    %v2715 = vpop.xlane.xlu0 %2714
    %v2716 = vsel %vm41, %v2712, 0.0
    %2717 = vadd.xlane.f32.xlu0 %v2716
    %v2718 = vpop.xlane.xlu0 %2717
    %v2719 = vmul.f32 %v2715, %v48
    %v2720 = vmul.f32 %v2718, %v48
    %v2721 = vsub.f32 %v2711, %v2719
    %v2722 = vsub.f32 %v2712, %v2720
    %v2723 = vmul.f32 %v2721, %v2721
    %v2724 = vmul.f32 %v2722, %v2722
    %v2725 = vsel %vm41, %v2723, 0.0
    %2726 = vadd.xlane.f32.xlu0 %v2725
    %v2727 = vpop.xlane.xlu0 %2726
    %v2728 = vsel %vm41, %v2724, 0.0
    %2729 = vadd.xlane.f32.xlu0 %v2728
    %v2730 = vpop.xlane.xlu0 %2729
    %v2731 = vmul.f32 %v2727, %v48
    %v2732 = vmul.f32 %v2730, %v48
    %v2733 = vadd.f32 %v2731, 1e-05
    %v2734 = vadd.f32 %v2732, 1e-05
    %v2735 = vrsqrt.pop %v2733
    %v2736 = vrsqrt.pop %v2734
    %v2737 = vmul.f32 %v2721, %v2735
    %v2738 = vmul.f32 %v2722, %v2736
    %v2739 = vlaneseq
    %v2740 = vshrl.u32 %v2739, 7
    %v2741 = vsub.s32 4, %v2740
    %v2742 = vrot.slane %v25, %v2741
    %v2743 = vmul.f32 %v2737, %v2742
    %v2744 = vmul.f32 %v2738, %v2742
    %v2745 = vlaneseq
    %v2746 = vshrl.u32 %v2745, 7
    %v2747 = vsub.s32 5, %v2746
    %v2748 = vrot.slane %v25, %v2747
    %v2749 = vadd.f32 %v2743, %v2748
    %v2750 = vadd.f32 %v2744, %v2748
    %v2751 = vlaneseq
    %v2752 = vshrl.u32 %v2751, 7
    %v2753 = vsub.s32 1, %v2752
    %v2754 = vrot.slane %v25, %v2753
    %v2756 = vsel %vm41, %v2749, 0
    %v2759 = vsel %vm41, %v2750, 0
    %2761 = vmatprep.subr.mxu0 0.0
    %2762 = vmatpush1.msra.mxu0 %v28
    %2763 = vmatprep.subr.mxu0 0.0
    %2764 = vmatpush1.msra.mxu0 %v31
    %2765 = vmatprep.subr.mxu0 0.0
    %2766 = vmatpush1.msra.mxu0 %v34
    %2767 = vmatprep.subr.mxu0 0.0
    %2768 = vmatpush1.msra.mxu0 %v37
    %2769 = vmatprep.subr.mxu0 0.0
    %2770 = vmatpush1.msra.mxu0 0.0
    %2771 = vmatprep.subr.mxu0 0.0
    %2772 = vmatpush1.msra.mxu0 0.0
    %2773 = vmatprep.subr.mxu0 0.0
    %2774 = vmatpush1.msra.mxu0 0.0
    %2775 = vmatprep.subr.mxu0 0.0
    %2776 = vmatpush1.msra.mxu0 0.0
    %2777 = vmatprep.subr.mxu0 0.0
    %2778 = vmatpush1.msra.mxu0 0.0
    %2779 = vmatprep.subr.mxu0 0.0
    %2780 = vmatpush1.msra.mxu0 0.0
    %2781 = vmatprep.subr.mxu0 0.0
    %2782 = vmatpush1.msra.mxu0 0.0
    %2783 = vmatprep.subr.mxu0 0.0
    %2784 = vmatpush1.msra.mxu0 0.0
    %2785 = vmatprep.subr.mxu0 0.0
    %2786 = vmatpush1.msra.mxu0 0.0
    %2787 = vmatprep.subr.mxu0 0.0
    %2788 = vmatpush1.msra.mxu0 0.0
    %2789 = vmatprep.subr.mxu0 0.0
    %2790 = vmatpush1.msra.mxu0 0.0
    %2791 = vmatprep.subr.mxu0 0.0
    %2792 = vmatpush1.msra.mxu0 0.0
    %2793 = vmatprep.subr.mxu0 0.0
    %2794 = vmatpush1.msra.mxu0 0.0
    %2795 = vmatprep.subr.mxu0 0.0
    %2796 = vmatpush1.msra.mxu0 0.0
    %2797 = vmatprep.subr.mxu0 0.0
    %2798 = vmatpush1.msra.mxu0 0.0
    %2799 = vmatprep.subr.mxu0 0.0
    %2800 = vmatpush1.msra.mxu0 0.0
    %2801 = vmatprep.subr.mxu0 0.0
    %2802 = vmatpush1.msra.mxu0 0.0
    %2803 = vmatprep.subr.mxu0 0.0
    %2804 = vmatpush1.msra.mxu0 0.0
    %2805 = vmatprep.subr.mxu0 0.0
    %2806 = vmatpush1.msra.mxu0 0.0
    %2807 = vmatprep.subr.mxu0 0.0
    %2808 = vmatpush1.msra.mxu0 0.0
    %2809 = vmatprep.subr.mxu0 0.0
    %2810 = vmatpush1.msra.mxu0 0.0
    %2811 = vmatprep.subr.mxu0 0.0
    %2812 = vmatpush1.msra.mxu0 0.0
    %2813 = vmatprep.subr.mxu0 0.0
    %2814 = vmatpush1.msra.mxu0 0.0
    %2815 = vmatprep.subr.mxu0 0.0
    %2816 = vmatpush1.msra.mxu0 0.0
    %2817 = vmatprep.subr.mxu0 0.0
    %2818 = vmatpush1.msra.mxu0 0.0
    %2819 = vmatprep.subr.mxu0 0.0
    %2820 = vmatpush1.msra.mxu0 0.0
    %2821 = vmatprep.subr.mxu0 0.0
    %2822 = vmatpush1.msra.mxu0 0.0
    %2823 = vmatprep.subr.mxu0 0.0
    %2824 = vmatpush1.msra.mxu0 0.0
    %2825 = vmatprep.mubr.f32.mxu0 0.0
    %2826 = vmatmul.mubr.f32.gmra.mrb[0].mxu0 %v2756
    %v2827 = vpop.f32.mrb[0].mxu0
    %v2828 = vadd.f32 %v2754, %v2827
    %v2829 = vpop.f32.mrb[0].mxu0
    %2830 = vmatprep.mubr.f32.mxu0 0.0
    %2831 = vmatmul.mubr.f32.gmra.mrb[0].mxu0 %v2759
    %v2832 = vpop.f32.mrb[0].mxu0
    %v2833 = vadd.f32 %v2754, %v2832
    %v2834 = vpop.f32.mrb[0].mxu0
    %2835 = vdwg.mxu0
    %v2836 = vmul.f32 %v2828, 0.5
    %v2837 = vmul.f32 %v2833, 0.5
    %v2838 = vmul.f32 %v2828, 0.044715
    %v2839 = vmul.f32 %v2833, 0.044715
    %v2840 = vmul.f32 %v2838, %v2828
    %v2841 = vmul.f32 %v2839, %v2833
    %v2842 = vmul.f32 %v2840, %v2828
    %v2843 = vmul.f32 %v2841, %v2833
    %v2844 = vadd.f32 %v2828, %v2842
    %v2845 = vadd.f32 %v2833, %v2843
    %v2846 = vmul.f32 %v2844, 0.7978846
    %v2847 = vmul.f32 %v2845, 0.7978846
    %v2848 = vtanh.pop %v2846
    %v2849 = vtanh.pop %v2847
    %v2850 = vadd.f32 %v2848, 1.0
    %v2851 = vadd.f32 %v2849, 1.0
    %v2852 = vmul.f32 %v2836, %v2850
    %v2853 = vmul.f32 %v2837, %v2851
    %v2854 = vld [vmem:[%s5] sm:$0xff]
    %v2855 = vld [vmem:[%s5 + $0x8] sm:$0xff]
    %v2856 = vld [vmem:[%s5 + $0x10] sm:$0xff]
    %v2857 = vld [vmem:[%s5 + $0x18] sm:$0xff]
    %v2858 = vld [vmem:[%s5 + $0x20] sm:$0xff]
    %v2859 = vld [vmem:[%s5 + $0x28] sm:$0xff]
    %v2860 = vld [vmem:[%s5 + $0x30] sm:$0xff]
    %v2861 = vld [vmem:[%s5 + $0x38] sm:$0xff]
    %v2862 = vld [vmem:[%s5 + $0x40] sm:$0xff]
    %v2863 = vld [vmem:[%s5 + $0x48] sm:$0xff]
    %v2864 = vld [vmem:[%s5 + $0x50] sm:$0xff]
    %v2865 = vld [vmem:[%s5 + $0x58] sm:$0xff]
    %v2866 = vld [vmem:[%s5 + $0x60] sm:$0xff]
    %v2867 = vld [vmem:[%s5 + $0x68] sm:$0xff]
    %v2868 = vld [vmem:[%s5 + $0x70] sm:$0xff]
    %v2869 = vld [vmem:[%s5 + $0x78] sm:$0xff]
    %v2870 = vlaneseq
    %v2871 = vshrl.u32 %v2870, 7
    %v2872 = vsub.s32 7, %v2871
    %v2873 = vrot.slane %v25, %v2872
    %2874 = vmatprep.subr.mxu0 0.0
    %2875 = vmatpush1.msra.mxu0 %v2854
    %2876 = vmatprep.subr.mxu0 0.0
    %2877 = vmatpush1.msra.mxu0 %v2855
    %2878 = vmatprep.subr.mxu0 0.0
    %2879 = vmatpush1.msra.mxu0 %v2856
    %2880 = vmatprep.subr.mxu0 0.0
    %2881 = vmatpush1.msra.mxu0 %v2857
    %2882 = vmatprep.subr.mxu0 0.0
    %2883 = vmatpush1.msra.mxu0 %v2858
    %2884 = vmatprep.subr.mxu0 0.0
    %2885 = vmatpush1.msra.mxu0 %v2859
    %2886 = vmatprep.subr.mxu0 0.0
    %2887 = vmatpush1.msra.mxu0 %v2860
    %2888 = vmatprep.subr.mxu0 0.0
    %2889 = vmatpush1.msra.mxu0 %v2861
    %2890 = vmatprep.subr.mxu0 0.0
    %2891 = vmatpush1.msra.mxu0 %v2862
    %2892 = vmatprep.subr.mxu0 0.0
    %2893 = vmatpush1.msra.mxu0 %v2863
    %2894 = vmatprep.subr.mxu0 0.0
    %2895 = vmatpush1.msra.mxu0 %v2864
    %2896 = vmatprep.subr.mxu0 0.0
    %2897 = vmatpush1.msra.mxu0 %v2865
    %2898 = vmatprep.subr.mxu0 0.0
    %2899 = vmatpush1.msra.mxu0 %v2866
    %2900 = vmatprep.subr.mxu0 0.0
    %2901 = vmatpush1.msra.mxu0 %v2867
    %2902 = vmatprep.subr.mxu0 0.0
    %2903 = vmatpush1.msra.mxu0 %v2868
    %2904 = vmatprep.subr.mxu0 0.0
    %2905 = vmatpush1.msra.mxu0 %v2869
    %2906 = vmatprep.subr.mxu0 0.0
    %2907 = vmatpush1.msra.mxu0 0.0
    %2908 = vmatprep.subr.mxu0 0.0
    %2909 = vmatpush1.msra.mxu0 0.0
    %2910 = vmatprep.subr.mxu0 0.0
    %2911 = vmatpush1.msra.mxu0 0.0
    %2912 = vmatprep.subr.mxu0 0.0
    %2913 = vmatpush1.msra.mxu0 0.0
    %2914 = vmatprep.subr.mxu0 0.0
    %2915 = vmatpush1.msra.mxu0 0.0
    %2916 = vmatprep.subr.mxu0 0.0
    %2917 = vmatpush1.msra.mxu0 0.0
    %2918 = vmatprep.subr.mxu0 0.0
    %2919 = vmatpush1.msra.mxu0 0.0
    %2920 = vmatprep.subr.mxu0 0.0
    %2921 = vmatpush1.msra.mxu0 0.0
    %2922 = vmatprep.subr.mxu0 0.0
    %2923 = vmatpush1.msra.mxu0 0.0
    %2924 = vmatprep.subr.mxu0 0.0
    %2925 = vmatpush1.msra.mxu0 0.0
    %2926 = vmatprep.subr.mxu0 0.0
    %2927 = vmatpush1.msra.mxu0 0.0
    %2928 = vmatprep.subr.mxu0 0.0
    %2929 = vmatpush1.msra.mxu0 0.0
    %2930 = vmatprep.subr.mxu0 0.0
    %2931 = vmatpush1.msra.mxu0 0.0
    %2932 = vmatprep.subr.mxu0 0.0
    %2933 = vmatpush1.msra.mxu0 0.0
    %2934 = vmatprep.subr.mxu0 0.0
    %2935 = vmatpush1.msra.mxu0 0.0
    %2936 = vmatprep.subr.mxu0 0.0
    %2937 = vmatpush1.msra.mxu0 0.0
    %2938 = vmatprep.mubr.f32.mxu0 0.0
    %2939 = vmatmul.mubr.f32.gmra.mrb[0].mxu0 %v2852
    %v2940 = vpop.f32.mrb[0].mxu0
    %v2941 = vadd.f32 %v2873, %v2940
    %v2942 = vpop.f32.mrb[0].mxu0
    %2943 = vmatprep.mubr.f32.mxu0 0.0
    %2944 = vmatmul.mubr.f32.gmra.mrb[0].mxu0 %v2853
    %v2945 = vpop.f32.mrb[0].mxu0
    %v2946 = vadd.f32 %v2873, %v2945
    %v2947 = vpop.f32.mrb[0].mxu0
    %2948 = vdwg.mxu0
    %v2949 = vadd.f32 %v2711, %v2941
    %v2950 = vadd.f32 %v2712, %v2946
    %2951 = vst.msk [vmem:[#allocation4] sm:$0xff] %vm41, %v2949
    %2952 = vst.msk [vmem:[#allocation4 + $0x8] sm:$0xff] %vm41, %v2950
    // Predicated region
    $region22: #{tpu_custom_call.1} parent=1 // pred_check
      _
    $region23: #{tpu_custom_call.1} parent=1 // pred_check_branch
      %2954 = sbr.rel (0) target = $region25
    $region24: #{tpu_custom_call.1} parent=1 // pred_region
      %s2956 = ssub.s32 256, 256
      %2957 = vsyncadd [#allocation5], %s2956
      %s2958 = sshll.u32 [#allocation4], 4
      %s2959 = int_to_ptr.vmem [resolvable:$true] %s2958
      %2964 = dma.vmem_to_hbm [thread:$0]  %s2959, 256, %s6, [#allocation5], 128, 128, 8
    $region25: #{tpu_custom_call.1} parent=1 // pred_fallthru
      _
    // Predicated region
    $region26: #{tpu_custom_call.1} parent=1 // pred_check
      _
    $region27: #{tpu_custom_call.1} parent=1 // pred_check_branch
      %2966 = sbr.rel (0) target = $region29
    $region28: #{tpu_custom_call.1} parent=1 // pred_region
      _
    $region29: #{tpu_custom_call.1} parent=1 // pred_fallthru
      _
    // Predicated region
    $region30: #{tpu_custom_call.1} parent=1 // pred_check
      _
    $region31: #{tpu_custom_call.1} parent=1 // pred_check_branch
      %2968 = sbr.rel (0) target = $region33
    $region32: #{tpu_custom_call.1} parent=1 // pred_region
      %2969 = dma.done [#allocation5], 256
    $region33: #{tpu_custom_call.1} parent=1 // pred_fallthru
      _
    // Predicated region
    $region34: #{tpu_custom_call.1} parent=1 // pred_check
      _
    $region35: #{tpu_custom_call.1} parent=1 // pred_check_branch
      %2971 = sbr.rel (0) target = $region37
    $region36: #{tpu_custom_call.1} parent=1 // pred_region
      _
    $region37: #{tpu_custom_call.1} parent=1 // pred_fallthru
      _
    %2972 = vsyncpa [#allocation5], 1

</llo_original>
